<compile_context>
chip_gen: v5e
topology: v5e:2x2
jax: 0.10.0
libtpu: 0.0.40
codegen_flags: <defaults>
</compile_context>

<pallas_src>
import numpy as np
import jax
import jax.numpy as jnp
from jax.experimental import pallas as pl
from jax.experimental.pallas import tpu as pltpu

EPS = 1e-5                      # PyTorch BatchNorm2d default eps
MXU_DTYPE = jnp.bfloat16        # matmul operand + inter-kernel activation dtype


# ----------------------------- compiler params -------------------------------
def _vmem_limit_bytes():
    # v5e/v6e have 128 MiB physical VMEM -> raise the scoped limit; v7x has
    # 64 MiB -> leave double-buffering headroom.
    try:
        phys = int(pltpu.get_tpu_info().vmem_capacity_bytes)
    except Exception:
        phys = 128 * 1024 * 1024
    if phys <= 64 * 1024 * 1024:
        return 48 * 1024 * 1024
    return 96 * 1024 * 1024


def _cparams():
    return pltpu.CompilerParams(
        dimension_semantics=("parallel",),
        vmem_limit_bytes=_vmem_limit_bytes(),
    )


# ------------------------- small in-kernel helpers ----------------------------
def _shift_right_zero(a):
    """Shift by +1 along axis 1 with zero fill: out[:, j] = a[:, j-1]."""
    return jnp.concatenate([jnp.zeros_like(a[:, :1]), a[:, :-1]], axis=1)


def _shift_left_zero(a):
    """Shift by -1 along axis 1 with zero fill: out[:, j] = a[:, j+1]."""
    return jnp.concatenate([a[:, 1:], jnp.zeros_like(a[:, :1])], axis=1)


def _pad_rows(a):
    """Zero-pad one row at top and bottom (axis 0)."""
    z = jnp.zeros_like(a[:1])
    return jnp.concatenate([z, a, z], axis=0)


def _crop_or_zero_pad(a, target, axis):
    """Crop from the start / zero-pad at the end along `axis` to `target`."""
    # TODO(synk): exact utils.pad_or_crop semantics unavailable (corner vs
    # centered); identity for the shapes used here.
    size = a.shape[axis]
    if size == target:
        return a
    if size > target:
        return jax.lax.slice_in_dim(a, 0, target, axis=axis)
    pad_shape = list(a.shape)
    pad_shape[axis] = target - size
    return jnp.concatenate([a, jnp.zeros(pad_shape, a.dtype)], axis=axis)


def _conv3x3_from_wtaps(wtaps, w_flat, co):
    """3x3 conv from pre-built W-direction taps.

    wtaps: tuple of 3 arrays (h, w, cin) (bf16) holding input columns
           (j-1, j, j+1) for each output column j, with W zero-padding already
           folded in.  H zero-padding is applied here.
    w_flat: (9*cin, co) weights, rows ordered (dy, dx, cin).
    Returns an f32 accumulator of shape (h*w, co).
    """
    h, w, cin = wtaps[0].shape
    padded = [_pad_rows(t) for t in wtaps]                 # (h+2, w, cin) each
    if cin >= 128:
        # Per-tap accumulation: channels already fill the MXU contraction dim,
        # so skip the 9x im2col patch buffer entirely.
        acc = jnp.zeros((h * w, co), jnp.float32)
        for dy in range(3):
            for dx in range(3):
                k = dy * 3 + dx
                tap = padded[dx][dy:dy + h].reshape(h * w, cin)
                acc = acc + jnp.dot(tap, w_flat[k * cin:(k + 1) * cin, :],
                                    preferred_element_type=jnp.float32)
        return acc
    # Small-cin path: im2col keeps K = 9*cin for better MXU contraction depth.
    cols = [padded[dx][dy:dy + h] for dy in range(3) for dx in range(3)]
    patch = jnp.concatenate(cols, axis=-1).reshape(h * w, 9 * cin)
    return jnp.dot(patch, w_flat, preferred_element_type=jnp.float32)


# --------- conv1: upsample + channel-concat + 3x3 conv + BN-stats fused -------
def _conv1_kernel(x_ref, ycat_ref, wxw_ref, wyw_ref, o_ref, stats_ref):
    # x_ref:    (1, hx, wx, cx)        low-res input (f32)
    # ycat_ref: (1, yh, yw//2, 2*cy)   skip input in even/odd column "cat-form"
    # wxw_ref:  (9*cx, co) bf16, wyw_ref: (9*cy, co) bf16
    # o_ref:    (1, yh*(yw//2), 2*co)  bf16 cat-form conv1 output
    # stats_ref:(1, 2, co)             f32 per-image [sum, sumsq]
    _, yh, wcat, cy2 = ycat_ref.shape
    cy = cy2 // 2
    co = stats_ref.shape[2]

    # ---- bilinear 2x upsample (align_corners=False -> fixed 0.25/0.75 taps),
    #      computed on the VPU in f32; no interpolation matrices, no kron. ----
    x = x_ref[0].astype(jnp.float32)                       # (hx, wx, cx)
    up = jnp.concatenate([x[:1], x[:-1]], axis=0)          # row clamp-shift
    dn = jnp.concatenate([x[1:], x[-1:]], axis=0)
    xh = jnp.stack([0.25 * up + 0.75 * x, 0.75 * x + 0.25 * dn], axis=1)
    xh = xh.reshape(2 * x.shape[0], x.shape[1], x.shape[2])  # (2hx, wx, cx)
    xh = _crop_or_zero_pad(xh, yh, axis=0)                 # pad_or_crop rows

    lf = jnp.concatenate([xh[:, :1], xh[:, :-1]], axis=1)  # col clamp-shift
    rt = jnp.concatenate([xh[:, 1:], xh[:, -1:]], axis=1)
    x_ev = _crop_or_zero_pad(0.25 * lf + 0.75 * xh, wcat, axis=1)  # even cols
    x_od = _crop_or_zero_pad(0.75 * xh + 0.25 * rt, wcat, axis=1)  # odd cols
    x_ev = x_ev.astype(MXU_DTYPE)                          # bf16 before im2col
    x_od = x_od.astype(MXU_DTYPE)

    ycat = ycat_ref[0].astype(MXU_DTYPE)                   # (yh, wcat, 2*cy)
    y_ev = ycat[:, :, :cy]
    y_od = ycat[:, :, cy:]

    wxa = wxw_ref[...]
    wya = wyw_ref[...]

    # Even output columns J=2j use input columns (2j-1, 2j, 2j+1);
    # odd output columns J=2j+1 use (2j, 2j+1, 2j+2); zero pad at the edges.
    acc_ev = (_conv3x3_from_wtaps((_shift_right_zero(x_od), x_ev, x_od), wxa, co)
              + _conv3x3_from_wtaps((_shift_right_zero(y_od), y_ev, y_od), wya, co))
    acc_od = (_conv3x3_from_wtaps((x_ev, x_od, _shift_left_zero(x_ev)), wxa, co)
              + _conv3x3_from_wtaps((y_ev, y_od, _shift_left_zero(y_ev)), wya, co))

    o_ref[0] = jnp.concatenate([acc_ev, acc_od], axis=-1).astype(o_ref.dtype)
    s = jnp.sum(acc_ev, axis=0, keepdims=True) + jnp.sum(acc_od, axis=0, keepdims=True)
    sq = (jnp.sum(acc_ev * acc_ev, axis=0, keepdims=True)
          + jnp.sum(acc_od * acc_od, axis=0, keepdims=True))
    stats_ref[0] = jnp.concatenate([s, sq], axis=0)        # (2, co)


def conv1_upsample_fused(x_nhwc, y_nhwc, w1_hwio, cx):
    n, hx, wx, _ = x_nhwc.shape
    _, yh, yw, cy = y_nhwc.shape
    if yw % 2:
        raise NotImplementedError("odd target width")       # TODO(synk)
    co = w1_hwio.shape[-1]
    wcat = yw // 2
    wxw = w1_hwio[:, :, :cx, :].reshape(9 * cx, co).astype(MXU_DTYPE)
    wyw = w1_hwio[:, :, cx:, :].reshape(9 * cy, co).astype(MXU_DTYPE)
    y_cat = y_nhwc.reshape(n, yh, wcat, 2 * cy)             # free, same bytes
    out, stats = pl.pallas_call(
        _conv1_kernel,
        out_shape=(jax.ShapeDtypeStruct((n, yh * wcat, 2 * co), MXU_DTYPE),
                   jax.ShapeDtypeStruct((n, 2, co), jnp.float32)),
        grid=(n,),
        in_specs=[
            pl.BlockSpec((1, hx, wx, cx), lambda i: (i, 0, 0, 0)),
            pl.BlockSpec((1, yh, wcat, 2 * cy), lambda i: (i, 0, 0, 0)),
            pl.BlockSpec((9 * cx, co), lambda i: (0, 0)),
            pl.BlockSpec((9 * cy, co), lambda i: (0, 0)),
        ],
        out_specs=(pl.BlockSpec((1, yh * wcat, 2 * co), lambda i: (i, 0, 0)),
                   pl.BlockSpec((1, 2, co), lambda i: (i, 0, 0))),
        compiler_params=_cparams(),
    )(x_nhwc, y_cat, wxw, wyw)
    c1 = out.reshape(n, yh, yw, co)                          # free, same bytes
    return c1, stats


# -------- conv2: BN(batch stats)+ReLU fused on the input path + conv ----------
def _conv2_kernel(x_ref, scale_ref, shift_ref, w_ref, o_ref, stats_ref):
    _, h, w, cin = x_ref.shape
    co = stats_ref.shape[2]
    x = x_ref[0].astype(jnp.float32)                        # raw conv1 output
    a = jnp.maximum(x * scale_ref[...].reshape(1, 1, cin)
                    + shift_ref[...].reshape(1, 1, cin), 0.0)
    a = a.astype(MXU_DTYPE)                                 # bf16 before im2col
    acc = _conv3x3_from_wtaps((_shift_right_zero(a), a, _shift_left_zero(a)),
                              w_ref[...], co)               # (h*w, co) f32
    o_ref[0] = acc.astype(o_ref.dtype)
    s = jnp.sum(acc, axis=0, keepdims=True)
    sq = jnp.sum(acc * acc, axis=0, keepdims=True)
    stats_ref[0] = jnp.concatenate([s, sq], axis=0)


def bn_relu_conv(x_nhwc, scale, shift, w_hwio):
    n, h, w, cin = x_nhwc.shape
    co = w_hwio.shape[-1]
    wr = w_hwio.reshape(9 * cin, co).astype(MXU_DTYPE)
    return pl.pallas_call(
        _conv2_kernel,
        out_shape=(jax.ShapeDtypeStruct((n, h * w, co), MXU_DTYPE),
                   jax.ShapeDtypeStruct((n, 2, co), jnp.float32)),
        grid=(n,),
        in_specs=[
            pl.BlockSpec((1, h, w, cin), lambda i: (i, 0, 0, 0)),
            pl.BlockSpec((1, cin), lambda i: (0, 0)),
            pl.BlockSpec((1, cin), lambda i: (0, 0)),
            pl.BlockSpec((9 * cin, co), lambda i: (0, 0)),
        ],
        out_specs=(pl.BlockSpec((1, h * w, co), lambda i: (i, 0, 0)),
                   pl.BlockSpec((1, 2, co), lambda i: (i, 0, 0))),
        compiler_params=_cparams(),
    )(x_nhwc, scale, shift, wr)


# ----------------------- final BN+ReLU (gridded, parallel) --------------------
def _bn_relu_kernel(x_ref, scale_ref, shift_ref, o_ref):
    x = x_ref[0].astype(jnp.float32)                        # (h*w, c)
    o_ref[0] = jnp.maximum(x * scale_ref[...] + shift_ref[...], 0.0).astype(o_ref.dtype)


def bn_relu_apply(x_flat, scale, shift, out_dtype):
    n, hw, c = x_flat.shape
    return pl.pallas_call(
        _bn_relu_kernel,
        out_shape=jax.ShapeDtypeStruct((n, hw, c), out_dtype),
        grid=(n,),
        in_specs=[
            pl.BlockSpec((1, hw, c), lambda i: (i, 0, 0)),
            pl.BlockSpec((1, c), lambda i: (0, 0)),
            pl.BlockSpec((1, c), lambda i: (0, 0)),
        ],
        out_specs=pl.BlockSpec((1, hw, c), lambda i: (i, 0, 0)),
        compiler_params=_cparams(),
    )(x_flat, scale, shift)


# ------------------------------------ glue ------------------------------------
def _bn_scale_shift(stats, gamma, beta, count):
    """stats: (n, 2, C) per-image [sum, sumsq] -> folded BN scale/shift (1, C)."""
    tot = jnp.sum(stats, axis=0)                             # (2, C)
    mean = tot[0] / count
    var = jnp.maximum(tot[1] / count - mean * mean, 0.0)     # biased (training BN)
    inv = jax.lax.rsqrt(var + EPS)
    scale = gamma * inv
    shift = beta - mean * scale
    return (scale.reshape(1, -1).astype(jnp.float32),
            shift.reshape(1, -1).astype(jnp.float32))


def init_upsample_block_params(key, ch_in, ch_out):
    k1, k2 = jax.random.split(key)

    def conv_init(k, cin, cout):  # PyTorch default: U(-1/sqrt(fan_in), 1/sqrt(fan_in))
        bound = 1.0 / np.sqrt(cin * 9)
        return jax.random.uniform(k, (3, 3, cin, cout), jnp.float32, -bound, bound)

    return {
        "w1": conv_init(k1, ch_in, ch_out),
        "g1": jnp.ones((ch_out,), jnp.float32),
        "b1": jnp.zeros((ch_out,), jnp.float32),
        "w2": conv_init(k2, ch_out, ch_out),
        "g2": jnp.ones((ch_out,), jnp.float32),
        "b2": jnp.zeros((ch_out,), jnp.float32),
    }


def upsample_block_forward(params, x, y):
    # x, y: NCHW (PyTorch boundary).  Internals run NHWC.
    n, cx, _, _ = x.shape
    _, cy, yh, yw = y.shape
    co = params["w1"].shape[-1]

    x_nhwc = jnp.transpose(x, (0, 2, 3, 1))          # small boundary transposes
    y_nhwc = jnp.transpose(y, (0, 2, 3, 1))
    count = n * yh * yw

    # conv1 with the bilinear upsample, pad_or_crop and channel concat fused in.
    c1, s1 = conv1_upsample_fused(x_nhwc, y_nhwc, params["w1"], cx)
    sc1, sh1 = _bn_scale_shift(s1, params["g1"], params["b1"], count)

    # conv2 with BN1(batch stats)+ReLU fused into its input path.
    c2, s2 = bn_relu_conv(c1, sc1, sh1, params["w2"])        # (n, yh*yw, co)
    sc2, sh2 = _bn_scale_shift(s2, params["g2"], params["b2"], count)

    z = bn_relu_apply(c2, sc2, sh2, x.dtype)                 # (n, yh*yw, co)
    z = z.reshape(n, yh, yw, co)
    # TODO(synk): emit NCHW directly from the last kernel (in-kernel transpose)
    # to save this extra XLA pass over the final output.
    return jnp.transpose(z, (0, 3, 1, 2))


if __name__ == "__main__":
    key = jax.random.PRNGKey(0)
    kx, ky, kp = jax.random.split(key, 3)

    N, CX, CY = 2, 2, 2            # x channels + y channels -> ch_in = 4
    H, W = 8, 8                    # x spatial; y spatial is 2x
    ch_in, ch_out = CX + CY, 4

    x = jax.random.normal(kx, (N, CX, H, W), jnp.float32)
    y = jax.random.normal(ky, (N, CY, 2 * H, 2 * W), jnp.float32)
    params = init_upsample_block_params(kp, ch_in, ch_out)

    out = jax.jit(upsample_block_forward)(params, x, y)
    out = jax.block_until_ready(out)

    assert out.shape == (N, ch_out, 2 * H, 2 * W), out.shape
    assert bool(jnp.all(jnp.isfinite(out)))
    print("KERNEL_OK")
</pallas_src>

<mosaic_0001>
module attributes {stable_mosaic.version = 11 : i64} {
  func.func @_conv1_kernel(%arg0: i32, %arg1: memref<1x8x8x2xf32, #tpu.memory_space<vmem>>, %arg2: memref<1x16x8x4xf32, #tpu.memory_space<vmem>>, %arg3: memref<18x4xbf16, #tpu.memory_space<vmem>>, %arg4: memref<18x4xbf16, #tpu.memory_space<vmem>>, %arg5: memref<1x128x8xbf16, #tpu.memory_space<vmem>>, %arg6: memref<1x2x4xf32, #tpu.memory_space<vmem>>) attributes {dimension_semantics = [#tpu.dimension_semantics<parallel>], iteration_bounds = array<i64: 2>, scalar_prefetch = 0 : i64, scratch_operands = 0 : i64, tpu.core_type = #tpu.core_type<tc>, window_params = [{transform_indices = @transform_0, window_bounds = array<i64: 1, 8, 8, 2>}, {transform_indices = @transform_1, window_bounds = array<i64: 1, 16, 8, 4>}, {pipeline_mode = #tpu.pipeline_mode<synchronous>, transform_indices = @transform_2, window_bounds = array<i64: 18, 4>}, {pipeline_mode = #tpu.pipeline_mode<synchronous>, transform_indices = @transform_3, window_bounds = array<i64: 18, 4>}, {transform_indices = @transform_4, window_bounds = array<i64: 1, 128, 8>}, {transform_indices = @transform_5, window_bounds = array<i64: 1, 2, 4>}]} {
    %c0 = arith.constant 0 : index
    %c0_0 = arith.constant 0 : index
    %c0_1 = arith.constant 0 : index
    %c0_2 = arith.constant 0 : index
    %0 = vector.load %arg1[%c0, %c0_0, %c0_1, %c0_2] : memref<1x8x8x2xf32, #tpu.memory_space<vmem>>, vector<1x8x8x2xf32>
    %1 = vector.shape_cast %0 : vector<1x8x8x2xf32> to vector<8x8x2xf32>
    %2 = vector.extract_strided_slice %1 {offsets = [0, 0, 0], sizes = [1, 8, 2], strides = [1, 1, 1]} : vector<8x8x2xf32> to vector<1x8x2xf32>
    %3 = vector.extract_strided_slice %1 {offsets = [0, 0, 0], sizes = [7, 8, 2], strides = [1, 1, 1]} : vector<8x8x2xf32> to vector<7x8x2xf32>
    %4 = tpu.concatenate %2, %3 in 0 : vector<1x8x2xf32>, vector<7x8x2xf32> -> vector<8x8x2xf32>
    %5 = vector.extract_strided_slice %1 {offsets = [1, 0, 0], sizes = [7, 8, 2], strides = [1, 1, 1]} : vector<8x8x2xf32> to vector<7x8x2xf32>
    %6 = vector.extract_strided_slice %1 {offsets = [7, 0, 0], sizes = [1, 8, 2], strides = [1, 1, 1]} : vector<8x8x2xf32> to vector<1x8x2xf32>
    %7 = tpu.concatenate %5, %6 in 0 : vector<7x8x2xf32>, vector<1x8x2xf32> -> vector<8x8x2xf32>
    %cst = arith.constant 2.500000e-01 : f32
    %8 = vector.broadcast %cst : f32 to vector<8x8x2xf32>
    %9 = arith.mulf %8, %4 : vector<8x8x2xf32>
    %cst_3 = arith.constant 7.500000e-01 : f32
    %10 = vector.broadcast %cst_3 : f32 to vector<8x8x2xf32>
    %11 = arith.mulf %10, %1 : vector<8x8x2xf32>
    %12 = arith.addf %9, %11 : vector<8x8x2xf32>
    %cst_4 = arith.constant 7.500000e-01 : f32
    %13 = vector.broadcast %cst_4 : f32 to vector<8x8x2xf32>
    %14 = arith.mulf %13, %1 : vector<8x8x2xf32>
    %cst_5 = arith.constant 2.500000e-01 : f32
    %15 = vector.broadcast %cst_5 : f32 to vector<8x8x2xf32>
    %16 = arith.mulf %15, %7 : vector<8x8x2xf32>
    %17 = arith.addf %14, %16 : vector<8x8x2xf32>
    %18 = vector.shape_cast %12 : vector<8x8x2xf32> to vector<8x1x8x2xf32>
    %19 = vector.shape_cast %17 : vector<8x8x2xf32> to vector<8x1x8x2xf32>
    %20 = tpu.concatenate %18, %19 in 1 : vector<8x1x8x2xf32>, vector<8x1x8x2xf32> -> vector<8x2x8x2xf32>
    %21 = vector.shape_cast %20 : vector<8x2x8x2xf32> to vector<16x8x2xf32>
    %22 = vector.extract_strided_slice %21 {offsets = [0, 0, 0], sizes = [16, 1, 2], strides = [1, 1, 1]} : vector<16x8x2xf32> to vector<16x1x2xf32>
    %23 = vector.extract_strided_slice %21 {offsets = [0, 0, 0], sizes = [16, 7, 2], strides = [1, 1, 1]} : vector<16x8x2xf32> to vector<16x7x2xf32>
    %24 = tpu.concatenate %22, %23 in 1 : vector<16x1x2xf32>, vector<16x7x2xf32> -> vector<16x8x2xf32>
    %25 = vector.extract_strided_slice %21 {offsets = [0, 1, 0], sizes = [16, 7, 2], strides = [1, 1, 1]} : vector<16x8x2xf32> to vector<16x7x2xf32>
    %26 = vector.extract_strided_slice %21 {offsets = [0, 7, 0], sizes = [16, 1, 2], strides = [1, 1, 1]} : vector<16x8x2xf32> to vector<16x1x2xf32>
    %27 = tpu.concatenate %25, %26 in 1 : vector<16x7x2xf32>, vector<16x1x2xf32> -> vector<16x8x2xf32>
    %cst_6 = arith.constant 2.500000e-01 : f32
    %28 = vector.broadcast %cst_6 : f32 to vector<16x8x2xf32>
    %29 = arith.mulf %28, %24 : vector<16x8x2xf32>
    %cst_7 = arith.constant 7.500000e-01 : f32
    %30 = vector.broadcast %cst_7 : f32 to vector<16x8x2xf32>
    %31 = arith.mulf %30, %21 : vector<16x8x2xf32>
    %32 = arith.addf %29, %31 : vector<16x8x2xf32>
    %cst_8 = arith.constant 7.500000e-01 : f32
    %33 = vector.broadcast %cst_8 : f32 to vector<16x8x2xf32>
    %34 = arith.mulf %33, %21 : vector<16x8x2xf32>
    %cst_9 = arith.constant 2.500000e-01 : f32
    %35 = vector.broadcast %cst_9 : f32 to vector<16x8x2xf32>
    %36 = arith.mulf %35, %27 : vector<16x8x2xf32>
    %37 = arith.addf %34, %36 : vector<16x8x2xf32>
    %38 = arith.truncf %32 : vector<16x8x2xf32> to vector<16x8x2xbf16>
    %39 = arith.truncf %37 : vector<16x8x2xf32> to vector<16x8x2xbf16>
    %c0_10 = arith.constant 0 : index
    %c0_11 = arith.constant 0 : index
    %c0_12 = arith.constant 0 : index
    %c0_13 = arith.constant 0 : index
    %40 = vector.load %arg2[%c0_10, %c0_11, %c0_12, %c0_13] : memref<1x16x8x4xf32, #tpu.memory_space<vmem>>, vector<1x16x8x4xf32>
    %41 = vector.shape_cast %40 : vector<1x16x8x4xf32> to vector<16x8x4xf32>
    %42 = arith.truncf %41 : vector<16x8x4xf32> to vector<16x8x4xbf16>
    %43 = vector.extract_strided_slice %42 {offsets = [0, 0, 0], sizes = [16, 8, 2], strides = [1, 1, 1]} : vector<16x8x4xbf16> to vector<16x8x2xbf16>
    %44 = vector.extract_strided_slice %42 {offsets = [0, 0, 2], sizes = [16, 8, 2], strides = [1, 1, 1]} : vector<16x8x4xbf16> to vector<16x8x2xbf16>
    %c0_14 = arith.constant 0 : index
    %c0_15 = arith.constant 0 : index
    %45 = vector.load %arg3[%c0_14, %c0_15] : memref<18x4xbf16, #tpu.memory_space<vmem>>, vector<18x4xbf16>
    %c0_16 = arith.constant 0 : index
    %c0_17 = arith.constant 0 : index
    %46 = vector.load %arg4[%c0_16, %c0_17] : memref<18x4xbf16, #tpu.memory_space<vmem>>, vector<18x4xbf16>
    %cst_18 = arith.constant 0.000000e+00 : bf16
    %47 = vector.broadcast %cst_18 : bf16 to vector<16x1x2xbf16>
    %48 = vector.extract_strided_slice %39 {offsets = [0, 0, 0], sizes = [16, 7, 2], strides = [1, 1, 1]} : vector<16x8x2xbf16> to vector<16x7x2xbf16>
    %49 = tpu.concatenate %47, %48 in 1 : vector<16x1x2xbf16>, vector<16x7x2xbf16> -> vector<16x8x2xbf16>
    %cst_19 = arith.constant 0.000000e+00 : bf16
    %50 = vector.broadcast %cst_19 : bf16 to vector<1x8x2xbf16>
    %51 = tpu.concatenate %50, %49, %50 in 0 : vector<1x8x2xbf16>, vector<16x8x2xbf16>, vector<1x8x2xbf16> -> vector<18x8x2xbf16>
    %cst_20 = arith.constant 0.000000e+00 : bf16
    %52 = vector.broadcast %cst_20 : bf16 to vector<1x8x2xbf16>
    %53 = tpu.concatenate %52, %38, %52 in 0 : vector<1x8x2xbf16>, vector<16x8x2xbf16>, vector<1x8x2xbf16> -> vector<18x8x2xbf16>
    %cst_21 = arith.constant 0.000000e+00 : bf16
    %54 = vector.broadcast %cst_21 : bf16 to vector<1x8x2xbf16>
    %55 = tpu.concatenate %54, %39, %54 in 0 : vector<1x8x2xbf16>, vector<16x8x2xbf16>, vector<1x8x2xbf16> -> vector<18x8x2xbf16>
    %56 = vector.extract_strided_slice %51 {offsets = [0, 0, 0], sizes = [16, 8, 2], strides = [1, 1, 1]} : vector<18x8x2xbf16> to vector<16x8x2xbf16>
    %57 = vector.extract_strided_slice %53 {offsets = [0, 0, 0], sizes = [16, 8, 2], strides = [1, 1, 1]} : vector<18x8x2xbf16> to vector<16x8x2xbf16>
    %58 = vector.extract_strided_slice %55 {offsets = [0, 0, 0], sizes = [16, 8, 2], strides = [1, 1, 1]} : vector<18x8x2xbf16> to vector<16x8x2xbf16>
    %59 = vector.extract_strided_slice %51 {offsets = [1, 0, 0], sizes = [16, 8, 2], strides = [1, 1, 1]} : vector<18x8x2xbf16> to vector<16x8x2xbf16>
    %60 = vector.extract_strided_slice %53 {offsets = [1, 0, 0], sizes = [16, 8, 2], strides = [1, 1, 1]} : vector<18x8x2xbf16> to vector<16x8x2xbf16>
    %61 = vector.extract_strided_slice %55 {offsets = [1, 0, 0], sizes = [16, 8, 2], strides = [1, 1, 1]} : vector<18x8x2xbf16> to vector<16x8x2xbf16>
    %62 = vector.extract_strided_slice %51 {offsets = [2, 0, 0], sizes = [16, 8, 2], strides = [1, 1, 1]} : vector<18x8x2xbf16> to vector<16x8x2xbf16>
    %63 = vector.extract_strided_slice %53 {offsets = [2, 0, 0], sizes = [16, 8, 2], strides = [1, 1, 1]} : vector<18x8x2xbf16> to vector<16x8x2xbf16>
    %64 = vector.extract_strided_slice %55 {offsets = [2, 0, 0], sizes = [16, 8, 2], strides = [1, 1, 1]} : vector<18x8x2xbf16> to vector<16x8x2xbf16>
    %65 = tpu.concatenate %56, %57, %58, %59, %60, %61, %62, %63, %64 in 2 : vector<16x8x2xbf16>, vector<16x8x2xbf16>, vector<16x8x2xbf16>, vector<16x8x2xbf16>, vector<16x8x2xbf16>, vector<16x8x2xbf16>, vector<16x8x2xbf16>, vector<16x8x2xbf16>, vector<16x8x2xbf16> -> vector<16x8x18xbf16>
    %66 = vector.shape_cast %65 : vector<16x8x18xbf16> to vector<128x18xbf16>
    %cst_22 = arith.constant dense<0.000000e+00> : vector<128x4xf32>
    %67 = tpu.matmul %66, %45, %cst_22 {dimension_numbers = #tpu.dot_dimension_numbers<[1], [0], [0], [1], [0, 0, 1, 1], [], []>} : vector<128x18xbf16>, vector<18x4xbf16>, vector<128x4xf32> -> vector<128x4xf32>
    %cst_23 = arith.constant 0.000000e+00 : bf16
    %68 = vector.broadcast %cst_23 : bf16 to vector<16x1x2xbf16>
    %69 = vector.extract_strided_slice %44 {offsets = [0, 0, 0], sizes = [16, 7, 2], strides = [1, 1, 1]} : vector<16x8x2xbf16> to vector<16x7x2xbf16>
    %70 = tpu.concatenate %68, %69 in 1 : vector<16x1x2xbf16>, vector<16x7x2xbf16> -> vector<16x8x2xbf16>
    %cst_24 = arith.constant 0.000000e+00 : bf16
    %71 = vector.broadcast %cst_24 : bf16 to vector<1x8x2xbf16>
    %72 = tpu.concatenate %71, %70, %71 in 0 : vector<1x8x2xbf16>, vector<16x8x2xbf16>, vector<1x8x2xbf16> -> vector<18x8x2xbf16>
    %cst_25 = arith.constant 0.000000e+00 : bf16
    %73 = vector.broadcast %cst_25 : bf16 to vector<1x8x2xbf16>
    %74 = tpu.concatenate %73, %43, %73 in 0 : vector<1x8x2xbf16>, vector<16x8x2xbf16>, vector<1x8x2xbf16> -> vector<18x8x2xbf16>
    %cst_26 = arith.constant 0.000000e+00 : bf16
    %75 = vector.broadcast %cst_26 : bf16 to vector<1x8x2xbf16>
    %76 = tpu.concatenate %75, %44, %75 in 0 : vector<1x8x2xbf16>, vector<16x8x2xbf16>, vector<1x8x2xbf16> -> vector<18x8x2xbf16>
    %77 = vector.extract_strided_slice %72 {offsets = [0, 0, 0], sizes = [16, 8, 2], strides = [1, 1, 1]} : vector<18x8x2xbf16> to vector<16x8x2xbf16>
    %78 = vector.extract_strided_slice %74 {offsets = [0, 0, 0], sizes = [16, 8, 2], strides = [1, 1, 1]} : vector<18x8x2xbf16> to vector<16x8x2xbf16>
    %79 = vector.extract_strided_slice %76 {offsets = [0, 0, 0], sizes = [16, 8, 2], strides = [1, 1, 1]} : vector<18x8x2xbf16> to vector<16x8x2xbf16>
    %80 = vector.extract_strided_slice %72 {offsets = [1, 0, 0], sizes = [16, 8, 2], strides = [1, 1, 1]} : vector<18x8x2xbf16> to vector<16x8x2xbf16>
    %81 = vector.extract_strided_slice %74 {offsets = [1, 0, 0], sizes = [16, 8, 2], strides = [1, 1, 1]} : vector<18x8x2xbf16> to vector<16x8x2xbf16>
    %82 = vector.extract_strided_slice %76 {offsets = [1, 0, 0], sizes = [16, 8, 2], strides = [1, 1, 1]} : vector<18x8x2xbf16> to vector<16x8x2xbf16>
    %83 = vector.extract_strided_slice %72 {offsets = [2, 0, 0], sizes = [16, 8, 2], strides = [1, 1, 1]} : vector<18x8x2xbf16> to vector<16x8x2xbf16>
    %84 = vector.extract_strided_slice %74 {offsets = [2, 0, 0], sizes = [16, 8, 2], strides = [1, 1, 1]} : vector<18x8x2xbf16> to vector<16x8x2xbf16>
    %85 = vector.extract_strided_slice %76 {offsets = [2, 0, 0], sizes = [16, 8, 2], strides = [1, 1, 1]} : vector<18x8x2xbf16> to vector<16x8x2xbf16>
    %86 = tpu.concatenate %77, %78, %79, %80, %81, %82, %83, %84, %85 in 2 : vector<16x8x2xbf16>, vector<16x8x2xbf16>, vector<16x8x2xbf16>, vector<16x8x2xbf16>, vector<16x8x2xbf16>, vector<16x8x2xbf16>, vector<16x8x2xbf16>, vector<16x8x2xbf16>, vector<16x8x2xbf16> -> vector<16x8x18xbf16>
    %87 = vector.shape_cast %86 : vector<16x8x18xbf16> to vector<128x18xbf16>
    %cst_27 = arith.constant dense<0.000000e+00> : vector<128x4xf32>
    %88 = tpu.matmul %87, %46, %cst_27 {dimension_numbers = #tpu.dot_dimension_numbers<[1], [0], [0], [1], [0, 0, 1, 1], [], []>} : vector<128x18xbf16>, vector<18x4xbf16>, vector<128x4xf32> -> vector<128x4xf32>
    %89 = arith.addf %67, %88 : vector<128x4xf32>
    %90 = vector.extract_strided_slice %38 {offsets = [0, 1, 0], sizes = [16, 7, 2], strides = [1, 1, 1]} : vector<16x8x2xbf16> to vector<16x7x2xbf16>
    %cst_28 = arith.constant 0.000000e+00 : bf16
    %91 = vector.broadcast %cst_28 : bf16 to vector<16x1x2xbf16>
    %92 = tpu.concatenate %90, %91 in 1 : vector<16x7x2xbf16>, vector<16x1x2xbf16> -> vector<16x8x2xbf16>
    %cst_29 = arith.constant 0.000000e+00 : bf16
    %93 = vector.broadcast %cst_29 : bf16 to vector<1x8x2xbf16>
    %94 = tpu.concatenate %93, %38, %93 in 0 : vector<1x8x2xbf16>, vector<16x8x2xbf16>, vector<1x8x2xbf16> -> vector<18x8x2xbf16>
    %cst_30 = arith.constant 0.000000e+00 : bf16
    %95 = vector.broadcast %cst_30 : bf16 to vector<1x8x2xbf16>
    %96 = tpu.concatenate %95, %39, %95 in 0 : vector<1x8x2xbf16>, vector<16x8x2xbf16>, vector<1x8x2xbf16> -> vector<18x8x2xbf16>
    %cst_31 = arith.constant 0.000000e+00 : bf16
    %97 = vector.broadcast %cst_31 : bf16 to vector<1x8x2xbf16>
    %98 = tpu.concatenate %97, %92, %97 in 0 : vector<1x8x2xbf16>, vector<16x8x2xbf16>, vector<1x8x2xbf16> -> vector<18x8x2xbf16>
    %99 = vector.extract_strided_slice %94 {offsets = [0, 0, 0], sizes = [16, 8, 2], strides = [1, 1, 1]} : vector<18x8x2xbf16> to vector<16x8x2xbf16>
    %100 = vector.extract_strided_slice %96 {offsets = [0, 0, 0], sizes = [16, 8, 2], strides = [1, 1, 1]} : vector<18x8x2xbf16> to vector<16x8x2xbf16>
    %101 = vector.extract_strided_slice %98 {offsets = [0, 0, 0], sizes = [16, 8, 2], strides = [1, 1, 1]} : vector<18x8x2xbf16> to vector<16x8x2xbf16>
    %102 = vector.extract_strided_slice %94 {offsets = [1, 0, 0], sizes = [16, 8, 2], strides = [1, 1, 1]} : vector<18x8x2xbf16> to vector<16x8x2xbf16>
    %103 = vector.extract_strided_slice %96 {offsets = [1, 0, 0], sizes = [16, 8, 2], strides = [1, 1, 1]} : vector<18x8x2xbf16> to vector<16x8x2xbf16>
    %104 = vector.extract_strided_slice %98 {offsets = [1, 0, 0], sizes = [16, 8, 2], strides = [1, 1, 1]} : vector<18x8x2xbf16> to vector<16x8x2xbf16>
    %105 = vector.extract_strided_slice %94 {offsets = [2, 0, 0], sizes = [16, 8, 2], strides = [1, 1, 1]} : vector<18x8x2xbf16> to vector<16x8x2xbf16>
    %106 = vector.extract_strided_slice %96 {offsets = [2, 0, 0], sizes = [16, 8, 2], strides = [1, 1, 1]} : vector<18x8x2xbf16> to vector<16x8x2xbf16>
    %107 = vector.extract_strided_slice %98 {offsets = [2, 0, 0], sizes = [16, 8, 2], strides = [1, 1, 1]} : vector<18x8x2xbf16> to vector<16x8x2xbf16>
    %108 = tpu.concatenate %99, %100, %101, %102, %103, %104, %105, %106, %107 in 2 : vector<16x8x2xbf16>, vector<16x8x2xbf16>, vector<16x8x2xbf16>, vector<16x8x2xbf16>, vector<16x8x2xbf16>, vector<16x8x2xbf16>, vector<16x8x2xbf16>, vector<16x8x2xbf16>, vector<16x8x2xbf16> -> vector<16x8x18xbf16>
    %109 = vector.shape_cast %108 : vector<16x8x18xbf16> to vector<128x18xbf16>
    %cst_32 = arith.constant dense<0.000000e+00> : vector<128x4xf32>
    %110 = tpu.matmul %109, %45, %cst_32 {dimension_numbers = #tpu.dot_dimension_numbers<[1], [0], [0], [1], [0, 0, 1, 1], [], []>} : vector<128x18xbf16>, vector<18x4xbf16>, vector<128x4xf32> -> vector<128x4xf32>
    %111 = vector.extract_strided_slice %43 {offsets = [0, 1, 0], sizes = [16, 7, 2], strides = [1, 1, 1]} : vector<16x8x2xbf16> to vector<16x7x2xbf16>
    %cst_33 = arith.constant 0.000000e+00 : bf16
    %112 = vector.broadcast %cst_33 : bf16 to vector<16x1x2xbf16>
    %113 = tpu.concatenate %111, %112 in 1 : vector<16x7x2xbf16>, vector<16x1x2xbf16> -> vector<16x8x2xbf16>
    %cst_34 = arith.constant 0.000000e+00 : bf16
    %114 = vector.broadcast %cst_34 : bf16 to vector<1x8x2xbf16>
    %115 = tpu.concatenate %114, %43, %114 in 0 : vector<1x8x2xbf16>, vector<16x8x2xbf16>, vector<1x8x2xbf16> -> vector<18x8x2xbf16>
    %cst_35 = arith.constant 0.000000e+00 : bf16
    %116 = vector.broadcast %cst_35 : bf16 to vector<1x8x2xbf16>
    %117 = tpu.concatenate %116, %44, %116 in 0 : vector<1x8x2xbf16>, vector<16x8x2xbf16>, vector<1x8x2xbf16> -> vector<18x8x2xbf16>
    %cst_36 = arith.constant 0.000000e+00 : bf16
    %118 = vector.broadcast %cst_36 : bf16 to vector<1x8x2xbf16>
    %119 = tpu.concatenate %118, %113, %118 in 0 : vector<1x8x2xbf16>, vector<16x8x2xbf16>, vector<1x8x2xbf16> -> vector<18x8x2xbf16>
    %120 = vector.extract_strided_slice %115 {offsets = [0, 0, 0], sizes = [16, 8, 2], strides = [1, 1, 1]} : vector<18x8x2xbf16> to vector<16x8x2xbf16>
    %121 = vector.extract_strided_slice %117 {offsets = [0, 0, 0], sizes = [16, 8, 2], strides = [1, 1, 1]} : vector<18x8x2xbf16> to vector<16x8x2xbf16>
    %122 = vector.extract_strided_slice %119 {offsets = [0, 0, 0], sizes = [16, 8, 2], strides = [1, 1, 1]} : vector<18x8x2xbf16> to vector<16x8x2xbf16>
    %123 = vector.extract_strided_slice %115 {offsets = [1, 0, 0], sizes = [16, 8, 2], strides = [1, 1, 1]} : vector<18x8x2xbf16> to vector<16x8x2xbf16>
    %124 = vector.extract_strided_slice %117 {offsets = [1, 0, 0], sizes = [16, 8, 2], strides = [1, 1, 1]} : vector<18x8x2xbf16> to vector<16x8x2xbf16>
    %125 = vector.extract_strided_slice %119 {offsets = [1, 0, 0], sizes = [16, 8, 2], strides = [1, 1, 1]} : vector<18x8x2xbf16> to vector<16x8x2xbf16>
    %126 = vector.extract_strided_slice %115 {offsets = [2, 0, 0], sizes = [16, 8, 2], strides = [1, 1, 1]} : vector<18x8x2xbf16> to vector<16x8x2xbf16>
    %127 = vector.extract_strided_slice %117 {offsets = [2, 0, 0], sizes = [16, 8, 2], strides = [1, 1, 1]} : vector<18x8x2xbf16> to vector<16x8x2xbf16>
    %128 = vector.extract_strided_slice %119 {offsets = [2, 0, 0], sizes = [16, 8, 2], strides = [1, 1, 1]} : vector<18x8x2xbf16> to vector<16x8x2xbf16>
    %129 = tpu.concatenate %120, %121, %122, %123, %124, %125, %126, %127, %128 in 2 : vector<16x8x2xbf16>, vector<16x8x2xbf16>, vector<16x8x2xbf16>, vector<16x8x2xbf16>, vector<16x8x2xbf16>, vector<16x8x2xbf16>, vector<16x8x2xbf16>, vector<16x8x2xbf16>, vector<16x8x2xbf16> -> vector<16x8x18xbf16>
    %130 = vector.shape_cast %129 : vector<16x8x18xbf16> to vector<128x18xbf16>
    %cst_37 = arith.constant dense<0.000000e+00> : vector<128x4xf32>
    %131 = tpu.matmul %130, %46, %cst_37 {dimension_numbers = #tpu.dot_dimension_numbers<[1], [0], [0], [1], [0, 0, 1, 1], [], []>} : vector<128x18xbf16>, vector<18x4xbf16>, vector<128x4xf32> -> vector<128x4xf32>
    %132 = arith.addf %110, %131 : vector<128x4xf32>
    %133 = tpu.concatenate %89, %132 in 1 : vector<128x4xf32>, vector<128x4xf32> -> vector<128x8xf32>
    %134 = arith.truncf %133 : vector<128x8xf32> to vector<128x8xbf16>
    %c0_38 = arith.constant 0 : index
    %c0_39 = arith.constant 0 : index
    %c0_40 = arith.constant 0 : index
    %135 = vector.load %arg5[%c0_38, %c0_39, %c0_40] : memref<1x128x8xbf16, #tpu.memory_space<vmem>>, vector<1x128x8xbf16>
    %136 = vector.shape_cast %135 : vector<1x128x8xbf16> to vector<128x8xbf16>
    %137 = vector.shape_cast %134 : vector<128x8xbf16> to vector<1x128x8xbf16>
    tpu.vector_store %arg5[%c0_38, %c0_39, %c0_40], %137 {strides = array<i32>} : memref<1x128x8xbf16, #tpu.memory_space<vmem>>, vector<1x128x8xbf16>,
    %cst_41 = arith.constant dense<0.000000e+00> : vector<4xf32>
    %138 = vector.multi_reduction <add>, %89, %cst_41 [0] : vector<128x4xf32> to vector<4xf32>
    %139 = vector.shape_cast %138 : vector<4xf32> to vector<1x4xf32>
    %cst_42 = arith.constant dense<0.000000e+00> : vector<4xf32>
    %140 = vector.multi_reduction <add>, %132, %cst_42 [0] : vector<128x4xf32> to vector<4xf32>
    %141 = vector.shape_cast %140 : vector<4xf32> to vector<1x4xf32>
    %142 = arith.addf %139, %141 : vector<1x4xf32>
    %143 = arith.mulf %89, %89 : vector<128x4xf32>
    %cst_43 = arith.constant dense<0.000000e+00> : vector<4xf32>
    %144 = vector.multi_reduction <add>, %143, %cst_43 [0] : vector<128x4xf32> to vector<4xf32>
    %145 = vector.shape_cast %144 : vector<4xf32> to vector<1x4xf32>
    %146 = arith.mulf %132, %132 : vector<128x4xf32>
    %cst_44 = arith.constant dense<0.000000e+00> : vector<4xf32>
    %147 = vector.multi_reduction <add>, %146, %cst_44 [0] : vector<128x4xf32> to vector<4xf32>
    %148 = vector.shape_cast %147 : vector<4xf32> to vector<1x4xf32>
    %149 = arith.addf %145, %148 : vector<1x4xf32>
    %150 = tpu.concatenate %142, %149 in 0 : vector<1x4xf32>, vector<1x4xf32> -> vector<2x4xf32>
    %c0_45 = arith.constant 0 : index
    %c0_46 = arith.constant 0 : index
    %c0_47 = arith.constant 0 : index
    %151 = vector.load %arg6[%c0_45, %c0_46, %c0_47] : memref<1x2x4xf32, #tpu.memory_space<vmem>>, vector<1x2x4xf32>
    %152 = vector.shape_cast %151 : vector<1x2x4xf32> to vector<2x4xf32>
    %153 = vector.shape_cast %150 : vector<2x4xf32> to vector<1x2x4xf32>
    tpu.vector_store %arg6[%c0_45, %c0_46, %c0_47], %153 {strides = array<i32>} : memref<1x2x4xf32, #tpu.memory_space<vmem>>, vector<1x2x4xf32>,
    return
  }
  func.func @transform_0(%arg0: i32) -> (i32, i32, i32, i32) {
    %c0_i32 = arith.constant 0 : i32
    %c0_i32_0 = arith.constant 0 : i32
    %c0_i32_1 = arith.constant 0 : i32
    %c0_i32_2 = arith.constant 0 : i32
    return %arg0, %c0_i32, %c0_i32_0, %c0_i32_1 : i32, i32, i32, i32
  }
  func.func @transform_1(%arg0: i32) -> (i32, i32, i32, i32) {
    %c0_i32 = arith.constant 0 : i32
    %c0_i32_0 = arith.constant 0 : i32
    %c0_i32_1 = arith.constant 0 : i32
    %c0_i32_2 = arith.constant 0 : i32
    return %arg0, %c0_i32, %c0_i32_0, %c0_i32_1 : i32, i32, i32, i32
  }
  func.func @transform_2(%arg0: i32) -> (i32, i32) {
    %c0_i32 = arith.constant 0 : i32
    %c0_i32_0 = arith.constant 0 : i32
    %c0_i32_1 = arith.constant 0 : i32
    return %c0_i32, %c0_i32_0 : i32, i32
  }
  func.func @transform_3(%arg0: i32) -> (i32, i32) {
    %c0_i32 = arith.constant 0 : i32
    %c0_i32_0 = arith.constant 0 : i32
    %c0_i32_1 = arith.constant 0 : i32
    return %c0_i32, %c0_i32_0 : i32, i32
  }
  func.func @transform_4(%arg0: i32) -> (i32, i32, i32) {
    %c0_i32 = arith.constant 0 : i32
    %c0_i32_0 = arith.constant 0 : i32
    %c0_i32_1 = arith.constant 0 : i32
    return %arg0, %c0_i32, %c0_i32_0 : i32, i32, i32
  }
  func.func @transform_5(%arg0: i32) -> (i32, i32, i32) {
    %c0_i32 = arith.constant 0 : i32
    %c0_i32_0 = arith.constant 0 : i32
    %c0_i32_1 = arith.constant 0 : i32
    return %arg0, %c0_i32, %c0_i32_0 : i32, i32, i32
  }
}

module attributes {stable_mosaic.version = 11 : i64} {
  func.func @_bn_relu_kernel(%arg0: i32, %arg1: memref<1x256x4xbf16, #tpu.memory_space<vmem>>, %arg2: memref<1x4xf32, #tpu.memory_space<vmem>>, %arg3: memref<1x4xf32, #tpu.memory_space<vmem>>, %arg4: memref<1x256x4xf32, #tpu.memory_space<vmem>>) attributes {dimension_semantics = [#tpu.dimension_semantics<parallel>], iteration_bounds = array<i64: 2>, scalar_prefetch = 0 : i64, scratch_operands = 0 : i64, tpu.core_type = #tpu.core_type<tc>, window_params = [{transform_indices = @transform_0, window_bounds = array<i64: 1, 256, 4>}, {pipeline_mode = #tpu.pipeline_mode<synchronous>, transform_indices = @transform_1, window_bounds = array<i64: 1, 4>}, {pipeline_mode = #tpu.pipeline_mode<synchronous>, transform_indices = @transform_2, window_bounds = array<i64: 1, 4>}, {transform_indices = @transform_3, window_bounds = array<i64: 1, 256, 4>}]} {
    %c0 = arith.constant 0 : index
    %c0_0 = arith.constant 0 : index
    %c0_1 = arith.constant 0 : index
    %0 = vector.load %arg1[%c0, %c0_0, %c0_1] : memref<1x256x4xbf16, #tpu.memory_space<vmem>>, vector<1x256x4xbf16>
    %1 = vector.shape_cast %0 : vector<1x256x4xbf16> to vector<256x4xbf16>
    %2 = arith.extf %1 : vector<256x4xbf16> to vector<256x4xf32>
    %c0_2 = arith.constant 0 : index
    %c0_3 = arith.constant 0 : index
    %3 = vector.load %arg2[%c0_2, %c0_3] : memref<1x4xf32, #tpu.memory_space<vmem>>, vector<1x4xf32>
    %4 = vector.broadcast %3 : vector<1x4xf32> to vector<256x4xf32>
    %5 = arith.mulf %2, %4 : vector<256x4xf32>
    %c0_4 = arith.constant 0 : index
    %c0_5 = arith.constant 0 : index
    %6 = vector.load %arg3[%c0_4, %c0_5] : memref<1x4xf32, #tpu.memory_space<vmem>>, vector<1x4xf32>
    %7 = vector.broadcast %6 : vector<1x4xf32> to vector<256x4xf32>
    %8 = arith.addf %5, %7 : vector<256x4xf32>
    %cst = arith.constant 0.000000e+00 : f32
    %9 = vector.broadcast %cst : f32 to vector<256x4xf32>
    %10 = arith.maximumf %8, %9 : vector<256x4xf32>
    %c0_6 = arith.constant 0 : index
    %c0_7 = arith.constant 0 : index
    %c0_8 = arith.constant 0 : index
    %11 = vector.load %arg4[%c0_6, %c0_7, %c0_8] : memref<1x256x4xf32, #tpu.memory_space<vmem>>, vector<1x256x4xf32>
    %12 = vector.shape_cast %11 : vector<1x256x4xf32> to vector<256x4xf32>
    %13 = vector.shape_cast %10 : vector<256x4xf32> to vector<1x256x4xf32>
    tpu.vector_store %arg4[%c0_6, %c0_7, %c0_8], %13 {strides = array<i32>} : memref<1x256x4xf32, #tpu.memory_space<vmem>>, vector<1x256x4xf32>,
    return
  }
  func.func @transform_0(%arg0: i32) -> (i32, i32, i32) {
    %c0_i32 = arith.constant 0 : i32
    %c0_i32_0 = arith.constant 0 : i32
    %c0_i32_1 = arith.constant 0 : i32
    return %arg0, %c0_i32, %c0_i32_0 : i32, i32, i32
  }
  func.func @transform_1(%arg0: i32) -> (i32, i32) {
    %c0_i32 = arith.constant 0 : i32
    %c0_i32_0 = arith.constant 0 : i32
    %c0_i32_1 = arith.constant 0 : i32
    return %c0_i32, %c0_i32_0 : i32, i32
  }
  func.func @transform_2(%arg0: i32) -> (i32, i32) {
    %c0_i32 = arith.constant 0 : i32
    %c0_i32_0 = arith.constant 0 : i32
    %c0_i32_1 = arith.constant 0 : i32
    return %c0_i32, %c0_i32_0 : i32, i32
  }
  func.func @transform_3(%arg0: i32) -> (i32, i32, i32) {
    %c0_i32 = arith.constant 0 : i32
    %c0_i32_0 = arith.constant 0 : i32
    %c0_i32_1 = arith.constant 0 : i32
    return %arg0, %c0_i32, %c0_i32_0 : i32, i32, i32
  }
}

module attributes {stable_mosaic.version = 11 : i64} {
  func.func @_conv2_kernel(%arg0: i32, %arg1: memref<1x16x16x4xbf16, #tpu.memory_space<vmem>>, %arg2: memref<1x4xf32, #tpu.memory_space<vmem>>, %arg3: memref<1x4xf32, #tpu.memory_space<vmem>>, %arg4: memref<36x4xbf16, #tpu.memory_space<vmem>>, %arg5: memref<1x256x4xbf16, #tpu.memory_space<vmem>>, %arg6: memref<1x2x4xf32, #tpu.memory_space<vmem>>) attributes {dimension_semantics = [#tpu.dimension_semantics<parallel>], iteration_bounds = array<i64: 2>, scalar_prefetch = 0 : i64, scratch_operands = 0 : i64, tpu.core_type = #tpu.core_type<tc>, window_params = [{transform_indices = @transform_0, window_bounds = array<i64: 1, 16, 16, 4>}, {pipeline_mode = #tpu.pipeline_mode<synchronous>, transform_indices = @transform_1, window_bounds = array<i64: 1, 4>}, {pipeline_mode = #tpu.pipeline_mode<synchronous>, transform_indices = @transform_2, window_bounds = array<i64: 1, 4>}, {pipeline_mode = #tpu.pipeline_mode<synchronous>, transform_indices = @transform_3, window_bounds = array<i64: 36, 4>}, {transform_indices = @transform_4, window_bounds = array<i64: 1, 256, 4>}, {transform_indices = @transform_5, window_bounds = array<i64: 1, 2, 4>}]} {
    %c0 = arith.constant 0 : index
    %c0_0 = arith.constant 0 : index
    %c0_1 = arith.constant 0 : index
    %c0_2 = arith.constant 0 : index
    %0 = vector.load %arg1[%c0, %c0_0, %c0_1, %c0_2] : memref<1x16x16x4xbf16, #tpu.memory_space<vmem>>, vector<1x16x16x4xbf16>
    %1 = vector.shape_cast %0 : vector<1x16x16x4xbf16> to vector<16x16x4xbf16>
    %2 = arith.extf %1 : vector<16x16x4xbf16> to vector<16x16x4xf32>
    %c0_3 = arith.constant 0 : index
    %c0_4 = arith.constant 0 : index
    %3 = vector.load %arg2[%c0_3, %c0_4] : memref<1x4xf32, #tpu.memory_space<vmem>>, vector<1x4xf32>
    %4 = vector.shape_cast %3 : vector<1x4xf32> to vector<1x1x4xf32>
    %5 = vector.broadcast %4 : vector<1x1x4xf32> to vector<16x16x4xf32>
    %6 = arith.mulf %2, %5 : vector<16x16x4xf32>
    %c0_5 = arith.constant 0 : index
    %c0_6 = arith.constant 0 : index
    %7 = vector.load %arg3[%c0_5, %c0_6] : memref<1x4xf32, #tpu.memory_space<vmem>>, vector<1x4xf32>
    %8 = vector.shape_cast %7 : vector<1x4xf32> to vector<1x1x4xf32>
    %9 = vector.broadcast %8 : vector<1x1x4xf32> to vector<16x16x4xf32>
    %10 = arith.addf %6, %9 : vector<16x16x4xf32>
    %cst = arith.constant 0.000000e+00 : f32
    %11 = vector.broadcast %cst : f32 to vector<16x16x4xf32>
    %12 = arith.maximumf %10, %11 : vector<16x16x4xf32>
    %13 = arith.truncf %12 : vector<16x16x4xf32> to vector<16x16x4xbf16>
    %cst_7 = arith.constant 0.000000e+00 : bf16
    %14 = vector.broadcast %cst_7 : bf16 to vector<16x1x4xbf16>
    %15 = vector.extract_strided_slice %13 {offsets = [0, 0, 0], sizes = [16, 15, 4], strides = [1, 1, 1]} : vector<16x16x4xbf16> to vector<16x15x4xbf16>
    %16 = tpu.concatenate %14, %15 in 1 : vector<16x1x4xbf16>, vector<16x15x4xbf16> -> vector<16x16x4xbf16>
    %17 = vector.extract_strided_slice %13 {offsets = [0, 1, 0], sizes = [16, 15, 4], strides = [1, 1, 1]} : vector<16x16x4xbf16> to vector<16x15x4xbf16>
    %cst_8 = arith.constant 0.000000e+00 : bf16
    %18 = vector.broadcast %cst_8 : bf16 to vector<16x1x4xbf16>
    %19 = tpu.concatenate %17, %18 in 1 : vector<16x15x4xbf16>, vector<16x1x4xbf16> -> vector<16x16x4xbf16>
    %c0_9 = arith.constant 0 : index
    %c0_10 = arith.constant 0 : index
    %20 = vector.load %arg4[%c0_9, %c0_10] : memref<36x4xbf16, #tpu.memory_space<vmem>>, vector<36x4xbf16>
    %cst_11 = arith.constant 0.000000e+00 : bf16
    %21 = vector.broadcast %cst_11 : bf16 to vector<1x16x4xbf16>
    %22 = tpu.concatenate %21, %16, %21 in 0 : vector<1x16x4xbf16>, vector<16x16x4xbf16>, vector<1x16x4xbf16> -> vector<18x16x4xbf16>
    %cst_12 = arith.constant 0.000000e+00 : bf16
    %23 = vector.broadcast %cst_12 : bf16 to vector<1x16x4xbf16>
    %24 = tpu.concatenate %23, %13, %23 in 0 : vector<1x16x4xbf16>, vector<16x16x4xbf16>, vector<1x16x4xbf16> -> vector<18x16x4xbf16>
    %cst_13 = arith.constant 0.000000e+00 : bf16
    %25 = vector.broadcast %cst_13 : bf16 to vector<1x16x4xbf16>
    %26 = tpu.concatenate %25, %19, %25 in 0 : vector<1x16x4xbf16>, vector<16x16x4xbf16>, vector<1x16x4xbf16> -> vector<18x16x4xbf16>
    %27 = vector.extract_strided_slice %22 {offsets = [0, 0, 0], sizes = [16, 16, 4], strides = [1, 1, 1]} : vector<18x16x4xbf16> to vector<16x16x4xbf16>
    %28 = vector.extract_strided_slice %24 {offsets = [0, 0, 0], sizes = [16, 16, 4], strides = [1, 1, 1]} : vector<18x16x4xbf16> to vector<16x16x4xbf16>
    %29 = vector.extract_strided_slice %26 {offsets = [0, 0, 0], sizes = [16, 16, 4], strides = [1, 1, 1]} : vector<18x16x4xbf16> to vector<16x16x4xbf16>
    %30 = vector.extract_strided_slice %22 {offsets = [1, 0, 0], sizes = [16, 16, 4], strides = [1, 1, 1]} : vector<18x16x4xbf16> to vector<16x16x4xbf16>
    %31 = vector.extract_strided_slice %24 {offsets = [1, 0, 0], sizes = [16, 16, 4], strides = [1, 1, 1]} : vector<18x16x4xbf16> to vector<16x16x4xbf16>
    %32 = vector.extract_strided_slice %26 {offsets = [1, 0, 0], sizes = [16, 16, 4], strides = [1, 1, 1]} : vector<18x16x4xbf16> to vector<16x16x4xbf16>
    %33 = vector.extract_strided_slice %22 {offsets = [2, 0, 0], sizes = [16, 16, 4], strides = [1, 1, 1]} : vector<18x16x4xbf16> to vector<16x16x4xbf16>
    %34 = vector.extract_strided_slice %24 {offsets = [2, 0, 0], sizes = [16, 16, 4], strides = [1, 1, 1]} : vector<18x16x4xbf16> to vector<16x16x4xbf16>
    %35 = vector.extract_strided_slice %26 {offsets = [2, 0, 0], sizes = [16, 16, 4], strides = [1, 1, 1]} : vector<18x16x4xbf16> to vector<16x16x4xbf16>
    %36 = tpu.concatenate %27, %28, %29, %30, %31, %32, %33, %34, %35 in 2 : vector<16x16x4xbf16>, vector<16x16x4xbf16>, vector<16x16x4xbf16>, vector<16x16x4xbf16>, vector<16x16x4xbf16>, vector<16x16x4xbf16>, vector<16x16x4xbf16>, vector<16x16x4xbf16>, vector<16x16x4xbf16> -> vector<16x16x36xbf16>
    %37 = vector.shape_cast %36 : vector<16x16x36xbf16> to vector<256x36xbf16>
    %cst_14 = arith.constant dense<0.000000e+00> : vector<256x4xf32>
    %38 = tpu.matmul %37, %20, %cst_14 {dimension_numbers = #tpu.dot_dimension_numbers<[1], [0], [0], [1], [0, 0, 1, 1], [], []>} : vector<256x36xbf16>, vector<36x4xbf16>, vector<256x4xf32> -> vector<256x4xf32>
    %39 = arith.truncf %38 : vector<256x4xf32> to vector<256x4xbf16>
    %c0_15 = arith.constant 0 : index
    %c0_16 = arith.constant 0 : index
    %c0_17 = arith.constant 0 : index
    %40 = vector.load %arg5[%c0_15, %c0_16, %c0_17] : memref<1x256x4xbf16, #tpu.memory_space<vmem>>, vector<1x256x4xbf16>
    %41 = vector.shape_cast %40 : vector<1x256x4xbf16> to vector<256x4xbf16>
    %42 = vector.shape_cast %39 : vector<256x4xbf16> to vector<1x256x4xbf16>
    tpu.vector_store %arg5[%c0_15, %c0_16, %c0_17], %42 {strides = array<i32>} : memref<1x256x4xbf16, #tpu.memory_space<vmem>>, vector<1x256x4xbf16>,
    %cst_18 = arith.constant dense<0.000000e+00> : vector<4xf32>
    %43 = vector.multi_reduction <add>, %38, %cst_18 [0] : vector<256x4xf32> to vector<4xf32>
    %44 = vector.shape_cast %43 : vector<4xf32> to vector<1x4xf32>
    %45 = arith.mulf %38, %38 : vector<256x4xf32>
    %cst_19 = arith.constant dense<0.000000e+00> : vector<4xf32>
    %46 = vector.multi_reduction <add>, %45, %cst_19 [0] : vector<256x4xf32> to vector<4xf32>
    %47 = vector.shape_cast %46 : vector<4xf32> to vector<1x4xf32>
    %48 = tpu.concatenate %44, %47 in 0 : vector<1x4xf32>, vector<1x4xf32> -> vector<2x4xf32>
    %c0_20 = arith.constant 0 : index
    %c0_21 = arith.constant 0 : index
    %c0_22 = arith.constant 0 : index
    %49 = vector.load %arg6[%c0_20, %c0_21, %c0_22] : memref<1x2x4xf32, #tpu.memory_space<vmem>>, vector<1x2x4xf32>
    %50 = vector.shape_cast %49 : vector<1x2x4xf32> to vector<2x4xf32>
    %51 = vector.shape_cast %48 : vector<2x4xf32> to vector<1x2x4xf32>
    tpu.vector_store %arg6[%c0_20, %c0_21, %c0_22], %51 {strides = array<i32>} : memref<1x2x4xf32, #tpu.memory_space<vmem>>, vector<1x2x4xf32>,
    return
  }
  func.func @transform_0(%arg0: i32) -> (i32, i32, i32, i32) {
    %c0_i32 = arith.constant 0 : i32
    %c0_i32_0 = arith.constant 0 : i32
    %c0_i32_1 = arith.constant 0 : i32
    %c0_i32_2 = arith.constant 0 : i32
    return %arg0, %c0_i32, %c0_i32_0, %c0_i32_1 : i32, i32, i32, i32
  }
  func.func @transform_1(%arg0: i32) -> (i32, i32) {
    %c0_i32 = arith.constant 0 : i32
    %c0_i32_0 = arith.constant 0 : i32
    %c0_i32_1 = arith.constant 0 : i32
    return %c0_i32, %c0_i32_0 : i32, i32
  }
  func.func @transform_2(%arg0: i32) -> (i32, i32) {
    %c0_i32 = arith.constant 0 : i32
    %c0_i32_0 = arith.constant 0 : i32
    %c0_i32_1 = arith.constant 0 : i32
    return %c0_i32, %c0_i32_0 : i32, i32
  }
  func.func @transform_3(%arg0: i32) -> (i32, i32) {
    %c0_i32 = arith.constant 0 : i32
    %c0_i32_0 = arith.constant 0 : i32
    %c0_i32_1 = arith.constant 0 : i32
    return %c0_i32, %c0_i32_0 : i32, i32
  }
  func.func @transform_4(%arg0: i32) -> (i32, i32, i32) {
    %c0_i32 = arith.constant 0 : i32
    %c0_i32_0 = arith.constant 0 : i32
    %c0_i32_1 = arith.constant 0 : i32
    return %arg0, %c0_i32, %c0_i32_0 : i32, i32, i32
  }
  func.func @transform_5(%arg0: i32) -> (i32, i32, i32) {
    %c0_i32 = arith.constant 0 : i32
    %c0_i32_0 = arith.constant 0 : i32
    %c0_i32_1 = arith.constant 0 : i32
    return %arg0, %c0_i32, %c0_i32_0 : i32, i32, i32
  }
}

</mosaic_0001>

<llo_original>
// kernel: upsample_block_forward.5
$region0: #{upsample_block_forward.5}
  #allocation0 [shape = 'u32[]', space=smem, size = 0x4, offset = 0x4, fixed_abs, tag = 'smem constant byte address 0x4 - core index']
  #allocation1 [shape = 'u32[72,128]{1,0:T(1,128)}', space=vmem, size = 0x9000, scoped, tag = 'internal scratch']
  %s0 = inlined_call_operand.vmem [shape: bf16[2,256,4], index: 0, kind: input, shape index: {}]
  %s1 = inlined_call_operand.vmem [shape: f32[1,4], index: 1, kind: input, shape index: {}]
  %s2 = inlined_call_operand.vmem [shape: f32[1,4], index: 2, kind: input, shape index: {}]
  %s3 = inlined_call_operand.vmem [shape: f32[2,256,4], index: 3, kind: output, shape index: {}]
  %s4 = sld [smem:[#allocation0]]
  $region45: #{upsample_block_forward.5} parent=0
    _
  %s6 = ssub.s32 1, %s4
  %s7 = scalar_select 0, %s6, %s4
  loop: start=0, step=1, limit=4
  $region2: #{upsample_block_forward.5} parent=0 // loop_pre_header
    _
  $region3: #{upsample_block_forward.5} parent=0 // loop_header
    %s9 = sphi 0, %s13
    %p10 = scmp.ge.s32.totalorder %s9, 4
    %s19 = sphi 0, %s21
    %s22 = sphi 0, %s19
    %s23 = sphi 0, %s22
    %s39 = sphi 0, %s23
    %s43 = sphi 0, %s43
    %s45 = sphi 0, %s43
    %s46 = sphi 0, %s45
    %s60 = sphi 0, %s46
    %s64 = sphi 0, %s64
    %s66 = sphi 0, %s64
    %s67 = sphi 0, %s66
    %s81 = sphi 0, %s67
    %s87 = sphi 0, %s89
    %s90 = sphi 0, %s87
    %s91 = sphi 0, %s90
    %s107 = sphi 0, %s91
  $region4: #{upsample_block_forward.5} parent=0 // loop_header_branch
    %12 = sbr.rel (%p10) target = $region8
  $region5: #{upsample_block_forward.5} parent=0 // loop_body
    %s14 = ssub.s32 %s9, 1
    %s15 = ssub.s32 %s9, 2
    %s16 = sadd.s32 %s9, 1
    %s17 = ssub.s32 %s9, %s16
    %p18 = scmp.eq.s32.totalorder %s17, 0
    %s20 = sadd.s32 %s19, 1
    %s21 = scalar_select %p18, %s19, %s20
    %p24 = pneg %p18
    %p25 = scmp.eq.s32.totalorder %s9, 1
    %p26 = por %p24, %p25
    %p27 = scmp.ne.s32.totalorder %s19, %s22
    %p28 = scmp.eq.s32.totalorder %s9, 0
    %p29 = por %p27, %p28
    %p30 = scmp.ne.s32.totalorder %s19, %s22
    %p31 = scmp.eq.s32.totalorder %s14, 1
    %p32 = por %p30, %p31
    %p33 = scmp.ne.s32.totalorder %s22, %s23
    %p34 = scmp.eq.s32.totalorder %s14, 0
    %p35 = por %p33, %p34
    %p36 = scmp.ne.s32.totalorder %s22, %s23
    %p37 = scmp.eq.s32.totalorder %s15, 1
    %p38 = por %p36, %p37
    %p40 = scmp.ne.s32.totalorder %s23, %s39
    %p41 = scmp.eq.s32.totalorder %s15, 0
    %p42 = por %p40, %p41
    %s44 = sadd.s32 %s43, 1
    %p47 = scmp.eq.s32.totalorder %s9, 1
    %p48 = scmp.ne.s32.totalorder %s43, %s45
    %p49 = scmp.eq.s32.totalorder %s9, 0
    %p50 = por %p48, %p49
    %p51 = scmp.ne.s32.totalorder %s43, %s45
    %p52 = scmp.eq.s32.totalorder %s14, 1
    %p53 = por %p51, %p52
    %p54 = scmp.ne.s32.totalorder %s45, %s46
    %p55 = scmp.eq.s32.totalorder %s14, 0
    %p56 = por %p54, %p55
    %p57 = scmp.ne.s32.totalorder %s45, %s46
    %p58 = scmp.eq.s32.totalorder %s15, 1
    %p59 = por %p57, %p58
    %p61 = scmp.ne.s32.totalorder %s46, %s60
    %p62 = scmp.eq.s32.totalorder %s15, 0
    %p63 = por %p61, %p62
    %s65 = sadd.s32 %s64, 1
    %p68 = scmp.eq.s32.totalorder %s9, 1
    %p69 = scmp.ne.s32.totalorder %s64, %s66
    %p70 = scmp.eq.s32.totalorder %s9, 0
    %p71 = por %p69, %p70
    %p72 = scmp.ne.s32.totalorder %s64, %s66
    %p73 = scmp.eq.s32.totalorder %s14, 1
    %p74 = por %p72, %p73
    %p75 = scmp.ne.s32.totalorder %s66, %s67
    %p76 = scmp.eq.s32.totalorder %s14, 0
    %p77 = por %p75, %p76
    %p78 = scmp.ne.s32.totalorder %s66, %s67
    %p79 = scmp.eq.s32.totalorder %s15, 1
    %p80 = por %p78, %p79
    %p82 = scmp.ne.s32.totalorder %s67, %s81
    %p83 = scmp.eq.s32.totalorder %s15, 0
    %p84 = por %p82, %p83
    %s85 = ssub.s32 %s9, %s16
    %p86 = scmp.eq.s32.totalorder %s85, 0
    %s88 = sadd.s32 %s87, 1
    %s89 = scalar_select %p86, %s87, %s88
    %p92 = pneg %p86
    %p93 = scmp.eq.s32.totalorder %s9, 1
    %p94 = por %p92, %p93
    %p95 = scmp.ne.s32.totalorder %s87, %s90
    %p96 = scmp.eq.s32.totalorder %s9, 0
    %p97 = por %p95, %p96
    %p98 = scmp.ne.s32.totalorder %s87, %s90
    %p99 = scmp.eq.s32.totalorder %s14, 1
    %p100 = por %p98, %p99
    %p101 = scmp.ne.s32.totalorder %s90, %s91
    %p102 = scmp.eq.s32.totalorder %s14, 0
    %p103 = por %p101, %p102
    %p104 = scmp.ne.s32.totalorder %s90, %s91
    %p105 = scmp.eq.s32.totalorder %s15, 1
    %p106 = por %p104, %p105
    %p108 = scmp.ne.s32.totalorder %s91, %s107
    %p109 = scmp.eq.s32.totalorder %s15, 0
    %p110 = por %p108, %p109
    %p111 = scmp.le.s32.totalorder 1, %s9
    %p112 = scmp.lt.s32.totalorder %s9, 3
    %p113 = pnand %p111, %p112
    %p114 = pneg %p113
    // Predicated region
    $region9: #{upsample_block_forward.5} parent=5 // pred_check
      _
    $region10: #{upsample_block_forward.5} parent=5 // pred_check_branch
      %116 = sbr.rel (%p113) target = $region12
    $region11: #{upsample_block_forward.5} parent=5 // pred_region
      %s117 = ssub.s32 %s9, 1
      // Predicated region
      $region13: #{upsample_block_forward.5} parent=11 // pred_check
        %p118 = pneg %p56
      $region14: #{upsample_block_forward.5} parent=11 // pred_check_branch
        %120 = sbr.rel (%p118) target = $region16
      $region15: #{upsample_block_forward.5} parent=11 // pred_region
        _
      $region16: #{upsample_block_forward.5} parent=11 // pred_fallthru
        _
      // Predicated region
      $region17: #{upsample_block_forward.5} parent=11 // pred_check
        %p121 = pneg %p77
      $region18: #{upsample_block_forward.5} parent=11 // pred_check_branch
        %123 = sbr.rel (%p121) target = $region20
      $region19: #{upsample_block_forward.5} parent=11 // pred_region
        _
      $region20: #{upsample_block_forward.5} parent=11 // pred_fallthru
        _
    $region12: #{upsample_block_forward.5} parent=5 // pred_fallthru
      _
    %p124 = scmp.lt.s32.totalorder %s9, 2
    // Predicated region
    $region21: #{upsample_block_forward.5} parent=5 // pred_check
      %p125 = pneg %p124
    $region22: #{upsample_block_forward.5} parent=5 // pred_check_branch
      %127 = sbr.rel (%p125) target = $region24
    $region23: #{upsample_block_forward.5} parent=5 // pred_region
      // Predicated region
      $region25: #{upsample_block_forward.5} parent=23 // pred_check
        %p128 = pneg %p29
      $region26: #{upsample_block_forward.5} parent=23 // pred_check_branch
        %130 = sbr.rel (%p128) target = $region28
      $region27: #{upsample_block_forward.5} parent=23 // pred_region
        %p131 = scmp.lt.s32.totalorder %s9, 1
        %s132 = scalar_select %p131, %s9, 1
        %s133 = smul.addr %s132, 32
        %s134 = smul.addr %s133, 4
        %s135 = scalar_lea.vmem %s0, %s134
      $region28: #{upsample_block_forward.5} parent=23 // pred_fallthru
        _
    $region24: #{upsample_block_forward.5} parent=5 // pred_fallthru
      _
    %p136 = scmp.le.s32.totalorder 1, %s9
    %p137 = scmp.lt.s32.totalorder %s9, 3
    %p138 = pnand %p136, %p137
    %p139 = pneg %p138
    // Predicated region
    $region29: #{upsample_block_forward.5} parent=5 // pred_check
      _
    $region30: #{upsample_block_forward.5} parent=5 // pred_check_branch
      %141 = sbr.rel (%p138) target = $region32
    $region31: #{upsample_block_forward.5} parent=5 // pred_region
      %s142 = ssub.s32 %s9, 1
      %p143 = scmp.lt.s32.totalorder %s14, 1
      %s144 = scalar_select %p143, %s14, 1
      %s145 = smul.addr %s144, 32
      %s146 = smul.addr %s145, 4
      %s147 = scalar_lea.vmem %s0, %s146
      %p148 = pneg %p35
      %p149 = pneg %p32
      %p150 = pneg %p56
      %p151 = pneg %p53
      %p152 = pneg %p77
      %p153 = pneg %p74
      %p154 = pneg %p103
      %p155 = pneg %p100
      %p156 = scmp.lt.s32.totalorder %s14, 1
      %s157 = scalar_select %p156, %s14, 1
      %s158 = smul.addr %s157, 32
      %s159 = smul.addr %s158, 8
      %s160 = scalar_lea.vmem %s3, %s159
      %p161 = scmp.lt.s32.totalorder %s14, 1
      %s162 = scalar_select %p161, %s14, 1
      %s163 = smul.addr %s162, 32
      %s164 = smul.addr %s163, 4
      %s165 = scalar_lea.vmem %s0, %s164
      %p166 = scmp.lt.s32.totalorder %s14, 1
      %s167 = scalar_select %p166, %s14, 1
      %s168 = smul.addr %s167, 32
      %s169 = smul.addr %s168, 8
      %s170 = scalar_lea.vmem %s3, %s169
      %v171 = vld [vmem:[%s165] sm:$0xf]
      %v172 = vld [vmem:[%s165 + $0x4] sm:$0xf]
      %v173 = vld [vmem:[%s165 + $0x8] sm:$0xf]
      %v174 = vld [vmem:[%s165 + $0xc] sm:$0xf]
      %v175 = vld [vmem:[%s165 + $0x10] sm:$0xf]
      %v176 = vld [vmem:[%s165 + $0x14] sm:$0xf]
      %v177 = vld [vmem:[%s165 + $0x18] sm:$0xf]
      %v178 = vld [vmem:[%s165 + $0x1c] sm:$0xf]
      %v179 = vld [vmem:[%s165 + $0x20] sm:$0xf]
      %v180 = vld [vmem:[%s165 + $0x24] sm:$0xf]
      %v181 = vld [vmem:[%s165 + $0x28] sm:$0xf]
      %v182 = vld [vmem:[%s165 + $0x2c] sm:$0xf]
      %v183 = vld [vmem:[%s165 + $0x30] sm:$0xf]
      %v184 = vld [vmem:[%s165 + $0x34] sm:$0xf]
      %v185 = vld [vmem:[%s165 + $0x38] sm:$0xf]
      %v186 = vld [vmem:[%s165 + $0x3c] sm:$0xf]
      %v187 = vld [vmem:[%s165 + $0x40] sm:$0xf]
      %v188 = vld [vmem:[%s165 + $0x44] sm:$0xf]
      %v189 = vld [vmem:[%s165 + $0x48] sm:$0xf]
      %v190 = vld [vmem:[%s165 + $0x4c] sm:$0xf]
      %v191 = vld [vmem:[%s165 + $0x50] sm:$0xf]
      %v192 = vld [vmem:[%s165 + $0x54] sm:$0xf]
      %v193 = vld [vmem:[%s165 + $0x58] sm:$0xf]
      %v194 = vld [vmem:[%s165 + $0x5c] sm:$0xf]
      %v195 = vld [vmem:[%s165 + $0x60] sm:$0xf]
      %v196 = vld [vmem:[%s165 + $0x64] sm:$0xf]
      %v197 = vld [vmem:[%s165 + $0x68] sm:$0xf]
      %v198 = vld [vmem:[%s165 + $0x6c] sm:$0xf]
      %v199 = vld [vmem:[%s165 + $0x70] sm:$0xf]
      %v200 = vld [vmem:[%s165 + $0x74] sm:$0xf]
      %v201 = vld [vmem:[%s165 + $0x78] sm:$0xf]
      %v202 = vld [vmem:[%s165 + $0x7c] sm:$0xf]
      %v203 = vunpack.c.l.bf16 %v171
      %v204 = vunpack.c.l.bf16 %v172
      %v205 = vunpack.c.l.bf16 %v173
      %v206 = vunpack.c.l.bf16 %v174
      %v207 = vunpack.c.l.bf16 %v175
      %v208 = vunpack.c.l.bf16 %v176
      %v209 = vunpack.c.l.bf16 %v177
      %v210 = vunpack.c.l.bf16 %v178
      %v211 = vunpack.c.l.bf16 %v179
      %v212 = vunpack.c.l.bf16 %v180
      %v213 = vunpack.c.l.bf16 %v181
      %v214 = vunpack.c.l.bf16 %v182
      %v215 = vunpack.c.l.bf16 %v183
      %v216 = vunpack.c.l.bf16 %v184
      %v217 = vunpack.c.l.bf16 %v185
      %v218 = vunpack.c.l.bf16 %v186
      %v219 = vunpack.c.l.bf16 %v187
      %v220 = vunpack.c.l.bf16 %v188
      %v221 = vunpack.c.l.bf16 %v189
      %v222 = vunpack.c.l.bf16 %v190
      %v223 = vunpack.c.l.bf16 %v191
      %v224 = vunpack.c.l.bf16 %v192
      %v225 = vunpack.c.l.bf16 %v193
      %v226 = vunpack.c.l.bf16 %v194
      %v227 = vunpack.c.l.bf16 %v195
      %v228 = vunpack.c.l.bf16 %v196
      %v229 = vunpack.c.l.bf16 %v197
      %v230 = vunpack.c.l.bf16 %v198
      %v231 = vunpack.c.l.bf16 %v199
      %v232 = vunpack.c.l.bf16 %v200
      %v233 = vunpack.c.l.bf16 %v201
      %v234 = vunpack.c.l.bf16 %v202
      %v235 = vld [vmem:[%s1] sm:$0x1]
      %v237 = vperm.slane %v235, 0
      %v239 = vmul.f32 %v203, %v237
      %v240 = vmul.f32 %v204, %v237
      %v241 = vmul.f32 %v205, %v237
      %v242 = vmul.f32 %v206, %v237
      %v243 = vmul.f32 %v207, %v237
      %v244 = vmul.f32 %v208, %v237
      %v245 = vmul.f32 %v209, %v237
      %v246 = vmul.f32 %v210, %v237
      %v247 = vmul.f32 %v211, %v237
      %v248 = vmul.f32 %v212, %v237
      %v249 = vmul.f32 %v213, %v237
      %v250 = vmul.f32 %v214, %v237
      %v251 = vmul.f32 %v215, %v237
      %v252 = vmul.f32 %v216, %v237
      %v253 = vmul.f32 %v217, %v237
      %v254 = vmul.f32 %v218, %v237
      %v255 = vmul.f32 %v219, %v237
      %v256 = vmul.f32 %v220, %v237
      %v257 = vmul.f32 %v221, %v237
      %v258 = vmul.f32 %v222, %v237
      %v259 = vmul.f32 %v223, %v237
      %v260 = vmul.f32 %v224, %v237
      %v261 = vmul.f32 %v225, %v237
      %v262 = vmul.f32 %v226, %v237
      %v263 = vmul.f32 %v227, %v237
      %v264 = vmul.f32 %v228, %v237
      %v265 = vmul.f32 %v229, %v237
      %v266 = vmul.f32 %v230, %v237
      %v267 = vmul.f32 %v231, %v237
      %v268 = vmul.f32 %v232, %v237
      %v269 = vmul.f32 %v233, %v237
      %v270 = vmul.f32 %v234, %v237
      %v271 = vld [vmem:[%s2] sm:$0x1]
      %v273 = vperm.slane %v271, 0
      %v275 = vadd.f32 %v239, %v273
      %v276 = vadd.f32 %v240, %v273
      %v277 = vadd.f32 %v241, %v273
      %v278 = vadd.f32 %v242, %v273
      %v279 = vadd.f32 %v243, %v273
      %v280 = vadd.f32 %v244, %v273
      %v281 = vadd.f32 %v245, %v273
      %v282 = vadd.f32 %v246, %v273
      %v283 = vadd.f32 %v247, %v273
      %v284 = vadd.f32 %v248, %v273
      %v285 = vadd.f32 %v249, %v273
      %v286 = vadd.f32 %v250, %v273
      %v287 = vadd.f32 %v251, %v273
      %v288 = vadd.f32 %v252, %v273
      %v289 = vadd.f32 %v253, %v273
      %v290 = vadd.f32 %v254, %v273
      %v291 = vadd.f32 %v255, %v273
      %v292 = vadd.f32 %v256, %v273
      %v293 = vadd.f32 %v257, %v273
      %v294 = vadd.f32 %v258, %v273
      %v295 = vadd.f32 %v259, %v273
      %v296 = vadd.f32 %v260, %v273
      %v297 = vadd.f32 %v261, %v273
      %v298 = vadd.f32 %v262, %v273
      %v299 = vadd.f32 %v263, %v273
      %v300 = vadd.f32 %v264, %v273
      %v301 = vadd.f32 %v265, %v273
      %v302 = vadd.f32 %v266, %v273
      %v303 = vadd.f32 %v267, %v273
      %v304 = vadd.f32 %v268, %v273
      %v305 = vadd.f32 %v269, %v273
      %v306 = vadd.f32 %v270, %v273
      %v307 = vmax.f32 %v275, 0.0
      %v308 = vmax.f32 %v276, 0.0
      %v309 = vmax.f32 %v277, 0.0
      %v310 = vmax.f32 %v278, 0.0
      %v311 = vmax.f32 %v279, 0.0
      %v312 = vmax.f32 %v280, 0.0
      %v313 = vmax.f32 %v281, 0.0
      %v314 = vmax.f32 %v282, 0.0
      %v315 = vmax.f32 %v283, 0.0
      %v316 = vmax.f32 %v284, 0.0
      %v317 = vmax.f32 %v285, 0.0
      %v318 = vmax.f32 %v286, 0.0
      %v319 = vmax.f32 %v287, 0.0
      %v320 = vmax.f32 %v288, 0.0
      %v321 = vmax.f32 %v289, 0.0
      %v322 = vmax.f32 %v290, 0.0
      %v323 = vmax.f32 %v291, 0.0
      %v324 = vmax.f32 %v292, 0.0
      %v325 = vmax.f32 %v293, 0.0
      %v326 = vmax.f32 %v294, 0.0
      %v327 = vmax.f32 %v295, 0.0
      %v328 = vmax.f32 %v296, 0.0
      %v329 = vmax.f32 %v297, 0.0
      %v330 = vmax.f32 %v298, 0.0
      %v331 = vmax.f32 %v299, 0.0
      %v332 = vmax.f32 %v300, 0.0
      %v333 = vmax.f32 %v301, 0.0
      %v334 = vmax.f32 %v302, 0.0
      %v335 = vmax.f32 %v303, 0.0
      %v336 = vmax.f32 %v304, 0.0
      %v337 = vmax.f32 %v305, 0.0
      %v338 = vmax.f32 %v306, 0.0
      %vm339 = vcmask 31744
      %340 = vst.msk [vmem:[%s170] sm:$0xff] %vm339, %v307
      %341 = vst.msk [vmem:[%s170 + $0x8] sm:$0xff] %vm339, %v308
      %342 = vst.msk [vmem:[%s170 + $0x10] sm:$0xff] %vm339, %v309
      %343 = vst.msk [vmem:[%s170 + $0x18] sm:$0xff] %vm339, %v310
      %344 = vst.msk [vmem:[%s170 + $0x20] sm:$0xff] %vm339, %v311
      %345 = vst.msk [vmem:[%s170 + $0x28] sm:$0xff] %vm339, %v312
      %346 = vst.msk [vmem:[%s170 + $0x30] sm:$0xff] %vm339, %v313
      %347 = vst.msk [vmem:[%s170 + $0x38] sm:$0xff] %vm339, %v314
      %348 = vst.msk [vmem:[%s170 + $0x40] sm:$0xff] %vm339, %v315
      %349 = vst.msk [vmem:[%s170 + $0x48] sm:$0xff] %vm339, %v316
      %350 = vst.msk [vmem:[%s170 + $0x50] sm:$0xff] %vm339, %v317
      %351 = vst.msk [vmem:[%s170 + $0x58] sm:$0xff] %vm339, %v318
      %352 = vst.msk [vmem:[%s170 + $0x60] sm:$0xff] %vm339, %v319
      %353 = vst.msk [vmem:[%s170 + $0x68] sm:$0xff] %vm339, %v320
      %354 = vst.msk [vmem:[%s170 + $0x70] sm:$0xff] %vm339, %v321
      %355 = vst.msk [vmem:[%s170 + $0x78] sm:$0xff] %vm339, %v322
      %356 = vst.msk [vmem:[%s170 + $0x80] sm:$0xff] %vm339, %v323
      %357 = vst.msk [vmem:[%s170 + $0x88] sm:$0xff] %vm339, %v324
      %358 = vst.msk [vmem:[%s170 + $0x90] sm:$0xff] %vm339, %v325
      %359 = vst.msk [vmem:[%s170 + $0x98] sm:$0xff] %vm339, %v326
      %360 = vst.msk [vmem:[%s170 + $0xa0] sm:$0xff] %vm339, %v327
      %361 = vst.msk [vmem:[%s170 + $0xa8] sm:$0xff] %vm339, %v328
      %362 = vst.msk [vmem:[%s170 + $0xb0] sm:$0xff] %vm339, %v329
      %363 = vst.msk [vmem:[%s170 + $0xb8] sm:$0xff] %vm339, %v330
      %364 = vst.msk [vmem:[%s170 + $0xc0] sm:$0xff] %vm339, %v331
      %365 = vst.msk [vmem:[%s170 + $0xc8] sm:$0xff] %vm339, %v332
      %366 = vst.msk [vmem:[%s170 + $0xd0] sm:$0xff] %vm339, %v333
      %367 = vst.msk [vmem:[%s170 + $0xd8] sm:$0xff] %vm339, %v334
      %368 = vst.msk [vmem:[%s170 + $0xe0] sm:$0xff] %vm339, %v335
      %369 = vst.msk [vmem:[%s170 + $0xe8] sm:$0xff] %vm339, %v336
      %370 = vst.msk [vmem:[%s170 + $0xf0] sm:$0xff] %vm339, %v337
      %371 = vst.msk [vmem:[%s170 + $0xf8] sm:$0xff] %vm339, %v338
      %p372 = scmp.lt.s32.totalorder %s14, 1
      %s373 = scalar_select %p372, %s14, 1
      %s374 = smul.addr %s373, 32
      %s375 = smul.addr %s374, 8
      %s376 = scalar_lea.vmem %s3, %s375
      // Predicated region
      $region33: #{upsample_block_forward.5} parent=31 // pred_check
        %p377 = pneg %p100
      $region34: #{upsample_block_forward.5} parent=31 // pred_check_branch
        %379 = sbr.rel (%p377) target = $region36
      $region35: #{upsample_block_forward.5} parent=31 // pred_region
        _
      $region36: #{upsample_block_forward.5} parent=31 // pred_fallthru
        _
    $region32: #{upsample_block_forward.5} parent=5 // pred_fallthru
      _
    %p380 = scmp.le.s32.totalorder 2, %s9
    // Predicated region
    $region37: #{upsample_block_forward.5} parent=5 // pred_check
      %p381 = pneg %p380
    $region38: #{upsample_block_forward.5} parent=5 // pred_check_branch
      %383 = sbr.rel (%p381) target = $region40
    $region39: #{upsample_block_forward.5} parent=5 // pred_region
      %s384 = ssub.s32 %s9, 2
      // Predicated region
      $region41: #{upsample_block_forward.5} parent=39 // pred_check
        %p385 = pneg %p106
      $region42: #{upsample_block_forward.5} parent=39 // pred_check_branch
        %387 = sbr.rel (%p385) target = $region44
      $region43: #{upsample_block_forward.5} parent=39 // pred_region
        %p388 = scmp.lt.s32.totalorder %s15, 1
        %s389 = scalar_select %p388, %s15, 1
        %s390 = smul.addr %s389, 32
        %s391 = smul.addr %s390, 8
        %s392 = scalar_lea.vmem %s3, %s391
      $region44: #{upsample_block_forward.5} parent=39 // pred_fallthru
        _
    $region40: #{upsample_block_forward.5} parent=5 // pred_fallthru
      _
  $region6: #{upsample_block_forward.5} parent=0 // loop_footer
    %s13 = sadd.s32 1, %s9
  $region7: #{upsample_block_forward.5} parent=0 // loop_footer_branch
    %8 = sbr.rel target = $region3
  $region8: #{upsample_block_forward.5} parent=0 // loop_exit
    _

// kernel: upsample_block_forward.4
$region0: #{upsample_block_forward.4}
  #allocation0 [shape = 'u32[]', space=smem, size = 0x4, offset = 0x4, fixed_abs, tag = 'smem constant byte address 0x4 - core index']
  #allocation1 [shape = 'u32[72,128]{1,0:T(1,128)}', space=vmem, size = 0x9000, scoped, tag = 'internal scratch']
  %s0 = inlined_call_operand.vmem [shape: bf16[2,16,16,4], index: 0, kind: input, shape index: {}]
  %s1 = inlined_call_operand.vmem [shape: f32[1,4], index: 1, kind: input, shape index: {}]
  %s2 = inlined_call_operand.vmem [shape: f32[1,4], index: 2, kind: input, shape index: {}]
  %s3 = inlined_call_operand.vmem [shape: bf16[36,4], index: 3, kind: input, shape index: {}]
  %s4 = inlined_call_operand.vmem [shape: bf16[2,256,4], index: 4, kind: output, shape index: {0}]
  %s5 = inlined_call_operand.vmem [shape: f32[2,2,4], index: 5, kind: output, shape index: {1}]
  %6 = xla_tuple %s4, %s5
  %s7 = sld [smem:[#allocation0]]
  $region57: #{upsample_block_forward.4} parent=0
    _
  %s9 = ssub.s32 1, %s7
  %s10 = scalar_select 0, %s9, %s7
  loop: start=0, step=1, limit=4
  $region2: #{upsample_block_forward.4} parent=0 // loop_pre_header
    _
  $region3: #{upsample_block_forward.4} parent=0 // loop_header
    %s12 = sphi 0, %s16
    %p13 = scmp.ge.s32.totalorder %s12, 4
    %s22 = sphi 0, %s24
    %s25 = sphi 0, %s22
    %s26 = sphi 0, %s25
    %s42 = sphi 0, %s26
    %s46 = sphi 0, %s46
    %s48 = sphi 0, %s46
    %s49 = sphi 0, %s48
    %s63 = sphi 0, %s49
    %s67 = sphi 0, %s67
    %s69 = sphi 0, %s67
    %s70 = sphi 0, %s69
    %s84 = sphi 0, %s70
    %s88 = sphi 0, %s88
    %s90 = sphi 0, %s88
    %s91 = sphi 0, %s90
    %s105 = sphi 0, %s91
    %s111 = sphi 0, %s113
    %s114 = sphi 0, %s111
    %s115 = sphi 0, %s114
    %s131 = sphi 0, %s115
    %s137 = sphi 0, %s139
    %s140 = sphi 0, %s137
    %s141 = sphi 0, %s140
    %s157 = sphi 0, %s141
  $region4: #{upsample_block_forward.4} parent=0 // loop_header_branch
    %15 = sbr.rel (%p13) target = $region8
  $region5: #{upsample_block_forward.4} parent=0 // loop_body
    %s17 = ssub.s32 %s12, 1
    %s18 = ssub.s32 %s12, 2
    %s19 = sadd.s32 %s12, 1
    %s20 = ssub.s32 %s12, %s19
    %p21 = scmp.eq.s32.totalorder %s20, 0
    %s23 = sadd.s32 %s22, 1
    %s24 = scalar_select %p21, %s22, %s23
    %p27 = pneg %p21
    %p28 = scmp.eq.s32.totalorder %s12, 1
    %p29 = por %p27, %p28
    %p30 = scmp.ne.s32.totalorder %s22, %s25
    %p31 = scmp.eq.s32.totalorder %s12, 0
    %p32 = por %p30, %p31
    %p33 = scmp.ne.s32.totalorder %s22, %s25
    %p34 = scmp.eq.s32.totalorder %s17, 1
    %p35 = por %p33, %p34
    %p36 = scmp.ne.s32.totalorder %s25, %s26
    %p37 = scmp.eq.s32.totalorder %s17, 0
    %p38 = por %p36, %p37
    %p39 = scmp.ne.s32.totalorder %s25, %s26
    %p40 = scmp.eq.s32.totalorder %s18, 1
    %p41 = por %p39, %p40
    %p43 = scmp.ne.s32.totalorder %s26, %s42
    %p44 = scmp.eq.s32.totalorder %s18, 0
    %p45 = por %p43, %p44
    %s47 = sadd.s32 %s46, 1
    %p50 = scmp.eq.s32.totalorder %s12, 1
    %p51 = scmp.ne.s32.totalorder %s46, %s48
    %p52 = scmp.eq.s32.totalorder %s12, 0
    %p53 = por %p51, %p52
    %p54 = scmp.ne.s32.totalorder %s46, %s48
    %p55 = scmp.eq.s32.totalorder %s17, 1
    %p56 = por %p54, %p55
    %p57 = scmp.ne.s32.totalorder %s48, %s49
    %p58 = scmp.eq.s32.totalorder %s17, 0
    %p59 = por %p57, %p58
    %p60 = scmp.ne.s32.totalorder %s48, %s49
    %p61 = scmp.eq.s32.totalorder %s18, 1
    %p62 = por %p60, %p61
    %p64 = scmp.ne.s32.totalorder %s49, %s63
    %p65 = scmp.eq.s32.totalorder %s18, 0
    %p66 = por %p64, %p65
    %s68 = sadd.s32 %s67, 1
    %p71 = scmp.eq.s32.totalorder %s12, 1
    %p72 = scmp.ne.s32.totalorder %s67, %s69
    %p73 = scmp.eq.s32.totalorder %s12, 0
    %p74 = por %p72, %p73
    %p75 = scmp.ne.s32.totalorder %s67, %s69
    %p76 = scmp.eq.s32.totalorder %s17, 1
    %p77 = por %p75, %p76
    %p78 = scmp.ne.s32.totalorder %s69, %s70
    %p79 = scmp.eq.s32.totalorder %s17, 0
    %p80 = por %p78, %p79
    %p81 = scmp.ne.s32.totalorder %s69, %s70
    %p82 = scmp.eq.s32.totalorder %s18, 1
    %p83 = por %p81, %p82
    %p85 = scmp.ne.s32.totalorder %s70, %s84
    %p86 = scmp.eq.s32.totalorder %s18, 0
    %p87 = por %p85, %p86
    %s89 = sadd.s32 %s88, 1
    %p92 = scmp.eq.s32.totalorder %s12, 1
    %p93 = scmp.ne.s32.totalorder %s88, %s90
    %p94 = scmp.eq.s32.totalorder %s12, 0
    %p95 = por %p93, %p94
    %p96 = scmp.ne.s32.totalorder %s88, %s90
    %p97 = scmp.eq.s32.totalorder %s17, 1
    %p98 = por %p96, %p97
    %p99 = scmp.ne.s32.totalorder %s90, %s91
    %p100 = scmp.eq.s32.totalorder %s17, 0
    %p101 = por %p99, %p100
    %p102 = scmp.ne.s32.totalorder %s90, %s91
    %p103 = scmp.eq.s32.totalorder %s18, 1
    %p104 = por %p102, %p103
    %p106 = scmp.ne.s32.totalorder %s91, %s105
    %p107 = scmp.eq.s32.totalorder %s18, 0
    %p108 = por %p106, %p107
    %s109 = ssub.s32 %s12, %s19
    %p110 = scmp.eq.s32.totalorder %s109, 0
    %s112 = sadd.s32 %s111, 1
    %s113 = scalar_select %p110, %s111, %s112
    %p116 = pneg %p110
    %p117 = scmp.eq.s32.totalorder %s12, 1
    %p118 = por %p116, %p117
    %p119 = scmp.ne.s32.totalorder %s111, %s114
    %p120 = scmp.eq.s32.totalorder %s12, 0
    %p121 = por %p119, %p120
    %p122 = scmp.ne.s32.totalorder %s111, %s114
    %p123 = scmp.eq.s32.totalorder %s17, 1
    %p124 = por %p122, %p123
    %p125 = scmp.ne.s32.totalorder %s114, %s115
    %p126 = scmp.eq.s32.totalorder %s17, 0
    %p127 = por %p125, %p126
    %p128 = scmp.ne.s32.totalorder %s114, %s115
    %p129 = scmp.eq.s32.totalorder %s18, 1
    %p130 = por %p128, %p129
    %p132 = scmp.ne.s32.totalorder %s115, %s131
    %p133 = scmp.eq.s32.totalorder %s18, 0
    %p134 = por %p132, %p133
    %s135 = ssub.s32 %s12, %s19
    %p136 = scmp.eq.s32.totalorder %s135, 0
    %s138 = sadd.s32 %s137, 1
    %s139 = scalar_select %p136, %s137, %s138
    %p142 = pneg %p136
    %p143 = scmp.eq.s32.totalorder %s12, 1
    %p144 = por %p142, %p143
    %p145 = scmp.ne.s32.totalorder %s137, %s140
    %p146 = scmp.eq.s32.totalorder %s12, 0
    %p147 = por %p145, %p146
    %p148 = scmp.ne.s32.totalorder %s137, %s140
    %p149 = scmp.eq.s32.totalorder %s17, 1
    %p150 = por %p148, %p149
    %p151 = scmp.ne.s32.totalorder %s140, %s141
    %p152 = scmp.eq.s32.totalorder %s17, 0
    %p153 = por %p151, %p152
    %p154 = scmp.ne.s32.totalorder %s140, %s141
    %p155 = scmp.eq.s32.totalorder %s18, 1
    %p156 = por %p154, %p155
    %p158 = scmp.ne.s32.totalorder %s141, %s157
    %p159 = scmp.eq.s32.totalorder %s18, 0
    %p160 = por %p158, %p159
    %p161 = scmp.le.s32.totalorder 1, %s12
    %p162 = scmp.lt.s32.totalorder %s12, 3
    %p163 = pnand %p161, %p162
    %p164 = pneg %p163
    // Predicated region
    $region9: #{upsample_block_forward.4} parent=5 // pred_check
      _
    $region10: #{upsample_block_forward.4} parent=5 // pred_check_branch
      %166 = sbr.rel (%p163) target = $region12
    $region11: #{upsample_block_forward.4} parent=5 // pred_region
      %s167 = ssub.s32 %s12, 1
      // Predicated region
      $region13: #{upsample_block_forward.4} parent=11 // pred_check
        %p168 = pneg %p59
      $region14: #{upsample_block_forward.4} parent=11 // pred_check_branch
        %170 = sbr.rel (%p168) target = $region16
      $region15: #{upsample_block_forward.4} parent=11 // pred_region
        _
      $region16: #{upsample_block_forward.4} parent=11 // pred_fallthru
        _
      // Predicated region
      $region17: #{upsample_block_forward.4} parent=11 // pred_check
        %p171 = pneg %p80
      $region18: #{upsample_block_forward.4} parent=11 // pred_check_branch
        %173 = sbr.rel (%p171) target = $region20
      $region19: #{upsample_block_forward.4} parent=11 // pred_region
        _
      $region20: #{upsample_block_forward.4} parent=11 // pred_fallthru
        _
      // Predicated region
      $region21: #{upsample_block_forward.4} parent=11 // pred_check
        %p174 = pneg %p101
      $region22: #{upsample_block_forward.4} parent=11 // pred_check_branch
        %176 = sbr.rel (%p174) target = $region24
      $region23: #{upsample_block_forward.4} parent=11 // pred_region
        _
      $region24: #{upsample_block_forward.4} parent=11 // pred_fallthru
        _
    $region12: #{upsample_block_forward.4} parent=5 // pred_fallthru
      _
    %p177 = scmp.lt.s32.totalorder %s12, 2
    // Predicated region
    $region25: #{upsample_block_forward.4} parent=5 // pred_check
      %p178 = pneg %p177
    $region26: #{upsample_block_forward.4} parent=5 // pred_check_branch
      %180 = sbr.rel (%p178) target = $region28
    $region27: #{upsample_block_forward.4} parent=5 // pred_region
      // Predicated region
      $region29: #{upsample_block_forward.4} parent=27 // pred_check
        %p181 = pneg %p32
      $region30: #{upsample_block_forward.4} parent=27 // pred_check_branch
        %183 = sbr.rel (%p181) target = $region32
      $region31: #{upsample_block_forward.4} parent=27 // pred_region
        %p184 = scmp.lt.s32.totalorder %s12, 1
        %s185 = scalar_select %p184, %s12, 1
        %s186 = smul.addr %s185, 32
        %s187 = smul.addr %s186, 4
        %s188 = scalar_lea.vmem %s0, %s187
      $region32: #{upsample_block_forward.4} parent=27 // pred_fallthru
        _
    $region28: #{upsample_block_forward.4} parent=5 // pred_fallthru
      _
    %p189 = scmp.le.s32.totalorder 1, %s12
    %p190 = scmp.lt.s32.totalorder %s12, 3
    %p191 = pnand %p189, %p190
    %p192 = pneg %p191
    // Predicated region
    $region33: #{upsample_block_forward.4} parent=5 // pred_check
      _
    $region34: #{upsample_block_forward.4} parent=5 // pred_check_branch
      %194 = sbr.rel (%p191) target = $region36
    $region35: #{upsample_block_forward.4} parent=5 // pred_region
      %s195 = ssub.s32 %s12, 1
      %p196 = scmp.lt.s32.totalorder %s17, 1
      %s197 = scalar_select %p196, %s17, 1
      %s198 = smul.addr %s197, 32
      %s199 = smul.addr %s198, 4
      %s200 = scalar_lea.vmem %s0, %s199
      %p201 = pneg %p38
      %p202 = pneg %p35
      %p203 = pneg %p59
      %p204 = pneg %p56
      %p205 = pneg %p80
      %p206 = pneg %p77
      %p207 = pneg %p101
      %p208 = pneg %p98
      %p209 = pneg %p127
      %p210 = pneg %p124
      %p211 = scmp.lt.s32.totalorder %s17, 1
      %s212 = scalar_select %p211, %s17, 1
      %s213 = smul.addr %s212, 32
      %s214 = smul.addr %s213, 4
      %s215 = scalar_lea.vmem %s4, %s214
      %p216 = pneg %p153
      %p217 = pneg %p150
      %p218 = scmp.lt.s32.totalorder %s17, 1
      %s219 = scalar_select %p218, %s17, 1
      %s220 = smul.addr %s219, 2
      %s221 = scalar_lea.vmem %s5, %s220
      %p222 = scmp.lt.s32.totalorder %s17, 1
      %s223 = scalar_select %p222, %s17, 1
      %s224 = smul.addr %s223, 32
      %s225 = smul.addr %s224, 4
      %s226 = scalar_lea.vmem %s0, %s225
      %p227 = scmp.lt.s32.totalorder %s17, 1
      %s228 = scalar_select %p227, %s17, 1
      %s229 = smul.addr %s228, 32
      %s230 = smul.addr %s229, 4
      %s231 = scalar_lea.vmem %s4, %s230
      %p232 = scmp.lt.s32.totalorder %s17, 1
      %s233 = scalar_select %p232, %s17, 1
      %s234 = smul.addr %s233, 2
      %s235 = scalar_lea.vmem %s5, %s234
      %v237 = vld [vmem:[%s226] sm:$0xf]
      %v238 = vld [vmem:[%s226 + $0x4] sm:$0xf]
      %v239 = vld [vmem:[%s226 + $0x8] sm:$0xf]
      %v240 = vld [vmem:[%s226 + $0xc] sm:$0xf]
      %v241 = vld [vmem:[%s226 + $0x10] sm:$0xf]
      %v242 = vld [vmem:[%s226 + $0x14] sm:$0xf]
      %v243 = vld [vmem:[%s226 + $0x18] sm:$0xf]
      %v244 = vld [vmem:[%s226 + $0x1c] sm:$0xf]
      %v245 = vld [vmem:[%s226 + $0x20] sm:$0xf]
      %v246 = vld [vmem:[%s226 + $0x24] sm:$0xf]
      %v247 = vld [vmem:[%s226 + $0x28] sm:$0xf]
      %v248 = vld [vmem:[%s226 + $0x2c] sm:$0xf]
      %v249 = vld [vmem:[%s226 + $0x30] sm:$0xf]
      %v250 = vld [vmem:[%s226 + $0x34] sm:$0xf]
      %v251 = vld [vmem:[%s226 + $0x38] sm:$0xf]
      %v252 = vld [vmem:[%s226 + $0x3c] sm:$0xf]
      %v253 = vld [vmem:[%s226 + $0x40] sm:$0xf]
      %v254 = vld [vmem:[%s226 + $0x44] sm:$0xf]
      %v255 = vld [vmem:[%s226 + $0x48] sm:$0xf]
      %v256 = vld [vmem:[%s226 + $0x4c] sm:$0xf]
      %v257 = vld [vmem:[%s226 + $0x50] sm:$0xf]
      %v258 = vld [vmem:[%s226 + $0x54] sm:$0xf]
      %v259 = vld [vmem:[%s226 + $0x58] sm:$0xf]
      %v260 = vld [vmem:[%s226 + $0x5c] sm:$0xf]
      %v261 = vld [vmem:[%s226 + $0x60] sm:$0xf]
      %v262 = vld [vmem:[%s226 + $0x64] sm:$0xf]
      %v263 = vld [vmem:[%s226 + $0x68] sm:$0xf]
      %v264 = vld [vmem:[%s226 + $0x6c] sm:$0xf]
      %v265 = vld [vmem:[%s226 + $0x70] sm:$0xf]
      %v266 = vld [vmem:[%s226 + $0x74] sm:$0xf]
      %v267 = vld [vmem:[%s226 + $0x78] sm:$0xf]
      %v268 = vld [vmem:[%s226 + $0x7c] sm:$0xf]
      %v269 = vunpack.c.l.bf16 %v237
      %v270 = vunpack.c.l.bf16 %v238
      %v271 = vunpack.c.l.bf16 %v239
      %v272 = vunpack.c.l.bf16 %v240
      %v273 = vunpack.c.l.bf16 %v241
      %v274 = vunpack.c.l.bf16 %v242
      %v275 = vunpack.c.l.bf16 %v243
      %v276 = vunpack.c.l.bf16 %v244
      %v277 = vunpack.c.l.bf16 %v245
      %v278 = vunpack.c.l.bf16 %v246
      %v279 = vunpack.c.l.bf16 %v247
      %v280 = vunpack.c.l.bf16 %v248
      %v281 = vunpack.c.l.bf16 %v249
      %v282 = vunpack.c.l.bf16 %v250
      %v283 = vunpack.c.l.bf16 %v251
      %v284 = vunpack.c.l.bf16 %v252
      %v285 = vunpack.c.l.bf16 %v253
      %v286 = vunpack.c.l.bf16 %v254
      %v287 = vunpack.c.l.bf16 %v255
      %v288 = vunpack.c.l.bf16 %v256
      %v289 = vunpack.c.l.bf16 %v257
      %v290 = vunpack.c.l.bf16 %v258
      %v291 = vunpack.c.l.bf16 %v259
      %v292 = vunpack.c.l.bf16 %v260
      %v293 = vunpack.c.l.bf16 %v261
      %v294 = vunpack.c.l.bf16 %v262
      %v295 = vunpack.c.l.bf16 %v263
      %v296 = vunpack.c.l.bf16 %v264
      %v297 = vunpack.c.l.bf16 %v265
      %v298 = vunpack.c.l.bf16 %v266
      %v299 = vunpack.c.l.bf16 %v267
      %v300 = vunpack.c.l.bf16 %v268
      %v301 = vld [vmem:[%s1] sm:$0x1]
      %v303 = vperm.slane %v301, 0
      %v305 = vmul.f32 %v269, %v303
      %v306 = vmul.f32 %v270, %v303
      %v307 = vmul.f32 %v271, %v303
      %v308 = vmul.f32 %v272, %v303
      %v309 = vmul.f32 %v273, %v303
      %v310 = vmul.f32 %v274, %v303
      %v311 = vmul.f32 %v275, %v303
      %v312 = vmul.f32 %v276, %v303
      %v313 = vmul.f32 %v277, %v303
      %v314 = vmul.f32 %v278, %v303
      %v315 = vmul.f32 %v279, %v303
      %v316 = vmul.f32 %v280, %v303
      %v317 = vmul.f32 %v281, %v303
      %v318 = vmul.f32 %v282, %v303
      %v319 = vmul.f32 %v283, %v303
      %v320 = vmul.f32 %v284, %v303
      %v321 = vmul.f32 %v285, %v303
      %v322 = vmul.f32 %v286, %v303
      %v323 = vmul.f32 %v287, %v303
      %v324 = vmul.f32 %v288, %v303
      %v325 = vmul.f32 %v289, %v303
      %v326 = vmul.f32 %v290, %v303
      %v327 = vmul.f32 %v291, %v303
      %v328 = vmul.f32 %v292, %v303
      %v329 = vmul.f32 %v293, %v303
      %v330 = vmul.f32 %v294, %v303
      %v331 = vmul.f32 %v295, %v303
      %v332 = vmul.f32 %v296, %v303
      %v333 = vmul.f32 %v297, %v303
      %v334 = vmul.f32 %v298, %v303
      %v335 = vmul.f32 %v299, %v303
      %v336 = vmul.f32 %v300, %v303
      %v337 = vld [vmem:[%s2] sm:$0x1]
      %v339 = vperm.slane %v337, 0
      %v341 = vadd.f32 %v305, %v339
      %v342 = vadd.f32 %v306, %v339
      %v343 = vadd.f32 %v307, %v339
      %v344 = vadd.f32 %v308, %v339
      %v345 = vadd.f32 %v309, %v339
      %v346 = vadd.f32 %v310, %v339
      %v347 = vadd.f32 %v311, %v339
      %v348 = vadd.f32 %v312, %v339
      %v349 = vadd.f32 %v313, %v339
      %v350 = vadd.f32 %v314, %v339
      %v351 = vadd.f32 %v315, %v339
      %v352 = vadd.f32 %v316, %v339
      %v353 = vadd.f32 %v317, %v339
      %v354 = vadd.f32 %v318, %v339
      %v355 = vadd.f32 %v319, %v339
      %v356 = vadd.f32 %v320, %v339
      %v357 = vadd.f32 %v321, %v339
      %v358 = vadd.f32 %v322, %v339
      %v359 = vadd.f32 %v323, %v339
      %v360 = vadd.f32 %v324, %v339
      %v361 = vadd.f32 %v325, %v339
      %v362 = vadd.f32 %v326, %v339
      %v363 = vadd.f32 %v327, %v339
      %v364 = vadd.f32 %v328, %v339
      %v365 = vadd.f32 %v329, %v339
      %v366 = vadd.f32 %v330, %v339
      %v367 = vadd.f32 %v331, %v339
      %v368 = vadd.f32 %v332, %v339
      %v369 = vadd.f32 %v333, %v339
      %v370 = vadd.f32 %v334, %v339
      %v371 = vadd.f32 %v335, %v339
      %v372 = vadd.f32 %v336, %v339
      %v373 = vmax.f32 %v341, 0.0
      %v374 = vmax.f32 %v342, 0.0
      %v375 = vmax.f32 %v343, 0.0
      %v376 = vmax.f32 %v344, 0.0
      %v377 = vmax.f32 %v345, 0.0
      %v378 = vmax.f32 %v346, 0.0
      %v379 = vmax.f32 %v347, 0.0
      %v380 = vmax.f32 %v348, 0.0
      %v381 = vmax.f32 %v349, 0.0
      %v382 = vmax.f32 %v350, 0.0
      %v383 = vmax.f32 %v351, 0.0
      %v384 = vmax.f32 %v352, 0.0
      %v385 = vmax.f32 %v353, 0.0
      %v386 = vmax.f32 %v354, 0.0
      %v387 = vmax.f32 %v355, 0.0
      %v388 = vmax.f32 %v356, 0.0
      %v389 = vmax.f32 %v357, 0.0
      %v390 = vmax.f32 %v358, 0.0
      %v391 = vmax.f32 %v359, 0.0
      %v392 = vmax.f32 %v360, 0.0
      %v393 = vmax.f32 %v361, 0.0
      %v394 = vmax.f32 %v362, 0.0
      %v395 = vmax.f32 %v363, 0.0
      %v396 = vmax.f32 %v364, 0.0
      %v397 = vmax.f32 %v365, 0.0
      %v398 = vmax.f32 %v366, 0.0
      %v399 = vmax.f32 %v367, 0.0
      %v400 = vmax.f32 %v368, 0.0
      %v401 = vmax.f32 %v369, 0.0
      %v402 = vmax.f32 %v370, 0.0
      %v403 = vmax.f32 %v371, 0.0
      %v404 = vmax.f32 %v372, 0.0
      %v405 = vpack.c.bf16 %v373, %v373
      %v406 = vpack.c.bf16 %v374, %v374
      %v407 = vpack.c.bf16 %v375, %v375
      %v408 = vpack.c.bf16 %v376, %v376
      %v409 = vpack.c.bf16 %v377, %v377
      %v410 = vpack.c.bf16 %v378, %v378
      %v411 = vpack.c.bf16 %v379, %v379
      %v412 = vpack.c.bf16 %v380, %v380
      %v413 = vpack.c.bf16 %v381, %v381
      %v414 = vpack.c.bf16 %v382, %v382
      %v415 = vpack.c.bf16 %v383, %v383
      %v416 = vpack.c.bf16 %v384, %v384
      %v417 = vpack.c.bf16 %v385, %v385
      %v418 = vpack.c.bf16 %v386, %v386
      %v419 = vpack.c.bf16 %v387, %v387
      %v420 = vpack.c.bf16 %v388, %v388
      %v421 = vpack.c.bf16 %v389, %v389
      %v422 = vpack.c.bf16 %v390, %v390
      %v423 = vpack.c.bf16 %v391, %v391
      %v424 = vpack.c.bf16 %v392, %v392
      %v425 = vpack.c.bf16 %v393, %v393
      %v426 = vpack.c.bf16 %v394, %v394
      %v427 = vpack.c.bf16 %v395, %v395
      %v428 = vpack.c.bf16 %v396, %v396
      %v429 = vpack.c.bf16 %v397, %v397
      %v430 = vpack.c.bf16 %v398, %v398
      %v431 = vpack.c.bf16 %v399, %v399
      %v432 = vpack.c.bf16 %v400, %v400
      %v433 = vpack.c.bf16 %v401, %v401
      %v434 = vpack.c.bf16 %v402, %v402
      %v435 = vpack.c.bf16 %v403, %v403
      %v436 = vpack.c.bf16 %v404, %v404
      %v469 = vunpack.c.l.b16 %v405
      %v470 = vunpack.c.l.b16 %v406
      %v471 = vunpack.c.l.b16 %v407
      %v472 = vunpack.c.l.b16 %v408
      %v473 = vunpack.c.l.b16 %v409
      %v474 = vunpack.c.l.b16 %v410
      %v475 = vunpack.c.l.b16 %v411
      %v476 = vunpack.c.l.b16 %v412
      %v477 = vunpack.c.l.b16 %v413
      %v478 = vunpack.c.l.b16 %v414
      %v479 = vunpack.c.l.b16 %v415
      %v480 = vunpack.c.l.b16 %v416
      %v481 = vunpack.c.l.b16 %v417
      %v482 = vunpack.c.l.b16 %v418
      %v483 = vunpack.c.l.b16 %v419
      %v484 = vunpack.c.l.b16 %v420
      %v485 = vunpack.c.l.b16 %v421
      %v486 = vunpack.c.l.b16 %v422
      %v487 = vunpack.c.l.b16 %v423
      %v488 = vunpack.c.l.b16 %v424
      %v489 = vunpack.c.l.b16 %v425
      %v490 = vunpack.c.l.b16 %v426
      %v491 = vunpack.c.l.b16 %v427
      %v492 = vunpack.c.l.b16 %v428
      %v493 = vunpack.c.l.b16 %v429
      %v494 = vunpack.c.l.b16 %v430
      %v495 = vunpack.c.l.b16 %v431
      %v496 = vunpack.c.l.b16 %v432
      %v497 = vunpack.c.l.b16 %v433
      %v498 = vunpack.c.l.b16 %v434
      %v499 = vunpack.c.l.b16 %v435
      %v500 = vunpack.c.l.b16 %v436
      %v501 = vpack.c.b16 %v470, %v469
      %v502 = vpack.c.b16 %v472, %v471
      %v503 = vpack.c.b16 %v474, %v473
      %v504 = vpack.c.b16 %v476, %v475
      %v505 = vpack.c.b16 %v478, %v477
      %v506 = vpack.c.b16 %v480, %v479
      %v507 = vpack.c.b16 %v482, %v481
      %v508 = vpack.c.b16 %v484, %v483
      %v509 = vpack.c.b16 %v486, %v485
      %v510 = vpack.c.b16 %v488, %v487
      %v511 = vpack.c.b16 %v490, %v489
      %v512 = vpack.c.b16 %v492, %v491
      %v513 = vpack.c.b16 %v494, %v493
      %v514 = vpack.c.b16 %v496, %v495
      %v515 = vpack.c.b16 %v498, %v497
      %v516 = vpack.c.b16 %v500, %v499
      %v518 = vshrl.u32 %v501, 16
      %v520 = vrot.slane %v518, 7
      %v521 = vshll.u32 %v501, 16
      %v523 = vor.u32 %v520, %v521
      %v525 = vshrl.u32 %v502, 16
      %v527 = vrot.slane %v525, 7
      %v528 = vshll.u32 %v502, 16
      %v530 = vor.u32 %v527, %v528
      %v532 = vshrl.u32 %v503, 16
      %v534 = vrot.slane %v532, 7
      %v535 = vshll.u32 %v503, 16
      %v537 = vor.u32 %v534, %v535
      %v539 = vshrl.u32 %v504, 16
      %v541 = vrot.slane %v539, 7
      %v542 = vshll.u32 %v504, 16
      %v544 = vor.u32 %v541, %v542
      %v546 = vshrl.u32 %v505, 16
      %v548 = vrot.slane %v546, 7
      %v549 = vshll.u32 %v505, 16
      %v551 = vor.u32 %v548, %v549
      %v553 = vshrl.u32 %v506, 16
      %v555 = vrot.slane %v553, 7
      %v556 = vshll.u32 %v506, 16
      %v558 = vor.u32 %v555, %v556
      %v560 = vshrl.u32 %v507, 16
      %v562 = vrot.slane %v560, 7
      %v563 = vshll.u32 %v507, 16
      %v565 = vor.u32 %v562, %v563
      %v567 = vshrl.u32 %v508, 16
      %v569 = vrot.slane %v567, 7
      %v570 = vshll.u32 %v508, 16
      %v572 = vor.u32 %v569, %v570
      %v574 = vshrl.u32 %v509, 16
      %v576 = vrot.slane %v574, 7
      %v577 = vshll.u32 %v509, 16
      %v579 = vor.u32 %v576, %v577
      %v581 = vshrl.u32 %v510, 16
      %v583 = vrot.slane %v581, 7
      %v584 = vshll.u32 %v510, 16
      %v586 = vor.u32 %v583, %v584
      %v588 = vshrl.u32 %v511, 16
      %v590 = vrot.slane %v588, 7
      %v591 = vshll.u32 %v511, 16
      %v593 = vor.u32 %v590, %v591
      %v595 = vshrl.u32 %v512, 16
      %v597 = vrot.slane %v595, 7
      %v598 = vshll.u32 %v512, 16
      %v600 = vor.u32 %v597, %v598
      %v602 = vshrl.u32 %v513, 16
      %v604 = vrot.slane %v602, 7
      %v605 = vshll.u32 %v513, 16
      %v607 = vor.u32 %v604, %v605
      %v609 = vshrl.u32 %v514, 16
      %v611 = vrot.slane %v609, 7
      %v612 = vshll.u32 %v514, 16
      %v614 = vor.u32 %v611, %v612
      %v616 = vshrl.u32 %v515, 16
      %v618 = vrot.slane %v616, 7
      %v619 = vshll.u32 %v515, 16
      %v621 = vor.u32 %v618, %v619
      %v623 = vshrl.u32 %v516, 16
      %v625 = vrot.slane %v623, 7
      %v626 = vshll.u32 %v516, 16
      %v628 = vor.u32 %v625, %v626
      %vm645 = vcmask 1040384
      %vm646 = vsmask.f32 256
      %vm647 = vmand %vm645, %vm646
      %v648 = vsel %vm647, 0, %v523
      %v649 = vsel %vm647, 0, %v530
      %v650 = vsel %vm647, 0, %v537
      %v651 = vsel %vm647, 0, %v544
      %v652 = vsel %vm647, 0, %v551
      %v653 = vsel %vm647, 0, %v558
      %v654 = vsel %vm647, 0, %v565
      %v655 = vsel %vm647, 0, %v572
      %v656 = vsel %vm647, 0, %v579
      %v657 = vsel %vm647, 0, %v586
      %v658 = vsel %vm647, 0, %v593
      %v659 = vsel %vm647, 0, %v600
      %v660 = vsel %vm647, 0, %v607
      %v661 = vsel %vm647, 0, %v614
      %v662 = vsel %vm647, 0, %v621
      %v663 = vsel %vm647, 0, %v628
      %v664 = vrot.slane %v521, 1
      %v665 = vor.u32 %v518, %v664
      %v666 = vrot.slane %v528, 1
      %v667 = vor.u32 %v525, %v666
      %v668 = vrot.slane %v535, 1
      %v669 = vor.u32 %v532, %v668
      %v670 = vrot.slane %v542, 1
      %v671 = vor.u32 %v539, %v670
      %v672 = vrot.slane %v549, 1
      %v673 = vor.u32 %v546, %v672
      %v674 = vrot.slane %v556, 1
      %v675 = vor.u32 %v553, %v674
      %v676 = vrot.slane %v563, 1
      %v677 = vor.u32 %v560, %v676
      %v678 = vrot.slane %v570, 1
      %v679 = vor.u32 %v567, %v678
      %v680 = vrot.slane %v577, 1
      %v681 = vor.u32 %v574, %v680
      %v682 = vrot.slane %v584, 1
      %v683 = vor.u32 %v581, %v682
      %v684 = vrot.slane %v591, 1
      %v685 = vor.u32 %v588, %v684
      %v686 = vrot.slane %v598, 1
      %v687 = vor.u32 %v595, %v686
      %v688 = vrot.slane %v605, 1
      %v689 = vor.u32 %v602, %v688
      %v690 = vrot.slane %v612, 1
      %v691 = vor.u32 %v609, %v690
      %v692 = vrot.slane %v619, 1
      %v693 = vor.u32 %v616, %v692
      %v694 = vrot.slane %v626, 1
      %v695 = vor.u32 %v623, %v694
      %vm712 = vcmask 1047552
      %vm713 = vsmask.f32 7424
      %vm714 = vmand %vm712, %vm713
      %v715 = vsel %vm714, %v665, 0
      %v716 = vsel %vm714, %v667, 0
      %v717 = vsel %vm714, %v669, 0
      %v718 = vsel %vm714, %v671, 0
      %v719 = vsel %vm714, %v673, 0
      %v720 = vsel %vm714, %v675, 0
      %v721 = vsel %vm714, %v677, 0
      %v722 = vsel %vm714, %v679, 0
      %v723 = vsel %vm714, %v681, 0
      %v724 = vsel %vm714, %v683, 0
      %v725 = vsel %vm714, %v685, 0
      %v726 = vsel %vm714, %v687, 0
      %v727 = vsel %vm714, %v689, 0
      %v728 = vsel %vm714, %v691, 0
      %v729 = vsel %vm714, %v693, 0
      %v730 = vsel %vm714, %v695, 0
      %v731 = vld [vmem:[%s3] sm:$0xf]
      %v732 = vld [vmem:[%s3 + $0x4] sm:$0xf]
      %v733 = vld [vmem:[%s3 + $0x8] sm:$0xf]
      %v734 = vld [vmem:[%s3 + $0xc] sm:$0xf]
      %v735 = vld [vmem:[%s3 + $0x10] sm:$0x3]
      %737 = vrot.lane.b32.xlu0 0, 4
      %v738 = vpop.permute.xlu0 %737
      %739 = vrot.lane.b32.xlu0 %v501, 4
      %v740 = vpop.permute.xlu0 %739
      %741 = vrot.lane.b32.xlu0 %v502, 4
      %v742 = vpop.permute.xlu0 %741
      %743 = vrot.lane.b32.xlu0 %v503, 4
      %v744 = vpop.permute.xlu0 %743
      %745 = vrot.lane.b32.xlu0 %v504, 4
      %v746 = vpop.permute.xlu0 %745
      %747 = vrot.lane.b32.xlu0 %v505, 4
      %v748 = vpop.permute.xlu0 %747
      %749 = vrot.lane.b32.xlu0 %v506, 4
      %v750 = vpop.permute.xlu0 %749
      %751 = vrot.lane.b32.xlu0 %v507, 4
      %v752 = vpop.permute.xlu0 %751
      %753 = vrot.lane.b32.xlu0 %v508, 4
      %v754 = vpop.permute.xlu0 %753
      %755 = vrot.lane.b32.xlu0 %v509, 4
      %v756 = vpop.permute.xlu0 %755
      %757 = vrot.lane.b32.xlu0 %v510, 4
      %v758 = vpop.permute.xlu0 %757
      %759 = vrot.lane.b32.xlu0 %v511, 4
      %v760 = vpop.permute.xlu0 %759
      %761 = vrot.lane.b32.xlu0 %v512, 4
      %v762 = vpop.permute.xlu0 %761
      %763 = vrot.lane.b32.xlu0 %v513, 4
      %v764 = vpop.permute.xlu0 %763
      %765 = vrot.lane.b32.xlu0 %v514, 4
      %v766 = vpop.permute.xlu0 %765
      %767 = vrot.lane.b32.xlu0 %v515, 4
      %v768 = vpop.permute.xlu0 %767
      %784 = vrot.lane.b32.xlu0 0, 8
      %v785 = vpop.permute.xlu0 %784
      %786 = vrot.lane.b32.xlu0 %v715, 8
      %v787 = vpop.permute.xlu0 %786
      %788 = vrot.lane.b32.xlu0 %v716, 8
      %v789 = vpop.permute.xlu0 %788
      %790 = vrot.lane.b32.xlu0 %v717, 8
      %v791 = vpop.permute.xlu0 %790
      %792 = vrot.lane.b32.xlu0 %v718, 8
      %v793 = vpop.permute.xlu0 %792
      %794 = vrot.lane.b32.xlu0 %v719, 8
      %v795 = vpop.permute.xlu0 %794
      %796 = vrot.lane.b32.xlu0 %v720, 8
      %v797 = vpop.permute.xlu0 %796
      %798 = vrot.lane.b32.xlu0 %v721, 8
      %v799 = vpop.permute.xlu0 %798
      %800 = vrot.lane.b32.xlu0 %v722, 8
      %v801 = vpop.permute.xlu0 %800
      %802 = vrot.lane.b32.xlu0 %v723, 8
      %v803 = vpop.permute.xlu0 %802
      %804 = vrot.lane.b32.xlu0 %v724, 8
      %v805 = vpop.permute.xlu0 %804
      %806 = vrot.lane.b32.xlu0 %v725, 8
      %v807 = vpop.permute.xlu0 %806
      %808 = vrot.lane.b32.xlu0 %v726, 8
      %v809 = vpop.permute.xlu0 %808
      %810 = vrot.lane.b32.xlu0 %v727, 8
      %v811 = vpop.permute.xlu0 %810
      %812 = vrot.lane.b32.xlu0 %v728, 8
      %v813 = vpop.permute.xlu0 %812
      %814 = vrot.lane.b32.xlu0 %v729, 8
      %v815 = vpop.permute.xlu0 %814
      %832 = vrot.lane.b32.xlu0 %v648, 12
      %v833 = vpop.permute.xlu0 %832
      %834 = vrot.lane.b32.xlu0 %v649, 12
      %v835 = vpop.permute.xlu0 %834
      %836 = vrot.lane.b32.xlu0 %v650, 12
      %v837 = vpop.permute.xlu0 %836
      %838 = vrot.lane.b32.xlu0 %v651, 12
      %v839 = vpop.permute.xlu0 %838
      %840 = vrot.lane.b32.xlu0 %v652, 12
      %v841 = vpop.permute.xlu0 %840
      %842 = vrot.lane.b32.xlu0 %v653, 12
      %v843 = vpop.permute.xlu0 %842
      %844 = vrot.lane.b32.xlu0 %v654, 12
      %v845 = vpop.permute.xlu0 %844
      %846 = vrot.lane.b32.xlu0 %v655, 12
      %v847 = vpop.permute.xlu0 %846
      %848 = vrot.lane.b32.xlu0 %v656, 12
      %v849 = vpop.permute.xlu0 %848
      %850 = vrot.lane.b32.xlu0 %v657, 12
      %v851 = vpop.permute.xlu0 %850
      %852 = vrot.lane.b32.xlu0 %v658, 12
      %v853 = vpop.permute.xlu0 %852
      %854 = vrot.lane.b32.xlu0 %v659, 12
      %v855 = vpop.permute.xlu0 %854
      %856 = vrot.lane.b32.xlu0 %v660, 12
      %v857 = vpop.permute.xlu0 %856
      %858 = vrot.lane.b32.xlu0 %v661, 12
      %v859 = vpop.permute.xlu0 %858
      %860 = vrot.lane.b32.xlu0 %v662, 12
      %v861 = vpop.permute.xlu0 %860
      %862 = vrot.lane.b32.xlu0 %v663, 12
      %v863 = vpop.permute.xlu0 %862
      %864 = vrot.lane.b32.xlu0 %v501, 16
      %v865 = vpop.permute.xlu0 %864
      %866 = vrot.lane.b32.xlu0 %v502, 16
      %v867 = vpop.permute.xlu0 %866
      %868 = vrot.lane.b32.xlu0 %v503, 16
      %v869 = vpop.permute.xlu0 %868
      %870 = vrot.lane.b32.xlu0 %v504, 16
      %v871 = vpop.permute.xlu0 %870
      %872 = vrot.lane.b32.xlu0 %v505, 16
      %v873 = vpop.permute.xlu0 %872
      %874 = vrot.lane.b32.xlu0 %v506, 16
      %v875 = vpop.permute.xlu0 %874
      %876 = vrot.lane.b32.xlu0 %v507, 16
      %v877 = vpop.permute.xlu0 %876
      %878 = vrot.lane.b32.xlu0 %v508, 16
      %v879 = vpop.permute.xlu0 %878
      %880 = vrot.lane.b32.xlu0 %v509, 16
      %v881 = vpop.permute.xlu0 %880
      %882 = vrot.lane.b32.xlu0 %v510, 16
      %v883 = vpop.permute.xlu0 %882
      %884 = vrot.lane.b32.xlu0 %v511, 16
      %v885 = vpop.permute.xlu0 %884
      %886 = vrot.lane.b32.xlu0 %v512, 16
      %v887 = vpop.permute.xlu0 %886
      %888 = vrot.lane.b32.xlu0 %v513, 16
      %v889 = vpop.permute.xlu0 %888
      %890 = vrot.lane.b32.xlu0 %v514, 16
      %v891 = vpop.permute.xlu0 %890
      %892 = vrot.lane.b32.xlu0 %v515, 16
      %v893 = vpop.permute.xlu0 %892
      %894 = vrot.lane.b32.xlu0 %v516, 16
      %v895 = vpop.permute.xlu0 %894
      %897 = vrot.lane.b32.xlu0 %v715, 20
      %v898 = vpop.permute.xlu0 %897
      %899 = vrot.lane.b32.xlu0 %v716, 20
      %v900 = vpop.permute.xlu0 %899
      %901 = vrot.lane.b32.xlu0 %v717, 20
      %v902 = vpop.permute.xlu0 %901
      %903 = vrot.lane.b32.xlu0 %v718, 20
      %v904 = vpop.permute.xlu0 %903
      %905 = vrot.lane.b32.xlu0 %v719, 20
      %v906 = vpop.permute.xlu0 %905
      %907 = vrot.lane.b32.xlu0 %v720, 20
      %v908 = vpop.permute.xlu0 %907
      %909 = vrot.lane.b32.xlu0 %v721, 20
      %v910 = vpop.permute.xlu0 %909
      %911 = vrot.lane.b32.xlu0 %v722, 20
      %v912 = vpop.permute.xlu0 %911
      %913 = vrot.lane.b32.xlu0 %v723, 20
      %v914 = vpop.permute.xlu0 %913
      %915 = vrot.lane.b32.xlu0 %v724, 20
      %v916 = vpop.permute.xlu0 %915
      %917 = vrot.lane.b32.xlu0 %v725, 20
      %v918 = vpop.permute.xlu0 %917
      %919 = vrot.lane.b32.xlu0 %v726, 20
      %v920 = vpop.permute.xlu0 %919
      %921 = vrot.lane.b32.xlu0 %v727, 20
      %v922 = vpop.permute.xlu0 %921
      %923 = vrot.lane.b32.xlu0 %v728, 20
      %v924 = vpop.permute.xlu0 %923
      %925 = vrot.lane.b32.xlu0 %v729, 20
      %v926 = vpop.permute.xlu0 %925
      %927 = vrot.lane.b32.xlu0 %v730, 20
      %v928 = vpop.permute.xlu0 %927
      %929 = vrot.lane.b32.xlu0 %v649, 24
      %v930 = vpop.permute.xlu0 %929
      %931 = vrot.lane.b32.xlu0 %v650, 24
      %v932 = vpop.permute.xlu0 %931
      %933 = vrot.lane.b32.xlu0 %v651, 24
      %v934 = vpop.permute.xlu0 %933
      %935 = vrot.lane.b32.xlu0 %v652, 24
      %v936 = vpop.permute.xlu0 %935
      %937 = vrot.lane.b32.xlu0 %v653, 24
      %v938 = vpop.permute.xlu0 %937
      %939 = vrot.lane.b32.xlu0 %v654, 24
      %v940 = vpop.permute.xlu0 %939
      %941 = vrot.lane.b32.xlu0 %v655, 24
      %v942 = vpop.permute.xlu0 %941
      %943 = vrot.lane.b32.xlu0 %v656, 24
      %v944 = vpop.permute.xlu0 %943
      %945 = vrot.lane.b32.xlu0 %v657, 24
      %v946 = vpop.permute.xlu0 %945
      %947 = vrot.lane.b32.xlu0 %v658, 24
      %v948 = vpop.permute.xlu0 %947
      %949 = vrot.lane.b32.xlu0 %v659, 24
      %v950 = vpop.permute.xlu0 %949
      %951 = vrot.lane.b32.xlu0 %v660, 24
      %v952 = vpop.permute.xlu0 %951
      %953 = vrot.lane.b32.xlu0 %v661, 24
      %v954 = vpop.permute.xlu0 %953
      %955 = vrot.lane.b32.xlu0 %v662, 24
      %v956 = vpop.permute.xlu0 %955
      %957 = vrot.lane.b32.xlu0 %v663, 24
      %v958 = vpop.permute.xlu0 %957
      %959 = vrot.lane.b32.xlu0 0, 24
      %v960 = vpop.permute.xlu0 %959
      %961 = vrot.lane.b32.xlu0 %v502, 28
      %v962 = vpop.permute.xlu0 %961
      %963 = vrot.lane.b32.xlu0 %v503, 28
      %v964 = vpop.permute.xlu0 %963
      %965 = vrot.lane.b32.xlu0 %v504, 28
      %v966 = vpop.permute.xlu0 %965
      %967 = vrot.lane.b32.xlu0 %v505, 28
      %v968 = vpop.permute.xlu0 %967
      %969 = vrot.lane.b32.xlu0 %v506, 28
      %v970 = vpop.permute.xlu0 %969
      %971 = vrot.lane.b32.xlu0 %v507, 28
      %v972 = vpop.permute.xlu0 %971
      %973 = vrot.lane.b32.xlu0 %v508, 28
      %v974 = vpop.permute.xlu0 %973
      %975 = vrot.lane.b32.xlu0 %v509, 28
      %v976 = vpop.permute.xlu0 %975
      %977 = vrot.lane.b32.xlu0 %v510, 28
      %v978 = vpop.permute.xlu0 %977
      %979 = vrot.lane.b32.xlu0 %v511, 28
      %v980 = vpop.permute.xlu0 %979
      %981 = vrot.lane.b32.xlu0 %v512, 28
      %v982 = vpop.permute.xlu0 %981
      %983 = vrot.lane.b32.xlu0 %v513, 28
      %v984 = vpop.permute.xlu0 %983
      %985 = vrot.lane.b32.xlu0 %v514, 28
      %v986 = vpop.permute.xlu0 %985
      %987 = vrot.lane.b32.xlu0 %v515, 28
      %v988 = vpop.permute.xlu0 %987
      %989 = vrot.lane.b32.xlu0 %v516, 28
      %v990 = vpop.permute.xlu0 %989
      %991 = vrot.lane.b32.xlu0 0, 28
      %v992 = vpop.permute.xlu0 %991
      %993 = vrot.lane.b32.xlu0 %v716, 32
      %v994 = vpop.permute.xlu0 %993
      %995 = vrot.lane.b32.xlu0 %v717, 32
      %v996 = vpop.permute.xlu0 %995
      %997 = vrot.lane.b32.xlu0 %v718, 32
      %v998 = vpop.permute.xlu0 %997
      %999 = vrot.lane.b32.xlu0 %v719, 32
      %v1000 = vpop.permute.xlu0 %999
      %1001 = vrot.lane.b32.xlu0 %v720, 32
      %v1002 = vpop.permute.xlu0 %1001
      %1003 = vrot.lane.b32.xlu0 %v721, 32
      %v1004 = vpop.permute.xlu0 %1003
      %1005 = vrot.lane.b32.xlu0 %v722, 32
      %v1006 = vpop.permute.xlu0 %1005
      %1007 = vrot.lane.b32.xlu0 %v723, 32
      %v1008 = vpop.permute.xlu0 %1007
      %1009 = vrot.lane.b32.xlu0 %v724, 32
      %v1010 = vpop.permute.xlu0 %1009
      %1011 = vrot.lane.b32.xlu0 %v725, 32
      %v1012 = vpop.permute.xlu0 %1011
      %1013 = vrot.lane.b32.xlu0 %v726, 32
      %v1014 = vpop.permute.xlu0 %1013
      %1015 = vrot.lane.b32.xlu0 %v727, 32
      %v1016 = vpop.permute.xlu0 %1015
      %1017 = vrot.lane.b32.xlu0 %v728, 32
      %v1018 = vpop.permute.xlu0 %1017
      %1019 = vrot.lane.b32.xlu0 %v729, 32
      %v1020 = vpop.permute.xlu0 %1019
      %1021 = vrot.lane.b32.xlu0 %v730, 32
      %v1022 = vpop.permute.xlu0 %1021
      %1023 = vrot.lane.b32.xlu0 0, 32
      %v1024 = vpop.permute.xlu0 %1023
      %vm1025 = vcmask 31744
      %v1028 = vsel %vm1025, 0, %v738
      %v1031 = vsel %vm1025, %v648, %v740
      %v1034 = vsel %vm1025, %v649, %v742
      %v1037 = vsel %vm1025, %v650, %v744
      %v1040 = vsel %vm1025, %v651, %v746
      %v1043 = vsel %vm1025, %v652, %v748
      %v1046 = vsel %vm1025, %v653, %v750
      %v1049 = vsel %vm1025, %v654, %v752
      %v1052 = vsel %vm1025, %v655, %v754
      %v1055 = vsel %vm1025, %v656, %v756
      %v1058 = vsel %vm1025, %v657, %v758
      %v1061 = vsel %vm1025, %v658, %v760
      %v1064 = vsel %vm1025, %v659, %v762
      %v1067 = vsel %vm1025, %v660, %v764
      %v1070 = vsel %vm1025, %v661, %v766
      %v1073 = vsel %vm1025, %v662, %v768
      %vm1074 = vcmask 64512
      %v1076 = vsel %vm1074, %v1028, %v785
      %v1078 = vsel %vm1074, %v1031, %v787
      %v1080 = vsel %vm1074, %v1034, %v789
      %v1082 = vsel %vm1074, %v1037, %v791
      %v1084 = vsel %vm1074, %v1040, %v793
      %v1086 = vsel %vm1074, %v1043, %v795
      %v1088 = vsel %vm1074, %v1046, %v797
      %v1090 = vsel %vm1074, %v1049, %v799
      %v1092 = vsel %vm1074, %v1052, %v801
      %v1094 = vsel %vm1074, %v1055, %v803
      %v1096 = vsel %vm1074, %v1058, %v805
      %v1098 = vsel %vm1074, %v1061, %v807
      %v1100 = vsel %vm1074, %v1064, %v809
      %v1102 = vsel %vm1074, %v1067, %v811
      %v1104 = vsel %vm1074, %v1070, %v813
      %v1106 = vsel %vm1074, %v1073, %v815
      %vm1107 = vcmask 97280
      %v1109 = vsel %vm1107, %v1076, %v833
      %v1111 = vsel %vm1107, %v1078, %v835
      %v1113 = vsel %vm1107, %v1080, %v837
      %v1115 = vsel %vm1107, %v1082, %v839
      %v1117 = vsel %vm1107, %v1084, %v841
      %v1119 = vsel %vm1107, %v1086, %v843
      %v1121 = vsel %vm1107, %v1088, %v845
      %v1123 = vsel %vm1107, %v1090, %v847
      %v1125 = vsel %vm1107, %v1092, %v849
      %v1127 = vsel %vm1107, %v1094, %v851
      %v1129 = vsel %vm1107, %v1096, %v853
      %v1131 = vsel %vm1107, %v1098, %v855
      %v1133 = vsel %vm1107, %v1100, %v857
      %v1135 = vsel %vm1107, %v1102, %v859
      %v1137 = vsel %vm1107, %v1104, %v861
      %v1139 = vsel %vm1107, %v1106, %v863
      %vm1140 = vcmask 130048
      %v1142 = vsel %vm1140, %v1109, %v865
      %v1144 = vsel %vm1140, %v1111, %v867
      %v1146 = vsel %vm1140, %v1113, %v869
      %v1148 = vsel %vm1140, %v1115, %v871
      %v1150 = vsel %vm1140, %v1117, %v873
      %v1152 = vsel %vm1140, %v1119, %v875
      %v1154 = vsel %vm1140, %v1121, %v877
      %v1156 = vsel %vm1140, %v1123, %v879
      %v1158 = vsel %vm1140, %v1125, %v881
      %v1160 = vsel %vm1140, %v1127, %v883
      %v1162 = vsel %vm1140, %v1129, %v885
      %v1164 = vsel %vm1140, %v1131, %v887
      %v1166 = vsel %vm1140, %v1133, %v889
      %v1168 = vsel %vm1140, %v1135, %v891
      %v1170 = vsel %vm1140, %v1137, %v893
      %v1172 = vsel %vm1140, %v1139, %v895
      %vm1173 = vcmask 162816
      %v1175 = vsel %vm1173, %v1142, %v898
      %v1177 = vsel %vm1173, %v1144, %v900
      %v1179 = vsel %vm1173, %v1146, %v902
      %v1181 = vsel %vm1173, %v1148, %v904
      %v1183 = vsel %vm1173, %v1150, %v906
      %v1185 = vsel %vm1173, %v1152, %v908
      %v1187 = vsel %vm1173, %v1154, %v910
      %v1189 = vsel %vm1173, %v1156, %v912
      %v1191 = vsel %vm1173, %v1158, %v914
      %v1193 = vsel %vm1173, %v1160, %v916
      %v1195 = vsel %vm1173, %v1162, %v918
      %v1197 = vsel %vm1173, %v1164, %v920
      %v1199 = vsel %vm1173, %v1166, %v922
      %v1201 = vsel %vm1173, %v1168, %v924
      %v1203 = vsel %vm1173, %v1170, %v926
      %v1205 = vsel %vm1173, %v1172, %v928
      %vm1206 = vcmask 195584
      %v1208 = vsel %vm1206, %v1175, %v930
      %v1210 = vsel %vm1206, %v1177, %v932
      %v1212 = vsel %vm1206, %v1179, %v934
      %v1214 = vsel %vm1206, %v1181, %v936
      %v1216 = vsel %vm1206, %v1183, %v938
      %v1218 = vsel %vm1206, %v1185, %v940
      %v1220 = vsel %vm1206, %v1187, %v942
      %v1222 = vsel %vm1206, %v1189, %v944
      %v1224 = vsel %vm1206, %v1191, %v946
      %v1226 = vsel %vm1206, %v1193, %v948
      %v1228 = vsel %vm1206, %v1195, %v950
      %v1230 = vsel %vm1206, %v1197, %v952
      %v1232 = vsel %vm1206, %v1199, %v954
      %v1234 = vsel %vm1206, %v1201, %v956
      %v1236 = vsel %vm1206, %v1203, %v958
      %v1238 = vsel %vm1206, %v1205, %v960
      %vm1239 = vcmask 228352
      %v1241 = vsel %vm1239, %v1208, %v962
      %v1243 = vsel %vm1239, %v1210, %v964
      %v1245 = vsel %vm1239, %v1212, %v966
      %v1247 = vsel %vm1239, %v1214, %v968
      %v1249 = vsel %vm1239, %v1216, %v970
      %v1251 = vsel %vm1239, %v1218, %v972
      %v1253 = vsel %vm1239, %v1220, %v974
      %v1255 = vsel %vm1239, %v1222, %v976
      %v1257 = vsel %vm1239, %v1224, %v978
      %v1259 = vsel %vm1239, %v1226, %v980
      %v1261 = vsel %vm1239, %v1228, %v982
      %v1263 = vsel %vm1239, %v1230, %v984
      %v1265 = vsel %vm1239, %v1232, %v986
      %v1267 = vsel %vm1239, %v1234, %v988
      %v1269 = vsel %vm1239, %v1236, %v990
      %v1271 = vsel %vm1239, %v1238, %v992
      %vm1272 = vcmask 261120
      %v1274 = vsel %vm1272, %v1241, %v994
      %v1276 = vsel %vm1272, %v1243, %v996
      %v1278 = vsel %vm1272, %v1245, %v998
      %v1280 = vsel %vm1272, %v1247, %v1000
      %v1282 = vsel %vm1272, %v1249, %v1002
      %v1284 = vsel %vm1272, %v1251, %v1004
      %v1286 = vsel %vm1272, %v1253, %v1006
      %v1288 = vsel %vm1272, %v1255, %v1008
      %v1290 = vsel %vm1272, %v1257, %v1010
      %v1292 = vsel %vm1272, %v1259, %v1012
      %v1294 = vsel %vm1272, %v1261, %v1014
      %v1296 = vsel %vm1272, %v1263, %v1016
      %v1298 = vsel %vm1272, %v1265, %v1018
      %v1300 = vsel %vm1272, %v1267, %v1020
      %v1302 = vsel %vm1272, %v1269, %v1022
      %v1304 = vsel %vm1272, %v1271, %v1024
      %v1310 = vunpack.c.l.b16 %v731
      %v1311 = vunpack.c.l.b16 %v732
      %v1312 = vunpack.c.l.b16 %v733
      %v1313 = vunpack.c.l.b16 %v734
      %v1314 = vunpack.c.l.b16 %v735
      %v1315 = vpack.c.b16 %v1311, %v1310
      %v1316 = vpack.c.b16 %v1313, %v1312
      %v1317 = vpack.c.b16 %v1314, %v1314
      %vm1320 = vcmask 293888
      %v1321 = vsel %vm1320, %v1274, 0
      %v1323 = vsel %vm1320, %v1276, 0
      %v1325 = vsel %vm1320, %v1278, 0
      %v1327 = vsel %vm1320, %v1280, 0
      %v1329 = vsel %vm1320, %v1282, 0
      %v1331 = vsel %vm1320, %v1284, 0
      %v1333 = vsel %vm1320, %v1286, 0
      %v1335 = vsel %vm1320, %v1288, 0
      %v1337 = vsel %vm1320, %v1290, 0
      %v1339 = vsel %vm1320, %v1292, 0
      %v1341 = vsel %vm1320, %v1294, 0
      %v1343 = vsel %vm1320, %v1296, 0
      %v1345 = vsel %vm1320, %v1298, 0
      %v1347 = vsel %vm1320, %v1300, 0
      %v1349 = vsel %vm1320, %v1302, 0
      %v1351 = vsel %vm1320, %v1304, 0
      %vm1353 = vcmask 1041408
      %v1355 = vsel %vm1353, %v1317, 0
      %1357 = vmatpush.bf16.msra.mxu0 0
      %1358 = vmatpush.bf16.msra.mxu0 0
      %1359 = vmatpush.bf16.msra.mxu0 0
      %1360 = vmatpush.bf16.msra.mxu0 0
      %1361 = vmatpush.bf16.msra.mxu0 0
      %1362 = vmatpush.bf16.msra.mxu0 %v1355
      %1363 = vmatpush.bf16.msra.mxu0 %v1316
      %1364 = vmatpush.bf16.msra.mxu0 %v1315
      %1365 = vmatmul.bf16.gmra.mxu0 %v1321
      %v1366 = vpop.f32.mrf.mxu0
      %v1367 = vadd.f32 0.0, %v1366
      %v1368 = vpop.f32.mrf.mxu0
      %v1369 = vadd.f32 0.0, %v1368
      %1370 = vmatmul.bf16.gmra.mxu0 %v1323
      %v1371 = vpop.f32.mrf.mxu0
      %v1372 = vadd.f32 0.0, %v1371
      %v1373 = vpop.f32.mrf.mxu0
      %v1374 = vadd.f32 0.0, %v1373
      %1375 = vmatmul.bf16.gmra.mxu0 %v1325
      %v1376 = vpop.f32.mrf.mxu0
      %v1377 = vadd.f32 0.0, %v1376
      %v1378 = vpop.f32.mrf.mxu0
      %v1379 = vadd.f32 0.0, %v1378
      %1380 = vmatmul.bf16.gmra.mxu0 %v1327
      %v1381 = vpop.f32.mrf.mxu0
      %v1382 = vadd.f32 0.0, %v1381
      %v1383 = vpop.f32.mrf.mxu0
      %v1384 = vadd.f32 0.0, %v1383
      %1385 = vmatmul.bf16.gmra.mxu0 %v1329
      %v1386 = vpop.f32.mrf.mxu0
      %v1387 = vadd.f32 0.0, %v1386
      %v1388 = vpop.f32.mrf.mxu0
      %v1389 = vadd.f32 0.0, %v1388
      %1390 = vmatmul.bf16.gmra.mxu0 %v1331
      %v1391 = vpop.f32.mrf.mxu0
      %v1392 = vadd.f32 0.0, %v1391
      %v1393 = vpop.f32.mrf.mxu0
      %v1394 = vadd.f32 0.0, %v1393
      %1395 = vmatmul.bf16.gmra.mxu0 %v1333
      %v1396 = vpop.f32.mrf.mxu0
      %v1397 = vadd.f32 0.0, %v1396
      %v1398 = vpop.f32.mrf.mxu0
      %v1399 = vadd.f32 0.0, %v1398
      %1400 = vmatmul.bf16.gmra.mxu0 %v1335
      %v1401 = vpop.f32.mrf.mxu0
      %v1402 = vadd.f32 0.0, %v1401
      %v1403 = vpop.f32.mrf.mxu0
      %v1404 = vadd.f32 0.0, %v1403
      %1405 = vmatmul.bf16.gmra.mxu0 %v1337
      %v1406 = vpop.f32.mrf.mxu0
      %v1407 = vadd.f32 0.0, %v1406
      %v1408 = vpop.f32.mrf.mxu0
      %v1409 = vadd.f32 0.0, %v1408
      %1410 = vmatmul.bf16.gmra.mxu0 %v1339
      %v1411 = vpop.f32.mrf.mxu0
      %v1412 = vadd.f32 0.0, %v1411
      %v1413 = vpop.f32.mrf.mxu0
      %v1414 = vadd.f32 0.0, %v1413
      %1415 = vmatmul.bf16.gmra.mxu0 %v1341
      %v1416 = vpop.f32.mrf.mxu0
      %v1417 = vadd.f32 0.0, %v1416
      %v1418 = vpop.f32.mrf.mxu0
      %v1419 = vadd.f32 0.0, %v1418
      %1420 = vmatmul.bf16.gmra.mxu0 %v1343
      %v1421 = vpop.f32.mrf.mxu0
      %v1422 = vadd.f32 0.0, %v1421
      %v1423 = vpop.f32.mrf.mxu0
      %v1424 = vadd.f32 0.0, %v1423
      %1425 = vmatmul.bf16.gmra.mxu0 %v1345
      %v1426 = vpop.f32.mrf.mxu0
      %v1427 = vadd.f32 0.0, %v1426
      %v1428 = vpop.f32.mrf.mxu0
      %v1429 = vadd.f32 0.0, %v1428
      %1430 = vmatmul.bf16.gmra.mxu0 %v1347
      %v1431 = vpop.f32.mrf.mxu0
      %v1432 = vadd.f32 0.0, %v1431
      %v1433 = vpop.f32.mrf.mxu0
      %v1434 = vadd.f32 0.0, %v1433
      %1435 = vmatmul.bf16.gmra.mxu0 %v1349
      %v1436 = vpop.f32.mrf.mxu0
      %v1437 = vadd.f32 0.0, %v1436
      %v1438 = vpop.f32.mrf.mxu0
      %v1439 = vadd.f32 0.0, %v1438
      %1440 = vmatmul.bf16.gmra.mxu0 %v1351
      %v1441 = vpop.f32.mrf.mxu0
      %v1442 = vadd.f32 0.0, %v1441
      %v1443 = vpop.f32.mrf.mxu0
      %v1444 = vadd.f32 0.0, %v1443
      %1445 = vdwg.mxu0
      %v1446 = vpack.c.bf16 %v1367, %v1367
      %v1447 = vpack.c.bf16 %v1369, %v1369
      %v1448 = vpack.c.bf16 %v1372, %v1372
      %v1449 = vpack.c.bf16 %v1374, %v1374
      %v1450 = vpack.c.bf16 %v1377, %v1377
      %v1451 = vpack.c.bf16 %v1379, %v1379
      %v1452 = vpack.c.bf16 %v1382, %v1382
      %v1453 = vpack.c.bf16 %v1384, %v1384
      %v1454 = vpack.c.bf16 %v1387, %v1387
      %v1455 = vpack.c.bf16 %v1389, %v1389
      %v1456 = vpack.c.bf16 %v1392, %v1392
      %v1457 = vpack.c.bf16 %v1394, %v1394
      %v1458 = vpack.c.bf16 %v1397, %v1397
      %v1459 = vpack.c.bf16 %v1399, %v1399
      %v1460 = vpack.c.bf16 %v1402, %v1402
      %v1461 = vpack.c.bf16 %v1404, %v1404
      %v1462 = vpack.c.bf16 %v1407, %v1407
      %v1463 = vpack.c.bf16 %v1409, %v1409
      %v1464 = vpack.c.bf16 %v1412, %v1412
      %v1465 = vpack.c.bf16 %v1414, %v1414
      %v1466 = vpack.c.bf16 %v1417, %v1417
      %v1467 = vpack.c.bf16 %v1419, %v1419
      %v1468 = vpack.c.bf16 %v1422, %v1422
      %v1469 = vpack.c.bf16 %v1424, %v1424
      %v1470 = vpack.c.bf16 %v1427, %v1427
      %v1471 = vpack.c.bf16 %v1429, %v1429
      %v1472 = vpack.c.bf16 %v1432, %v1432
      %v1473 = vpack.c.bf16 %v1434, %v1434
      %v1474 = vpack.c.bf16 %v1437, %v1437
      %v1475 = vpack.c.bf16 %v1439, %v1439
      %v1476 = vpack.c.bf16 %v1442, %v1442
      %v1477 = vpack.c.bf16 %v1444, %v1444
      %vm1478 = vcmask 27648
      %1479 = vst.msk [vmem:[%s231] sm:$0xf] %vm1478, %v1446
      %1480 = vst.msk [vmem:[%s231 + $0x4] sm:$0xf] %vm1478, %v1447
      %1481 = vst.msk [vmem:[%s231 + $0x8] sm:$0xf] %vm1478, %v1448
      %1482 = vst.msk [vmem:[%s231 + $0xc] sm:$0xf] %vm1478, %v1449
      %1483 = vst.msk [vmem:[%s231 + $0x10] sm:$0xf] %vm1478, %v1450
      %1484 = vst.msk [vmem:[%s231 + $0x14] sm:$0xf] %vm1478, %v1451
      %1485 = vst.msk [vmem:[%s231 + $0x18] sm:$0xf] %vm1478, %v1452
      %1486 = vst.msk [vmem:[%s231 + $0x1c] sm:$0xf] %vm1478, %v1453
      %1487 = vst.msk [vmem:[%s231 + $0x20] sm:$0xf] %vm1478, %v1454
      %1488 = vst.msk [vmem:[%s231 + $0x24] sm:$0xf] %vm1478, %v1455
      %1489 = vst.msk [vmem:[%s231 + $0x28] sm:$0xf] %vm1478, %v1456
      %1490 = vst.msk [vmem:[%s231 + $0x2c] sm:$0xf] %vm1478, %v1457
      %1491 = vst.msk [vmem:[%s231 + $0x30] sm:$0xf] %vm1478, %v1458
      %1492 = vst.msk [vmem:[%s231 + $0x34] sm:$0xf] %vm1478, %v1459
      %1493 = vst.msk [vmem:[%s231 + $0x38] sm:$0xf] %vm1478, %v1460
      %1494 = vst.msk [vmem:[%s231 + $0x3c] sm:$0xf] %vm1478, %v1461
      %1495 = vst.msk [vmem:[%s231 + $0x40] sm:$0xf] %vm1478, %v1462
      %1496 = vst.msk [vmem:[%s231 + $0x44] sm:$0xf] %vm1478, %v1463
      %1497 = vst.msk [vmem:[%s231 + $0x48] sm:$0xf] %vm1478, %v1464
      %1498 = vst.msk [vmem:[%s231 + $0x4c] sm:$0xf] %vm1478, %v1465
      %1499 = vst.msk [vmem:[%s231 + $0x50] sm:$0xf] %vm1478, %v1466
      %1500 = vst.msk [vmem:[%s231 + $0x54] sm:$0xf] %vm1478, %v1467
      %1501 = vst.msk [vmem:[%s231 + $0x58] sm:$0xf] %vm1478, %v1468
      %1502 = vst.msk [vmem:[%s231 + $0x5c] sm:$0xf] %vm1478, %v1469
      %1503 = vst.msk [vmem:[%s231 + $0x60] sm:$0xf] %vm1478, %v1470
      %1504 = vst.msk [vmem:[%s231 + $0x64] sm:$0xf] %vm1478, %v1471
      %1505 = vst.msk [vmem:[%s231 + $0x68] sm:$0xf] %vm1478, %v1472
      %1506 = vst.msk [vmem:[%s231 + $0x6c] sm:$0xf] %vm1478, %v1473
      %1507 = vst.msk [vmem:[%s231 + $0x70] sm:$0xf] %vm1478, %v1474
      %1508 = vst.msk [vmem:[%s231 + $0x74] sm:$0xf] %vm1478, %v1475
      %1509 = vst.msk [vmem:[%s231 + $0x78] sm:$0xf] %vm1478, %v1476
      %1510 = vst.msk [vmem:[%s231 + $0x7c] sm:$0xf] %vm1478, %v1477
      %v1511 = vsel %vm1025, %v1367, 0.0
      %v1512 = vsel %vm1025, %v1369, 0.0
      %v1513 = vadd.f32 %v1511, %v1512
      %v1514 = vsel %vm1025, %v1372, 0.0
      %v1515 = vadd.f32 %v1513, %v1514
      %v1516 = vsel %vm1025, %v1374, 0.0
      %v1517 = vadd.f32 %v1515, %v1516
      %v1518 = vsel %vm1025, %v1377, 0.0
      %v1519 = vadd.f32 %v1517, %v1518
      %v1520 = vsel %vm1025, %v1379, 0.0
      %v1521 = vadd.f32 %v1519, %v1520
      %v1522 = vsel %vm1025, %v1382, 0.0
      %v1523 = vadd.f32 %v1521, %v1522
      %v1524 = vsel %vm1025, %v1384, 0.0
      %v1525 = vadd.f32 %v1523, %v1524
      %v1526 = vsel %vm1025, %v1387, 0.0
      %v1527 = vadd.f32 %v1525, %v1526
      %v1528 = vsel %vm1025, %v1389, 0.0
      %v1529 = vadd.f32 %v1527, %v1528
      %v1530 = vsel %vm1025, %v1392, 0.0
      %v1531 = vadd.f32 %v1529, %v1530
      %v1532 = vsel %vm1025, %v1394, 0.0
      %v1533 = vadd.f32 %v1531, %v1532
      %v1534 = vsel %vm1025, %v1397, 0.0
      %v1535 = vadd.f32 %v1533, %v1534
      %v1536 = vsel %vm1025, %v1399, 0.0
      %v1537 = vadd.f32 %v1535, %v1536
      %v1538 = vsel %vm1025, %v1402, 0.0
      %v1539 = vadd.f32 %v1537, %v1538
      %v1540 = vsel %vm1025, %v1404, 0.0
      %v1541 = vadd.f32 %v1539, %v1540
      %v1542 = vsel %vm1025, %v1407, 0.0
      %v1543 = vadd.f32 %v1541, %v1542
      %v1544 = vsel %vm1025, %v1409, 0.0
      %v1545 = vadd.f32 %v1543, %v1544
      %v1546 = vsel %vm1025, %v1412, 0.0
      %v1547 = vadd.f32 %v1545, %v1546
      %v1548 = vsel %vm1025, %v1414, 0.0
      %v1549 = vadd.f32 %v1547, %v1548
      %v1550 = vsel %vm1025, %v1417, 0.0
      %v1551 = vadd.f32 %v1549, %v1550
      %v1552 = vsel %vm1025, %v1419, 0.0
      %v1553 = vadd.f32 %v1551, %v1552
      %v1554 = vsel %vm1025, %v1422, 0.0
      %v1555 = vadd.f32 %v1553, %v1554
      %v1556 = vsel %vm1025, %v1424, 0.0
      %v1557 = vadd.f32 %v1555, %v1556
      %v1558 = vsel %vm1025, %v1427, 0.0
      %v1559 = vadd.f32 %v1557, %v1558
      %v1560 = vsel %vm1025, %v1429, 0.0
      %v1561 = vadd.f32 %v1559, %v1560
      %v1562 = vsel %vm1025, %v1432, 0.0
      %v1563 = vadd.f32 %v1561, %v1562
      %v1564 = vsel %vm1025, %v1434, 0.0
      %v1565 = vadd.f32 %v1563, %v1564
      %v1566 = vsel %vm1025, %v1437, 0.0
      %v1567 = vadd.f32 %v1565, %v1566
      %v1568 = vsel %vm1025, %v1439, 0.0
      %v1569 = vadd.f32 %v1567, %v1568
      %v1570 = vsel %vm1025, %v1442, 0.0
      %v1571 = vadd.f32 %v1569, %v1570
      %v1572 = vsel %vm1025, %v1444, 0.0
      %v1573 = vadd.f32 %v1571, %v1572
      %v1574 = vrot.slane %v1573, 4
      %v1575 = vadd.f32 %v1573, %v1574
      %v1576 = vrot.slane %v1575, 2
      %v1577 = vadd.f32 %v1575, %v1576
      %v1578 = vrot.slane %v1577, 1
      %v1579 = vadd.f32 %v1577, %v1578
      %v1580 = vmul.f32 %v1367, %v1367
      %v1581 = vmul.f32 %v1369, %v1369
      %v1582 = vmul.f32 %v1372, %v1372
      %v1583 = vmul.f32 %v1374, %v1374
      %v1584 = vmul.f32 %v1377, %v1377
      %v1585 = vmul.f32 %v1379, %v1379
      %v1586 = vmul.f32 %v1382, %v1382
      %v1587 = vmul.f32 %v1384, %v1384
      %v1588 = vmul.f32 %v1387, %v1387
      %v1589 = vmul.f32 %v1389, %v1389
      %v1590 = vmul.f32 %v1392, %v1392
      %v1591 = vmul.f32 %v1394, %v1394
      %v1592 = vmul.f32 %v1397, %v1397
      %v1593 = vmul.f32 %v1399, %v1399
      %v1594 = vmul.f32 %v1402, %v1402
      %v1595 = vmul.f32 %v1404, %v1404
      %v1596 = vmul.f32 %v1407, %v1407
      %v1597 = vmul.f32 %v1409, %v1409
      %v1598 = vmul.f32 %v1412, %v1412
      %v1599 = vmul.f32 %v1414, %v1414
      %v1600 = vmul.f32 %v1417, %v1417
      %v1601 = vmul.f32 %v1419, %v1419
      %v1602 = vmul.f32 %v1422, %v1422
      %v1603 = vmul.f32 %v1424, %v1424
      %v1604 = vmul.f32 %v1427, %v1427
      %v1605 = vmul.f32 %v1429, %v1429
      %v1606 = vmul.f32 %v1432, %v1432
      %v1607 = vmul.f32 %v1434, %v1434
      %v1608 = vmul.f32 %v1437, %v1437
      %v1609 = vmul.f32 %v1439, %v1439
      %v1610 = vmul.f32 %v1442, %v1442
      %v1611 = vmul.f32 %v1444, %v1444
      %v1612 = vsel %vm1025, %v1580, 0.0
      %v1613 = vsel %vm1025, %v1581, 0.0
      %v1614 = vadd.f32 %v1612, %v1613
      %v1615 = vsel %vm1025, %v1582, 0.0
      %v1616 = vadd.f32 %v1614, %v1615
      %v1617 = vsel %vm1025, %v1583, 0.0
      %v1618 = vadd.f32 %v1616, %v1617
      %v1619 = vsel %vm1025, %v1584, 0.0
      %v1620 = vadd.f32 %v1618, %v1619
      %v1621 = vsel %vm1025, %v1585, 0.0
      %v1622 = vadd.f32 %v1620, %v1621
      %v1623 = vsel %vm1025, %v1586, 0.0
      %v1624 = vadd.f32 %v1622, %v1623
      %v1625 = vsel %vm1025, %v1587, 0.0
      %v1626 = vadd.f32 %v1624, %v1625
      %v1627 = vsel %vm1025, %v1588, 0.0
      %v1628 = vadd.f32 %v1626, %v1627
      %v1629 = vsel %vm1025, %v1589, 0.0
      %v1630 = vadd.f32 %v1628, %v1629
      %v1631 = vsel %vm1025, %v1590, 0.0
      %v1632 = vadd.f32 %v1630, %v1631
      %v1633 = vsel %vm1025, %v1591, 0.0
      %v1634 = vadd.f32 %v1632, %v1633
      %v1635 = vsel %vm1025, %v1592, 0.0
      %v1636 = vadd.f32 %v1634, %v1635
      %v1637 = vsel %vm1025, %v1593, 0.0
      %v1638 = vadd.f32 %v1636, %v1637
      %v1639 = vsel %vm1025, %v1594, 0.0
      %v1640 = vadd.f32 %v1638, %v1639
      %v1641 = vsel %vm1025, %v1595, 0.0
      %v1642 = vadd.f32 %v1640, %v1641
      %v1643 = vsel %vm1025, %v1596, 0.0
      %v1644 = vadd.f32 %v1642, %v1643
      %v1645 = vsel %vm1025, %v1597, 0.0
      %v1646 = vadd.f32 %v1644, %v1645
      %v1647 = vsel %vm1025, %v1598, 0.0
      %v1648 = vadd.f32 %v1646, %v1647
      %v1649 = vsel %vm1025, %v1599, 0.0
      %v1650 = vadd.f32 %v1648, %v1649
      %v1651 = vsel %vm1025, %v1600, 0.0
      %v1652 = vadd.f32 %v1650, %v1651
      %v1653 = vsel %vm1025, %v1601, 0.0
      %v1654 = vadd.f32 %v1652, %v1653
      %v1655 = vsel %vm1025, %v1602, 0.0
      %v1656 = vadd.f32 %v1654, %v1655
      %v1657 = vsel %vm1025, %v1603, 0.0
      %v1658 = vadd.f32 %v1656, %v1657
      %v1659 = vsel %vm1025, %v1604, 0.0
      %v1660 = vadd.f32 %v1658, %v1659
      %v1661 = vsel %vm1025, %v1605, 0.0
      %v1662 = vadd.f32 %v1660, %v1661
      %v1663 = vsel %vm1025, %v1606, 0.0
      %v1664 = vadd.f32 %v1662, %v1663
      %v1665 = vsel %vm1025, %v1607, 0.0
      %v1666 = vadd.f32 %v1664, %v1665
      %v1667 = vsel %vm1025, %v1608, 0.0
      %v1668 = vadd.f32 %v1666, %v1667
      %v1669 = vsel %vm1025, %v1609, 0.0
      %v1670 = vadd.f32 %v1668, %v1669
      %v1671 = vsel %vm1025, %v1610, 0.0
      %v1672 = vadd.f32 %v1670, %v1671
      %v1673 = vsel %vm1025, %v1611, 0.0
      %v1674 = vadd.f32 %v1672, %v1673
      %v1675 = vrot.slane %v1674, 4
      %v1676 = vadd.f32 %v1674, %v1675
      %v1677 = vrot.slane %v1676, 2
      %v1678 = vadd.f32 %v1676, %v1677
      %v1679 = vrot.slane %v1678, 1
      %v1680 = vadd.f32 %v1678, %v1679
      %vm1681 = vcmask 1040384
      %v1682 = vsel %vm1681, %v1579, %v1680
      %vm1683 = vcmask 25600
      %1684 = vst.msk [vmem:[%s235] sm:$0x3] %vm1683, %v1682
      %p1685 = scmp.lt.s32.totalorder %s17, 1
      %s1686 = scalar_select %p1685, %s17, 1
      %s1687 = smul.addr %s1686, 32
      %s1688 = smul.addr %s1687, 4
      %s1689 = scalar_lea.vmem %s4, %s1688
      %p1690 = scmp.lt.s32.totalorder %s17, 1
      %s1691 = scalar_select %p1690, %s17, 1
      %s1692 = smul.addr %s1691, 2
      %s1693 = scalar_lea.vmem %s5, %s1692
      // Predicated region
      $region37: #{upsample_block_forward.4} parent=35 // pred_check
        %p1694 = pneg %p124
      $region38: #{upsample_block_forward.4} parent=35 // pred_check_branch
        %1696 = sbr.rel (%p1694) target = $region40
      $region39: #{upsample_block_forward.4} parent=35 // pred_region
        _
      $region40: #{upsample_block_forward.4} parent=35 // pred_fallthru
        _
      // Predicated region
      $region41: #{upsample_block_forward.4} parent=35 // pred_check
        %p1697 = pneg %p150
      $region42: #{upsample_block_forward.4} parent=35 // pred_check_branch
        %1699 = sbr.rel (%p1697) target = $region44
      $region43: #{upsample_block_forward.4} parent=35 // pred_region
        _
      $region44: #{upsample_block_forward.4} parent=35 // pred_fallthru
        _
    $region36: #{upsample_block_forward.4} parent=5 // pred_fallthru
      _
    %p1700 = scmp.le.s32.totalorder 2, %s12
    // Predicated region
    $region45: #{upsample_block_forward.4} parent=5 // pred_check
      %p1701 = pneg %p1700
    $region46: #{upsample_block_forward.4} parent=5 // pred_check_branch
      %1703 = sbr.rel (%p1701) target = $region48
    $region47: #{upsample_block_forward.4} parent=5 // pred_region
      %s1704 = ssub.s32 %s12, 2
      // Predicated region
      $region49: #{upsample_block_forward.4} parent=47 // pred_check
        %p1705 = pneg %p130
      $region50: #{upsample_block_forward.4} parent=47 // pred_check_branch
        %1707 = sbr.rel (%p1705) target = $region52
      $region51: #{upsample_block_forward.4} parent=47 // pred_region
        %p1708 = scmp.lt.s32.totalorder %s18, 1
        %s1709 = scalar_select %p1708, %s18, 1
        %s1710 = smul.addr %s1709, 32
        %s1711 = smul.addr %s1710, 4
        %s1712 = scalar_lea.vmem %s4, %s1711
      $region52: #{upsample_block_forward.4} parent=47 // pred_fallthru
        _
      // Predicated region
      $region53: #{upsample_block_forward.4} parent=47 // pred_check
        %p1713 = pneg %p156
      $region54: #{upsample_block_forward.4} parent=47 // pred_check_branch
        %1715 = sbr.rel (%p1713) target = $region56
      $region55: #{upsample_block_forward.4} parent=47 // pred_region
        %p1716 = scmp.lt.s32.totalorder %s18, 1
        %s1717 = scalar_select %p1716, %s18, 1
        %s1718 = smul.addr %s1717, 2
        %s1719 = scalar_lea.vmem %s5, %s1718
      $region56: #{upsample_block_forward.4} parent=47 // pred_fallthru
        _
    $region48: #{upsample_block_forward.4} parent=5 // pred_fallthru
      _
  $region6: #{upsample_block_forward.4} parent=0 // loop_footer
    %s16 = sadd.s32 1, %s12
  $region7: #{upsample_block_forward.4} parent=0 // loop_footer_branch
    %11 = sbr.rel target = $region3
  $region8: #{upsample_block_forward.4} parent=0 // loop_exit
    _

// kernel: upsample_block_forward.3
$region0: #{upsample_block_forward.3}
  #allocation0 [shape = 'u32[]', space=smem, size = 0x4, offset = 0x4, fixed_abs, tag = 'smem constant byte address 0x4 - core index']
  #allocation1 [shape = 'u32[72,128]{1,0:T(1,128)}', space=vmem, size = 0x9000, scoped, tag = 'internal scratch']
  %s0 = inlined_call_operand.vmem [shape: f32[2,8,8,2], index: 0, kind: input, shape index: {}]
  %s1 = inlined_call_operand.vmem [shape: f32[2,16,8,4], index: 1, kind: input, shape index: {}]
  %s2 = inlined_call_operand.vmem [shape: bf16[18,4], index: 2, kind: input, shape index: {}]
  %s3 = inlined_call_operand.vmem [shape: bf16[18,4], index: 3, kind: input, shape index: {}]
  %s4 = inlined_call_operand.vmem [shape: bf16[2,128,8], index: 4, kind: output, shape index: {0}]
  %s5 = inlined_call_operand.vmem [shape: f32[2,2,4], index: 5, kind: output, shape index: {1}]
  %6 = xla_tuple %s4, %s5
  %s7 = sld [smem:[#allocation0]]
  $region57: #{upsample_block_forward.3} parent=0
    _
  %s9 = ssub.s32 1, %s7
  %s10 = scalar_select 0, %s9, %s7
  loop: start=0, step=1, limit=4
  $region2: #{upsample_block_forward.3} parent=0 // loop_pre_header
    _
  $region3: #{upsample_block_forward.3} parent=0 // loop_header
    %s12 = sphi 0, %s16
    %p13 = scmp.ge.s32.totalorder %s12, 4
    %s22 = sphi 0, %s24
    %s25 = sphi 0, %s22
    %s26 = sphi 0, %s25
    %s42 = sphi 0, %s26
    %s48 = sphi 0, %s50
    %s51 = sphi 0, %s48
    %s52 = sphi 0, %s51
    %s68 = sphi 0, %s52
    %s72 = sphi 0, %s72
    %s74 = sphi 0, %s72
    %s75 = sphi 0, %s74
    %s89 = sphi 0, %s75
    %s93 = sphi 0, %s93
    %s95 = sphi 0, %s93
    %s96 = sphi 0, %s95
    %s110 = sphi 0, %s96
    %s116 = sphi 0, %s118
    %s119 = sphi 0, %s116
    %s120 = sphi 0, %s119
    %s136 = sphi 0, %s120
    %s142 = sphi 0, %s144
    %s145 = sphi 0, %s142
    %s146 = sphi 0, %s145
    %s162 = sphi 0, %s146
  $region4: #{upsample_block_forward.3} parent=0 // loop_header_branch
    %15 = sbr.rel (%p13) target = $region8
  $region5: #{upsample_block_forward.3} parent=0 // loop_body
    %s17 = ssub.s32 %s12, 1
    %s18 = ssub.s32 %s12, 2
    %s19 = sadd.s32 %s12, 1
    %s20 = ssub.s32 %s12, %s19
    %p21 = scmp.eq.s32.totalorder %s20, 0
    %s23 = sadd.s32 %s22, 1
    %s24 = scalar_select %p21, %s22, %s23
    %p27 = pneg %p21
    %p28 = scmp.eq.s32.totalorder %s12, 1
    %p29 = por %p27, %p28
    %p30 = scmp.ne.s32.totalorder %s22, %s25
    %p31 = scmp.eq.s32.totalorder %s12, 0
    %p32 = por %p30, %p31
    %p33 = scmp.ne.s32.totalorder %s22, %s25
    %p34 = scmp.eq.s32.totalorder %s17, 1
    %p35 = por %p33, %p34
    %p36 = scmp.ne.s32.totalorder %s25, %s26
    %p37 = scmp.eq.s32.totalorder %s17, 0
    %p38 = por %p36, %p37
    %p39 = scmp.ne.s32.totalorder %s25, %s26
    %p40 = scmp.eq.s32.totalorder %s18, 1
    %p41 = por %p39, %p40
    %p43 = scmp.ne.s32.totalorder %s26, %s42
    %p44 = scmp.eq.s32.totalorder %s18, 0
    %p45 = por %p43, %p44
    %s46 = ssub.s32 %s12, %s19
    %p47 = scmp.eq.s32.totalorder %s46, 0
    %s49 = sadd.s32 %s48, 1
    %s50 = scalar_select %p47, %s48, %s49
    %p53 = pneg %p47
    %p54 = scmp.eq.s32.totalorder %s12, 1
    %p55 = por %p53, %p54
    %p56 = scmp.ne.s32.totalorder %s48, %s51
    %p57 = scmp.eq.s32.totalorder %s12, 0
    %p58 = por %p56, %p57
    %p59 = scmp.ne.s32.totalorder %s48, %s51
    %p60 = scmp.eq.s32.totalorder %s17, 1
    %p61 = por %p59, %p60
    %p62 = scmp.ne.s32.totalorder %s51, %s52
    %p63 = scmp.eq.s32.totalorder %s17, 0
    %p64 = por %p62, %p63
    %p65 = scmp.ne.s32.totalorder %s51, %s52
    %p66 = scmp.eq.s32.totalorder %s18, 1
    %p67 = por %p65, %p66
    %p69 = scmp.ne.s32.totalorder %s52, %s68
    %p70 = scmp.eq.s32.totalorder %s18, 0
    %p71 = por %p69, %p70
    %s73 = sadd.s32 %s72, 1
    %p76 = scmp.eq.s32.totalorder %s12, 1
    %p77 = scmp.ne.s32.totalorder %s72, %s74
    %p78 = scmp.eq.s32.totalorder %s12, 0
    %p79 = por %p77, %p78
    %p80 = scmp.ne.s32.totalorder %s72, %s74
    %p81 = scmp.eq.s32.totalorder %s17, 1
    %p82 = por %p80, %p81
    %p83 = scmp.ne.s32.totalorder %s74, %s75
    %p84 = scmp.eq.s32.totalorder %s17, 0
    %p85 = por %p83, %p84
    %p86 = scmp.ne.s32.totalorder %s74, %s75
    %p87 = scmp.eq.s32.totalorder %s18, 1
    %p88 = por %p86, %p87
    %p90 = scmp.ne.s32.totalorder %s75, %s89
    %p91 = scmp.eq.s32.totalorder %s18, 0
    %p92 = por %p90, %p91
    %s94 = sadd.s32 %s93, 1
    %p97 = scmp.eq.s32.totalorder %s12, 1
    %p98 = scmp.ne.s32.totalorder %s93, %s95
    %p99 = scmp.eq.s32.totalorder %s12, 0
    %p100 = por %p98, %p99
    %p101 = scmp.ne.s32.totalorder %s93, %s95
    %p102 = scmp.eq.s32.totalorder %s17, 1
    %p103 = por %p101, %p102
    %p104 = scmp.ne.s32.totalorder %s95, %s96
    %p105 = scmp.eq.s32.totalorder %s17, 0
    %p106 = por %p104, %p105
    %p107 = scmp.ne.s32.totalorder %s95, %s96
    %p108 = scmp.eq.s32.totalorder %s18, 1
    %p109 = por %p107, %p108
    %p111 = scmp.ne.s32.totalorder %s96, %s110
    %p112 = scmp.eq.s32.totalorder %s18, 0
    %p113 = por %p111, %p112
    %s114 = ssub.s32 %s12, %s19
    %p115 = scmp.eq.s32.totalorder %s114, 0
    %s117 = sadd.s32 %s116, 1
    %s118 = scalar_select %p115, %s116, %s117
    %p121 = pneg %p115
    %p122 = scmp.eq.s32.totalorder %s12, 1
    %p123 = por %p121, %p122
    %p124 = scmp.ne.s32.totalorder %s116, %s119
    %p125 = scmp.eq.s32.totalorder %s12, 0
    %p126 = por %p124, %p125
    %p127 = scmp.ne.s32.totalorder %s116, %s119
    %p128 = scmp.eq.s32.totalorder %s17, 1
    %p129 = por %p127, %p128
    %p130 = scmp.ne.s32.totalorder %s119, %s120
    %p131 = scmp.eq.s32.totalorder %s17, 0
    %p132 = por %p130, %p131
    %p133 = scmp.ne.s32.totalorder %s119, %s120
    %p134 = scmp.eq.s32.totalorder %s18, 1
    %p135 = por %p133, %p134
    %p137 = scmp.ne.s32.totalorder %s120, %s136
    %p138 = scmp.eq.s32.totalorder %s18, 0
    %p139 = por %p137, %p138
    %s140 = ssub.s32 %s12, %s19
    %p141 = scmp.eq.s32.totalorder %s140, 0
    %s143 = sadd.s32 %s142, 1
    %s144 = scalar_select %p141, %s142, %s143
    %p147 = pneg %p141
    %p148 = scmp.eq.s32.totalorder %s12, 1
    %p149 = por %p147, %p148
    %p150 = scmp.ne.s32.totalorder %s142, %s145
    %p151 = scmp.eq.s32.totalorder %s12, 0
    %p152 = por %p150, %p151
    %p153 = scmp.ne.s32.totalorder %s142, %s145
    %p154 = scmp.eq.s32.totalorder %s17, 1
    %p155 = por %p153, %p154
    %p156 = scmp.ne.s32.totalorder %s145, %s146
    %p157 = scmp.eq.s32.totalorder %s17, 0
    %p158 = por %p156, %p157
    %p159 = scmp.ne.s32.totalorder %s145, %s146
    %p160 = scmp.eq.s32.totalorder %s18, 1
    %p161 = por %p159, %p160
    %p163 = scmp.ne.s32.totalorder %s146, %s162
    %p164 = scmp.eq.s32.totalorder %s18, 0
    %p165 = por %p163, %p164
    %p166 = scmp.le.s32.totalorder 1, %s12
    %p167 = scmp.lt.s32.totalorder %s12, 3
    %p168 = pnand %p166, %p167
    %p169 = pneg %p168
    // Predicated region
    $region9: #{upsample_block_forward.3} parent=5 // pred_check
      _
    $region10: #{upsample_block_forward.3} parent=5 // pred_check_branch
      %171 = sbr.rel (%p168) target = $region12
    $region11: #{upsample_block_forward.3} parent=5 // pred_region
      %s172 = ssub.s32 %s12, 1
      // Predicated region
      $region13: #{upsample_block_forward.3} parent=11 // pred_check
        %p173 = pneg %p85
      $region14: #{upsample_block_forward.3} parent=11 // pred_check_branch
        %175 = sbr.rel (%p173) target = $region16
      $region15: #{upsample_block_forward.3} parent=11 // pred_region
        _
      $region16: #{upsample_block_forward.3} parent=11 // pred_fallthru
        _
      // Predicated region
      $region17: #{upsample_block_forward.3} parent=11 // pred_check
        %p176 = pneg %p106
      $region18: #{upsample_block_forward.3} parent=11 // pred_check_branch
        %178 = sbr.rel (%p176) target = $region20
      $region19: #{upsample_block_forward.3} parent=11 // pred_region
        _
      $region20: #{upsample_block_forward.3} parent=11 // pred_fallthru
        _
    $region12: #{upsample_block_forward.3} parent=5 // pred_fallthru
      _
    %p179 = scmp.lt.s32.totalorder %s12, 2
    // Predicated region
    $region21: #{upsample_block_forward.3} parent=5 // pred_check
      %p180 = pneg %p179
    $region22: #{upsample_block_forward.3} parent=5 // pred_check_branch
      %182 = sbr.rel (%p180) target = $region24
    $region23: #{upsample_block_forward.3} parent=5 // pred_region
      // Predicated region
      $region25: #{upsample_block_forward.3} parent=23 // pred_check
        %p183 = pneg %p32
      $region26: #{upsample_block_forward.3} parent=23 // pred_check_branch
        %185 = sbr.rel (%p183) target = $region28
      $region27: #{upsample_block_forward.3} parent=23 // pred_region
        %p186 = scmp.lt.s32.totalorder %s12, 1
        %s187 = scalar_select %p186, %s12, 1
        %s188 = smul.addr %s187, 8
        %s189 = smul.addr %s188, 8
        %s190 = scalar_lea.vmem %s0, %s189
      $region28: #{upsample_block_forward.3} parent=23 // pred_fallthru
        _
      // Predicated region
      $region29: #{upsample_block_forward.3} parent=23 // pred_check
        %p191 = pneg %p58
      $region30: #{upsample_block_forward.3} parent=23 // pred_check_branch
        %193 = sbr.rel (%p191) target = $region32
      $region31: #{upsample_block_forward.3} parent=23 // pred_region
        %p194 = scmp.lt.s32.totalorder %s12, 1
        %s195 = scalar_select %p194, %s12, 1
        %s196 = smul.addr %s195, 16
        %s197 = smul.addr %s196, 8
        %s198 = scalar_lea.vmem %s1, %s197
      $region32: #{upsample_block_forward.3} parent=23 // pred_fallthru
        _
    $region24: #{upsample_block_forward.3} parent=5 // pred_fallthru
      _
    %p199 = scmp.le.s32.totalorder 1, %s12
    %p200 = scmp.lt.s32.totalorder %s12, 3
    %p201 = pnand %p199, %p200
    %p202 = pneg %p201
    // Predicated region
    $region33: #{upsample_block_forward.3} parent=5 // pred_check
      _
    $region34: #{upsample_block_forward.3} parent=5 // pred_check_branch
      %204 = sbr.rel (%p201) target = $region36
    $region35: #{upsample_block_forward.3} parent=5 // pred_region
      %s205 = ssub.s32 %s12, 1
      %p206 = scmp.lt.s32.totalorder %s17, 1
      %s207 = scalar_select %p206, %s17, 1
      %s208 = smul.addr %s207, 8
      %s209 = smul.addr %s208, 8
      %s210 = scalar_lea.vmem %s0, %s209
      %p211 = pneg %p38
      %p212 = pneg %p35
      %p213 = scmp.lt.s32.totalorder %s17, 1
      %s214 = scalar_select %p213, %s17, 1
      %s215 = smul.addr %s214, 16
      %s216 = smul.addr %s215, 8
      %s217 = scalar_lea.vmem %s1, %s216
      %p218 = pneg %p64
      %p219 = pneg %p61
      %p220 = pneg %p85
      %p221 = pneg %p82
      %p222 = pneg %p106
      %p223 = pneg %p103
      %p224 = pneg %p132
      %p225 = pneg %p129
      %p226 = scmp.lt.s32.totalorder %s17, 1
      %s227 = scalar_select %p226, %s17, 1
      %s228 = smul.addr %s227, 16
      %s229 = smul.addr %s228, 4
      %s230 = scalar_lea.vmem %s4, %s229
      %p231 = pneg %p158
      %p232 = pneg %p155
      %p233 = scmp.lt.s32.totalorder %s17, 1
      %s234 = scalar_select %p233, %s17, 1
      %s235 = smul.addr %s234, 2
      %s236 = scalar_lea.vmem %s5, %s235
      %p237 = scmp.lt.s32.totalorder %s17, 1
      %s238 = scalar_select %p237, %s17, 1
      %s239 = smul.addr %s238, 8
      %s240 = smul.addr %s239, 8
      %s241 = scalar_lea.vmem %s0, %s240
      %p242 = scmp.lt.s32.totalorder %s17, 1
      %s243 = scalar_select %p242, %s17, 1
      %s244 = smul.addr %s243, 16
      %s245 = smul.addr %s244, 8
      %s246 = scalar_lea.vmem %s1, %s245
      %p247 = scmp.lt.s32.totalorder %s17, 1
      %s248 = scalar_select %p247, %s17, 1
      %s249 = smul.addr %s248, 16
      %s250 = smul.addr %s249, 4
      %s251 = scalar_lea.vmem %s4, %s250
      %p252 = scmp.lt.s32.totalorder %s17, 1
      %s253 = scalar_select %p252, %s17, 1
      %s254 = smul.addr %s253, 2
      %s255 = scalar_lea.vmem %s5, %s254
      %v257 = vld [vmem:[%s241] sm:$0xff]
      %v258 = vld [vmem:[%s241 + $0x8] sm:$0xff]
      %v259 = vld [vmem:[%s241 + $0x10] sm:$0xff]
      %v260 = vld [vmem:[%s241 + $0x18] sm:$0xff]
      %v261 = vld [vmem:[%s241 + $0x20] sm:$0xff]
      %v262 = vld [vmem:[%s241 + $0x28] sm:$0xff]
      %v263 = vld [vmem:[%s241 + $0x30] sm:$0xff]
      %v264 = vld [vmem:[%s241 + $0x38] sm:$0xff]
      %v265 = vmul.f32 %v257, 0.25
      %v266 = vmul.f32 %v258, 0.25
      %v267 = vmul.f32 %v259, 0.25
      %v268 = vmul.f32 %v260, 0.25
      %v269 = vmul.f32 %v261, 0.25
      %v270 = vmul.f32 %v262, 0.25
      %v271 = vmul.f32 %v263, 0.25
      %v272 = vmul.f32 %v257, 0.75
      %v273 = vmul.f32 %v258, 0.75
      %v274 = vmul.f32 %v259, 0.75
      %v275 = vmul.f32 %v260, 0.75
      %v276 = vmul.f32 %v261, 0.75
      %v277 = vmul.f32 %v262, 0.75
      %v278 = vmul.f32 %v263, 0.75
      %v279 = vmul.f32 %v264, 0.75
      %v280 = vadd.f32 %v265, %v272
      %v281 = vadd.f32 %v265, %v273
      %v282 = vadd.f32 %v266, %v274
      %v283 = vadd.f32 %v267, %v275
      %v284 = vadd.f32 %v268, %v276
      %v285 = vadd.f32 %v269, %v277
      %v286 = vadd.f32 %v270, %v278
      %v287 = vadd.f32 %v271, %v279
      %v288 = vmul.f32 %v264, 0.25
      %v289 = vadd.f32 %v272, %v266
      %v290 = vadd.f32 %v273, %v267
      %v291 = vadd.f32 %v274, %v268
      %v292 = vadd.f32 %v275, %v269
      %v293 = vadd.f32 %v276, %v270
      %v294 = vadd.f32 %v277, %v271
      %v295 = vadd.f32 %v278, %v288
      %v296 = vadd.f32 %v279, %v288
      %v313 = vrot.slane %v280, 7
      %v314 = vrot.slane %v289, 7
      %v315 = vrot.slane %v281, 7
      %v316 = vrot.slane %v290, 7
      %v317 = vrot.slane %v282, 7
      %v318 = vrot.slane %v291, 7
      %v319 = vrot.slane %v283, 7
      %v320 = vrot.slane %v292, 7
      %v321 = vrot.slane %v284, 7
      %v322 = vrot.slane %v293, 7
      %v323 = vrot.slane %v285, 7
      %v324 = vrot.slane %v294, 7
      %v325 = vrot.slane %v286, 7
      %v326 = vrot.slane %v295, 7
      %v327 = vrot.slane %v287, 7
      %v328 = vrot.slane %v296, 7
      %vm345 = vcmask 1040384
      %v346 = vsel %vm345, %v280, %v313
      %v347 = vsel %vm345, %v289, %v314
      %v348 = vsel %vm345, %v281, %v315
      %v349 = vsel %vm345, %v290, %v316
      %v350 = vsel %vm345, %v282, %v317
      %v351 = vsel %vm345, %v291, %v318
      %v352 = vsel %vm345, %v283, %v319
      %v353 = vsel %vm345, %v292, %v320
      %v354 = vsel %vm345, %v284, %v321
      %v355 = vsel %vm345, %v293, %v322
      %v356 = vsel %vm345, %v285, %v323
      %v357 = vsel %vm345, %v294, %v324
      %v358 = vsel %vm345, %v286, %v325
      %v359 = vsel %vm345, %v295, %v326
      %v360 = vsel %vm345, %v287, %v327
      %v361 = vsel %vm345, %v296, %v328
      %v362 = vrot.slane %v280, 1
      %v363 = vrot.slane %v289, 1
      %v364 = vrot.slane %v281, 1
      %v365 = vrot.slane %v290, 1
      %v366 = vrot.slane %v282, 1
      %v367 = vrot.slane %v291, 1
      %v368 = vrot.slane %v283, 1
      %v369 = vrot.slane %v292, 1
      %v370 = vrot.slane %v284, 1
      %v371 = vrot.slane %v293, 1
      %v372 = vrot.slane %v285, 1
      %v373 = vrot.slane %v294, 1
      %v374 = vrot.slane %v286, 1
      %v375 = vrot.slane %v295, 1
      %v376 = vrot.slane %v287, 1
      %v377 = vrot.slane %v296, 1
      %vm394 = vcmask 1046528
      %v395 = vsel %vm394, %v362, %v280
      %v396 = vsel %vm394, %v363, %v289
      %v397 = vsel %vm394, %v364, %v281
      %v398 = vsel %vm394, %v365, %v290
      %v399 = vsel %vm394, %v366, %v282
      %v400 = vsel %vm394, %v367, %v291
      %v401 = vsel %vm394, %v368, %v283
      %v402 = vsel %vm394, %v369, %v292
      %v403 = vsel %vm394, %v370, %v284
      %v404 = vsel %vm394, %v371, %v293
      %v405 = vsel %vm394, %v372, %v285
      %v406 = vsel %vm394, %v373, %v294
      %v407 = vsel %vm394, %v374, %v286
      %v408 = vsel %vm394, %v375, %v295
      %v409 = vsel %vm394, %v376, %v287
      %v410 = vsel %vm394, %v377, %v296
      %v411 = vmul.f32 %v346, 0.25
      %v412 = vmul.f32 %v347, 0.25
      %v413 = vmul.f32 %v348, 0.25
      %v414 = vmul.f32 %v349, 0.25
      %v415 = vmul.f32 %v350, 0.25
      %v416 = vmul.f32 %v351, 0.25
      %v417 = vmul.f32 %v352, 0.25
      %v418 = vmul.f32 %v353, 0.25
      %v419 = vmul.f32 %v354, 0.25
      %v420 = vmul.f32 %v355, 0.25
      %v421 = vmul.f32 %v356, 0.25
      %v422 = vmul.f32 %v357, 0.25
      %v423 = vmul.f32 %v358, 0.25
      %v424 = vmul.f32 %v359, 0.25
      %v425 = vmul.f32 %v360, 0.25
      %v426 = vmul.f32 %v361, 0.25
      %v427 = vmul.f32 %v280, 0.75
      %v428 = vmul.f32 %v289, 0.75
      %v429 = vmul.f32 %v281, 0.75
      %v430 = vmul.f32 %v290, 0.75
      %v431 = vmul.f32 %v282, 0.75
      %v432 = vmul.f32 %v291, 0.75
      %v433 = vmul.f32 %v283, 0.75
      %v434 = vmul.f32 %v292, 0.75
      %v435 = vmul.f32 %v284, 0.75
      %v436 = vmul.f32 %v293, 0.75
      %v437 = vmul.f32 %v285, 0.75
      %v438 = vmul.f32 %v294, 0.75
      %v439 = vmul.f32 %v286, 0.75
      %v440 = vmul.f32 %v295, 0.75
      %v441 = vmul.f32 %v287, 0.75
      %v442 = vmul.f32 %v296, 0.75
      %v443 = vadd.f32 %v411, %v427
      %v444 = vadd.f32 %v412, %v428
      %v445 = vadd.f32 %v413, %v429
      %v446 = vadd.f32 %v414, %v430
      %v447 = vadd.f32 %v415, %v431
      %v448 = vadd.f32 %v416, %v432
      %v449 = vadd.f32 %v417, %v433
      %v450 = vadd.f32 %v418, %v434
      %v451 = vadd.f32 %v419, %v435
      %v452 = vadd.f32 %v420, %v436
      %v453 = vadd.f32 %v421, %v437
      %v454 = vadd.f32 %v422, %v438
      %v455 = vadd.f32 %v423, %v439
      %v456 = vadd.f32 %v424, %v440
      %v457 = vadd.f32 %v425, %v441
      %v458 = vadd.f32 %v426, %v442
      %v459 = vmul.f32 %v395, 0.25
      %v460 = vmul.f32 %v396, 0.25
      %v461 = vmul.f32 %v397, 0.25
      %v462 = vmul.f32 %v398, 0.25
      %v463 = vmul.f32 %v399, 0.25
      %v464 = vmul.f32 %v400, 0.25
      %v465 = vmul.f32 %v401, 0.25
      %v466 = vmul.f32 %v402, 0.25
      %v467 = vmul.f32 %v403, 0.25
      %v468 = vmul.f32 %v404, 0.25
      %v469 = vmul.f32 %v405, 0.25
      %v470 = vmul.f32 %v406, 0.25
      %v471 = vmul.f32 %v407, 0.25
      %v472 = vmul.f32 %v408, 0.25
      %v473 = vmul.f32 %v409, 0.25
      %v474 = vmul.f32 %v410, 0.25
      %v475 = vadd.f32 %v427, %v459
      %v476 = vadd.f32 %v428, %v460
      %v477 = vadd.f32 %v429, %v461
      %v478 = vadd.f32 %v430, %v462
      %v479 = vadd.f32 %v431, %v463
      %v480 = vadd.f32 %v432, %v464
      %v481 = vadd.f32 %v433, %v465
      %v482 = vadd.f32 %v434, %v466
      %v483 = vadd.f32 %v435, %v467
      %v484 = vadd.f32 %v436, %v468
      %v485 = vadd.f32 %v437, %v469
      %v486 = vadd.f32 %v438, %v470
      %v487 = vadd.f32 %v439, %v471
      %v488 = vadd.f32 %v440, %v472
      %v489 = vadd.f32 %v441, %v473
      %v490 = vadd.f32 %v442, %v474
      %v491 = vpack.c.bf16 %v443, %v443
      %v492 = vpack.c.bf16 %v444, %v444
      %v493 = vpack.c.bf16 %v445, %v445
      %v494 = vpack.c.bf16 %v446, %v446
      %v495 = vpack.c.bf16 %v447, %v447
      %v496 = vpack.c.bf16 %v448, %v448
      %v497 = vpack.c.bf16 %v449, %v449
      %v498 = vpack.c.bf16 %v450, %v450
      %v499 = vpack.c.bf16 %v451, %v451
      %v500 = vpack.c.bf16 %v452, %v452
      %v501 = vpack.c.bf16 %v453, %v453
      %v502 = vpack.c.bf16 %v454, %v454
      %v503 = vpack.c.bf16 %v455, %v455
      %v504 = vpack.c.bf16 %v456, %v456
      %v505 = vpack.c.bf16 %v457, %v457
      %v506 = vpack.c.bf16 %v458, %v458
      %v507 = vpack.c.bf16 %v475, %v475
      %v508 = vpack.c.bf16 %v476, %v476
      %v509 = vpack.c.bf16 %v477, %v477
      %v510 = vpack.c.bf16 %v478, %v478
      %v511 = vpack.c.bf16 %v479, %v479
      %v512 = vpack.c.bf16 %v480, %v480
      %v513 = vpack.c.bf16 %v481, %v481
      %v514 = vpack.c.bf16 %v482, %v482
      %v515 = vpack.c.bf16 %v483, %v483
      %v516 = vpack.c.bf16 %v484, %v484
      %v517 = vpack.c.bf16 %v485, %v485
      %v518 = vpack.c.bf16 %v486, %v486
      %v519 = vpack.c.bf16 %v487, %v487
      %v520 = vpack.c.bf16 %v488, %v488
      %v521 = vpack.c.bf16 %v489, %v489
      %v522 = vpack.c.bf16 %v490, %v490
      %v523 = vld [vmem:[%s246] sm:$0xff]
      %v524 = vld [vmem:[%s246 + $0x8] sm:$0xff]
      %v525 = vld [vmem:[%s246 + $0x10] sm:$0xff]
      %v526 = vld [vmem:[%s246 + $0x18] sm:$0xff]
      %v527 = vld [vmem:[%s246 + $0x20] sm:$0xff]
      %v528 = vld [vmem:[%s246 + $0x28] sm:$0xff]
      %v529 = vld [vmem:[%s246 + $0x30] sm:$0xff]
      %v530 = vld [vmem:[%s246 + $0x38] sm:$0xff]
      %v531 = vld [vmem:[%s246 + $0x40] sm:$0xff]
      %v532 = vld [vmem:[%s246 + $0x48] sm:$0xff]
      %v533 = vld [vmem:[%s246 + $0x50] sm:$0xff]
      %v534 = vld [vmem:[%s246 + $0x58] sm:$0xff]
      %v535 = vld [vmem:[%s246 + $0x60] sm:$0xff]
      %v536 = vld [vmem:[%s246 + $0x68] sm:$0xff]
      %v537 = vld [vmem:[%s246 + $0x70] sm:$0xff]
      %v538 = vld [vmem:[%s246 + $0x78] sm:$0xff]
      %v539 = vpack.c.bf16 %v523, %v523
      %v540 = vpack.c.bf16 %v524, %v524
      %v541 = vpack.c.bf16 %v525, %v525
      %v542 = vpack.c.bf16 %v526, %v526
      %v543 = vpack.c.bf16 %v527, %v527
      %v544 = vpack.c.bf16 %v528, %v528
      %v545 = vpack.c.bf16 %v529, %v529
      %v546 = vpack.c.bf16 %v530, %v530
      %v547 = vpack.c.bf16 %v531, %v531
      %v548 = vpack.c.bf16 %v532, %v532
      %v549 = vpack.c.bf16 %v533, %v533
      %v550 = vpack.c.bf16 %v534, %v534
      %v551 = vpack.c.bf16 %v535, %v535
      %v552 = vpack.c.bf16 %v536, %v536
      %v553 = vpack.c.bf16 %v537, %v537
      %v554 = vpack.c.bf16 %v538, %v538
      %v555 = vld [vmem:[%s2] sm:$0xf]
      %v556 = vld [vmem:[%s2 + $0x4] sm:$0xf]
      %v557 = vld [vmem:[%s2 + $0x8] sm:$0x1]
      %v558 = vld [vmem:[%s3] sm:$0xf]
      %v559 = vld [vmem:[%s3 + $0x4] sm:$0xf]
      %v560 = vld [vmem:[%s3 + $0x8] sm:$0x1]
      %v577 = vunpack.c.l.b16 %v507
      %v578 = vunpack.c.l.b16 %v508
      %v579 = vunpack.c.l.b16 %v509
      %v580 = vunpack.c.l.b16 %v510
      %v581 = vunpack.c.l.b16 %v511
      %v582 = vunpack.c.l.b16 %v512
      %v583 = vunpack.c.l.b16 %v513
      %v584 = vunpack.c.l.b16 %v514
      %v585 = vunpack.c.l.b16 %v515
      %v586 = vunpack.c.l.b16 %v516
      %v587 = vunpack.c.l.b16 %v517
      %v588 = vunpack.c.l.b16 %v518
      %v589 = vunpack.c.l.b16 %v519
      %v590 = vunpack.c.l.b16 %v520
      %v591 = vunpack.c.l.b16 %v521
      %v592 = vunpack.c.l.b16 %v522
      %v593 = vpack.c.b16 %v577, %v577
      %v594 = vpack.c.b16 %v578, %v578
      %v595 = vpack.c.b16 %v579, %v579
      %v596 = vpack.c.b16 %v580, %v580
      %v597 = vpack.c.b16 %v581, %v581
      %v598 = vpack.c.b16 %v582, %v582
      %v599 = vpack.c.b16 %v583, %v583
      %v600 = vpack.c.b16 %v584, %v584
      %v601 = vpack.c.b16 %v585, %v585
      %v602 = vpack.c.b16 %v586, %v586
      %v603 = vpack.c.b16 %v587, %v587
      %v604 = vpack.c.b16 %v588, %v588
      %v605 = vpack.c.b16 %v589, %v589
      %v606 = vpack.c.b16 %v590, %v590
      %v607 = vpack.c.b16 %v591, %v591
      %v608 = vpack.c.b16 %v592, %v592
      %v610 = vshrl.u32 %v593, 16
      %v612 = vrot.slane %v610, 7
      %v613 = vshll.u32 %v593, 16
      %v615 = vor.u32 %v612, %v613
      %v617 = vshrl.u32 %v594, 16
      %v619 = vrot.slane %v617, 7
      %v620 = vshll.u32 %v594, 16
      %v622 = vor.u32 %v619, %v620
      %v624 = vshrl.u32 %v595, 16
      %v626 = vrot.slane %v624, 7
      %v627 = vshll.u32 %v595, 16
      %v629 = vor.u32 %v626, %v627
      %v631 = vshrl.u32 %v596, 16
      %v633 = vrot.slane %v631, 7
      %v634 = vshll.u32 %v596, 16
      %v636 = vor.u32 %v633, %v634
      %v638 = vshrl.u32 %v597, 16
      %v640 = vrot.slane %v638, 7
      %v641 = vshll.u32 %v597, 16
      %v643 = vor.u32 %v640, %v641
      %v645 = vshrl.u32 %v598, 16
      %v647 = vrot.slane %v645, 7
      %v648 = vshll.u32 %v598, 16
      %v650 = vor.u32 %v647, %v648
      %v652 = vshrl.u32 %v599, 16
      %v654 = vrot.slane %v652, 7
      %v655 = vshll.u32 %v599, 16
      %v657 = vor.u32 %v654, %v655
      %v659 = vshrl.u32 %v600, 16
      %v661 = vrot.slane %v659, 7
      %v662 = vshll.u32 %v600, 16
      %v664 = vor.u32 %v661, %v662
      %v666 = vshrl.u32 %v601, 16
      %v668 = vrot.slane %v666, 7
      %v669 = vshll.u32 %v601, 16
      %v671 = vor.u32 %v668, %v669
      %v673 = vshrl.u32 %v602, 16
      %v675 = vrot.slane %v673, 7
      %v676 = vshll.u32 %v602, 16
      %v678 = vor.u32 %v675, %v676
      %v680 = vshrl.u32 %v603, 16
      %v682 = vrot.slane %v680, 7
      %v683 = vshll.u32 %v603, 16
      %v685 = vor.u32 %v682, %v683
      %v687 = vshrl.u32 %v604, 16
      %v689 = vrot.slane %v687, 7
      %v690 = vshll.u32 %v604, 16
      %v692 = vor.u32 %v689, %v690
      %v694 = vshrl.u32 %v605, 16
      %v696 = vrot.slane %v694, 7
      %v697 = vshll.u32 %v605, 16
      %v699 = vor.u32 %v696, %v697
      %v701 = vshrl.u32 %v606, 16
      %v703 = vrot.slane %v701, 7
      %v704 = vshll.u32 %v606, 16
      %v706 = vor.u32 %v703, %v704
      %v708 = vshrl.u32 %v607, 16
      %v710 = vrot.slane %v708, 7
      %v711 = vshll.u32 %v607, 16
      %v713 = vor.u32 %v710, %v711
      %v715 = vshrl.u32 %v608, 16
      %v717 = vrot.slane %v715, 7
      %v718 = vshll.u32 %v608, 16
      %v720 = vor.u32 %v717, %v718
      %vm737 = vcmask 1040384
      %vm738 = vsmask.f32 256
      %vm739 = vmand %vm737, %vm738
      %v740 = vsel %vm739, 0, %v615
      %v741 = vsel %vm739, 0, %v622
      %v742 = vsel %vm739, 0, %v629
      %v743 = vsel %vm739, 0, %v636
      %v744 = vsel %vm739, 0, %v643
      %v745 = vsel %vm739, 0, %v650
      %v746 = vsel %vm739, 0, %v657
      %v747 = vsel %vm739, 0, %v664
      %v748 = vsel %vm739, 0, %v671
      %v749 = vsel %vm739, 0, %v678
      %v750 = vsel %vm739, 0, %v685
      %v751 = vsel %vm739, 0, %v692
      %v752 = vsel %vm739, 0, %v699
      %v753 = vsel %vm739, 0, %v706
      %v754 = vsel %vm739, 0, %v713
      %v755 = vsel %vm739, 0, %v720
      %772 = vrot.lane.b32.xlu0 0, 2
      %v773 = vpop.permute.xlu0 %772
      %774 = vrot.lane.b32.xlu0 %v491, 2
      %v775 = vpop.permute.xlu0 %774
      %776 = vrot.lane.b32.xlu0 %v492, 2
      %v777 = vpop.permute.xlu0 %776
      %778 = vrot.lane.b32.xlu0 %v493, 2
      %v779 = vpop.permute.xlu0 %778
      %780 = vrot.lane.b32.xlu0 %v494, 2
      %v781 = vpop.permute.xlu0 %780
      %782 = vrot.lane.b32.xlu0 %v495, 2
      %v783 = vpop.permute.xlu0 %782
      %784 = vrot.lane.b32.xlu0 %v496, 2
      %v785 = vpop.permute.xlu0 %784
      %786 = vrot.lane.b32.xlu0 %v497, 2
      %v787 = vpop.permute.xlu0 %786
      %788 = vrot.lane.b32.xlu0 %v498, 2
      %v789 = vpop.permute.xlu0 %788
      %790 = vrot.lane.b32.xlu0 %v499, 2
      %v791 = vpop.permute.xlu0 %790
      %792 = vrot.lane.b32.xlu0 %v500, 2
      %v793 = vpop.permute.xlu0 %792
      %794 = vrot.lane.b32.xlu0 %v501, 2
      %v795 = vpop.permute.xlu0 %794
      %796 = vrot.lane.b32.xlu0 %v502, 2
      %v797 = vpop.permute.xlu0 %796
      %798 = vrot.lane.b32.xlu0 %v503, 2
      %v799 = vpop.permute.xlu0 %798
      %800 = vrot.lane.b32.xlu0 %v504, 2
      %v801 = vpop.permute.xlu0 %800
      %802 = vrot.lane.b32.xlu0 %v505, 2
      %v803 = vpop.permute.xlu0 %802
      %804 = vrot.lane.b32.xlu0 0, 4
      %v805 = vpop.permute.xlu0 %804
      %806 = vrot.lane.b32.xlu0 %v507, 4
      %v807 = vpop.permute.xlu0 %806
      %808 = vrot.lane.b32.xlu0 %v508, 4
      %v809 = vpop.permute.xlu0 %808
      %810 = vrot.lane.b32.xlu0 %v509, 4
      %v811 = vpop.permute.xlu0 %810
      %812 = vrot.lane.b32.xlu0 %v510, 4
      %v813 = vpop.permute.xlu0 %812
      %814 = vrot.lane.b32.xlu0 %v511, 4
      %v815 = vpop.permute.xlu0 %814
      %816 = vrot.lane.b32.xlu0 %v512, 4
      %v817 = vpop.permute.xlu0 %816
      %818 = vrot.lane.b32.xlu0 %v513, 4
      %v819 = vpop.permute.xlu0 %818
      %820 = vrot.lane.b32.xlu0 %v514, 4
      %v821 = vpop.permute.xlu0 %820
      %822 = vrot.lane.b32.xlu0 %v515, 4
      %v823 = vpop.permute.xlu0 %822
      %824 = vrot.lane.b32.xlu0 %v516, 4
      %v825 = vpop.permute.xlu0 %824
      %826 = vrot.lane.b32.xlu0 %v517, 4
      %v827 = vpop.permute.xlu0 %826
      %828 = vrot.lane.b32.xlu0 %v518, 4
      %v829 = vpop.permute.xlu0 %828
      %830 = vrot.lane.b32.xlu0 %v519, 4
      %v831 = vpop.permute.xlu0 %830
      %832 = vrot.lane.b32.xlu0 %v520, 4
      %v833 = vpop.permute.xlu0 %832
      %834 = vrot.lane.b32.xlu0 %v521, 4
      %v835 = vpop.permute.xlu0 %834
      %852 = vrot.lane.b32.xlu0 %v740, 6
      %v853 = vpop.permute.xlu0 %852
      %854 = vrot.lane.b32.xlu0 %v741, 6
      %v855 = vpop.permute.xlu0 %854
      %856 = vrot.lane.b32.xlu0 %v742, 6
      %v857 = vpop.permute.xlu0 %856
      %858 = vrot.lane.b32.xlu0 %v743, 6
      %v859 = vpop.permute.xlu0 %858
      %860 = vrot.lane.b32.xlu0 %v744, 6
      %v861 = vpop.permute.xlu0 %860
      %862 = vrot.lane.b32.xlu0 %v745, 6
      %v863 = vpop.permute.xlu0 %862
      %864 = vrot.lane.b32.xlu0 %v746, 6
      %v865 = vpop.permute.xlu0 %864
      %866 = vrot.lane.b32.xlu0 %v747, 6
      %v867 = vpop.permute.xlu0 %866
      %868 = vrot.lane.b32.xlu0 %v748, 6
      %v869 = vpop.permute.xlu0 %868
      %870 = vrot.lane.b32.xlu0 %v749, 6
      %v871 = vpop.permute.xlu0 %870
      %872 = vrot.lane.b32.xlu0 %v750, 6
      %v873 = vpop.permute.xlu0 %872
      %874 = vrot.lane.b32.xlu0 %v751, 6
      %v875 = vpop.permute.xlu0 %874
      %876 = vrot.lane.b32.xlu0 %v752, 6
      %v877 = vpop.permute.xlu0 %876
      %878 = vrot.lane.b32.xlu0 %v753, 6
      %v879 = vpop.permute.xlu0 %878
      %880 = vrot.lane.b32.xlu0 %v754, 6
      %v881 = vpop.permute.xlu0 %880
      %882 = vrot.lane.b32.xlu0 %v755, 6
      %v883 = vpop.permute.xlu0 %882
      %885 = vrot.lane.b32.xlu0 %v491, 8
      %v886 = vpop.permute.xlu0 %885
      %887 = vrot.lane.b32.xlu0 %v492, 8
      %v888 = vpop.permute.xlu0 %887
      %889 = vrot.lane.b32.xlu0 %v493, 8
      %v890 = vpop.permute.xlu0 %889
      %891 = vrot.lane.b32.xlu0 %v494, 8
      %v892 = vpop.permute.xlu0 %891
      %893 = vrot.lane.b32.xlu0 %v495, 8
      %v894 = vpop.permute.xlu0 %893
      %895 = vrot.lane.b32.xlu0 %v496, 8
      %v896 = vpop.permute.xlu0 %895
      %897 = vrot.lane.b32.xlu0 %v497, 8
      %v898 = vpop.permute.xlu0 %897
      %899 = vrot.lane.b32.xlu0 %v498, 8
      %v900 = vpop.permute.xlu0 %899
      %901 = vrot.lane.b32.xlu0 %v499, 8
      %v902 = vpop.permute.xlu0 %901
      %903 = vrot.lane.b32.xlu0 %v500, 8
      %v904 = vpop.permute.xlu0 %903
      %905 = vrot.lane.b32.xlu0 %v501, 8
      %v906 = vpop.permute.xlu0 %905
      %907 = vrot.lane.b32.xlu0 %v502, 8
      %v908 = vpop.permute.xlu0 %907
      %909 = vrot.lane.b32.xlu0 %v503, 8
      %v910 = vpop.permute.xlu0 %909
      %911 = vrot.lane.b32.xlu0 %v504, 8
      %v912 = vpop.permute.xlu0 %911
      %913 = vrot.lane.b32.xlu0 %v505, 8
      %v914 = vpop.permute.xlu0 %913
      %915 = vrot.lane.b32.xlu0 %v506, 8
      %v916 = vpop.permute.xlu0 %915
      %917 = vrot.lane.b32.xlu0 %v507, 10
      %v918 = vpop.permute.xlu0 %917
      %919 = vrot.lane.b32.xlu0 %v508, 10
      %v920 = vpop.permute.xlu0 %919
      %921 = vrot.lane.b32.xlu0 %v509, 10
      %v922 = vpop.permute.xlu0 %921
      %923 = vrot.lane.b32.xlu0 %v510, 10
      %v924 = vpop.permute.xlu0 %923
      %925 = vrot.lane.b32.xlu0 %v511, 10
      %v926 = vpop.permute.xlu0 %925
      %927 = vrot.lane.b32.xlu0 %v512, 10
      %v928 = vpop.permute.xlu0 %927
      %929 = vrot.lane.b32.xlu0 %v513, 10
      %v930 = vpop.permute.xlu0 %929
      %931 = vrot.lane.b32.xlu0 %v514, 10
      %v932 = vpop.permute.xlu0 %931
      %933 = vrot.lane.b32.xlu0 %v515, 10
      %v934 = vpop.permute.xlu0 %933
      %935 = vrot.lane.b32.xlu0 %v516, 10
      %v936 = vpop.permute.xlu0 %935
      %937 = vrot.lane.b32.xlu0 %v517, 10
      %v938 = vpop.permute.xlu0 %937
      %939 = vrot.lane.b32.xlu0 %v518, 10
      %v940 = vpop.permute.xlu0 %939
      %941 = vrot.lane.b32.xlu0 %v519, 10
      %v942 = vpop.permute.xlu0 %941
      %943 = vrot.lane.b32.xlu0 %v520, 10
      %v944 = vpop.permute.xlu0 %943
      %945 = vrot.lane.b32.xlu0 %v521, 10
      %v946 = vpop.permute.xlu0 %945
      %947 = vrot.lane.b32.xlu0 %v522, 10
      %v948 = vpop.permute.xlu0 %947
      %949 = vrot.lane.b32.xlu0 %v741, 12
      %v950 = vpop.permute.xlu0 %949
      %951 = vrot.lane.b32.xlu0 %v742, 12
      %v952 = vpop.permute.xlu0 %951
      %953 = vrot.lane.b32.xlu0 %v743, 12
      %v954 = vpop.permute.xlu0 %953
      %955 = vrot.lane.b32.xlu0 %v744, 12
      %v956 = vpop.permute.xlu0 %955
      %957 = vrot.lane.b32.xlu0 %v745, 12
      %v958 = vpop.permute.xlu0 %957
      %959 = vrot.lane.b32.xlu0 %v746, 12
      %v960 = vpop.permute.xlu0 %959
      %961 = vrot.lane.b32.xlu0 %v747, 12
      %v962 = vpop.permute.xlu0 %961
      %963 = vrot.lane.b32.xlu0 %v748, 12
      %v964 = vpop.permute.xlu0 %963
      %965 = vrot.lane.b32.xlu0 %v749, 12
      %v966 = vpop.permute.xlu0 %965
      %967 = vrot.lane.b32.xlu0 %v750, 12
      %v968 = vpop.permute.xlu0 %967
      %969 = vrot.lane.b32.xlu0 %v751, 12
      %v970 = vpop.permute.xlu0 %969
      %971 = vrot.lane.b32.xlu0 %v752, 12
      %v972 = vpop.permute.xlu0 %971
      %973 = vrot.lane.b32.xlu0 %v753, 12
      %v974 = vpop.permute.xlu0 %973
      %975 = vrot.lane.b32.xlu0 %v754, 12
      %v976 = vpop.permute.xlu0 %975
      %977 = vrot.lane.b32.xlu0 %v755, 12
      %v978 = vpop.permute.xlu0 %977
      %979 = vrot.lane.b32.xlu0 0, 12
      %v980 = vpop.permute.xlu0 %979
      %981 = vrot.lane.b32.xlu0 %v492, 14
      %v982 = vpop.permute.xlu0 %981
      %983 = vrot.lane.b32.xlu0 %v493, 14
      %v984 = vpop.permute.xlu0 %983
      %985 = vrot.lane.b32.xlu0 %v494, 14
      %v986 = vpop.permute.xlu0 %985
      %987 = vrot.lane.b32.xlu0 %v495, 14
      %v988 = vpop.permute.xlu0 %987
      %989 = vrot.lane.b32.xlu0 %v496, 14
      %v990 = vpop.permute.xlu0 %989
      %991 = vrot.lane.b32.xlu0 %v497, 14
      %v992 = vpop.permute.xlu0 %991
      %993 = vrot.lane.b32.xlu0 %v498, 14
      %v994 = vpop.permute.xlu0 %993
      %995 = vrot.lane.b32.xlu0 %v499, 14
      %v996 = vpop.permute.xlu0 %995
      %997 = vrot.lane.b32.xlu0 %v500, 14
      %v998 = vpop.permute.xlu0 %997
      %999 = vrot.lane.b32.xlu0 %v501, 14
      %v1000 = vpop.permute.xlu0 %999
      %1001 = vrot.lane.b32.xlu0 %v502, 14
      %v1002 = vpop.permute.xlu0 %1001
      %1003 = vrot.lane.b32.xlu0 %v503, 14
      %v1004 = vpop.permute.xlu0 %1003
      %1005 = vrot.lane.b32.xlu0 %v504, 14
      %v1006 = vpop.permute.xlu0 %1005
      %1007 = vrot.lane.b32.xlu0 %v505, 14
      %v1008 = vpop.permute.xlu0 %1007
      %1009 = vrot.lane.b32.xlu0 %v506, 14
      %v1010 = vpop.permute.xlu0 %1009
      %1011 = vrot.lane.b32.xlu0 0, 14
      %v1012 = vpop.permute.xlu0 %1011
      %1013 = vrot.lane.b32.xlu0 %v508, 16
      %v1014 = vpop.permute.xlu0 %1013
      %1015 = vrot.lane.b32.xlu0 %v509, 16
      %v1016 = vpop.permute.xlu0 %1015
      %1017 = vrot.lane.b32.xlu0 %v510, 16
      %v1018 = vpop.permute.xlu0 %1017
      %1019 = vrot.lane.b32.xlu0 %v511, 16
      %v1020 = vpop.permute.xlu0 %1019
      %1021 = vrot.lane.b32.xlu0 %v512, 16
      %v1022 = vpop.permute.xlu0 %1021
      %1023 = vrot.lane.b32.xlu0 %v513, 16
      %v1024 = vpop.permute.xlu0 %1023
      %1025 = vrot.lane.b32.xlu0 %v514, 16
      %v1026 = vpop.permute.xlu0 %1025
      %1027 = vrot.lane.b32.xlu0 %v515, 16
      %v1028 = vpop.permute.xlu0 %1027
      %1029 = vrot.lane.b32.xlu0 %v516, 16
      %v1030 = vpop.permute.xlu0 %1029
      %1031 = vrot.lane.b32.xlu0 %v517, 16
      %v1032 = vpop.permute.xlu0 %1031
      %1033 = vrot.lane.b32.xlu0 %v518, 16
      %v1034 = vpop.permute.xlu0 %1033
      %1035 = vrot.lane.b32.xlu0 %v519, 16
      %v1036 = vpop.permute.xlu0 %1035
      %1037 = vrot.lane.b32.xlu0 %v520, 16
      %v1038 = vpop.permute.xlu0 %1037
      %1039 = vrot.lane.b32.xlu0 %v521, 16
      %v1040 = vpop.permute.xlu0 %1039
      %1041 = vrot.lane.b32.xlu0 %v522, 16
      %v1042 = vpop.permute.xlu0 %1041
      %1043 = vrot.lane.b32.xlu0 0, 16
      %v1044 = vpop.permute.xlu0 %1043
      %vm1045 = vcmask 15360
      %v1048 = vsel %vm1045, 0, %v773
      %v1051 = vsel %vm1045, %v740, %v775
      %v1054 = vsel %vm1045, %v741, %v777
      %v1057 = vsel %vm1045, %v742, %v779
      %v1060 = vsel %vm1045, %v743, %v781
      %v1063 = vsel %vm1045, %v744, %v783
      %v1066 = vsel %vm1045, %v745, %v785
      %v1069 = vsel %vm1045, %v746, %v787
      %v1072 = vsel %vm1045, %v747, %v789
      %v1075 = vsel %vm1045, %v748, %v791
      %v1078 = vsel %vm1045, %v749, %v793
      %v1081 = vsel %vm1045, %v750, %v795
      %v1084 = vsel %vm1045, %v751, %v797
      %v1087 = vsel %vm1045, %v752, %v799
      %v1090 = vsel %vm1045, %v753, %v801
      %v1093 = vsel %vm1045, %v754, %v803
      %vm1094 = vcmask 31744
      %v1096 = vsel %vm1094, %v1048, %v805
      %v1098 = vsel %vm1094, %v1051, %v807
      %v1100 = vsel %vm1094, %v1054, %v809
      %v1102 = vsel %vm1094, %v1057, %v811
      %v1104 = vsel %vm1094, %v1060, %v813
      %v1106 = vsel %vm1094, %v1063, %v815
      %v1108 = vsel %vm1094, %v1066, %v817
      %v1110 = vsel %vm1094, %v1069, %v819
      %v1112 = vsel %vm1094, %v1072, %v821
      %v1114 = vsel %vm1094, %v1075, %v823
      %v1116 = vsel %vm1094, %v1078, %v825
      %v1118 = vsel %vm1094, %v1081, %v827
      %v1120 = vsel %vm1094, %v1084, %v829
      %v1122 = vsel %vm1094, %v1087, %v831
      %v1124 = vsel %vm1094, %v1090, %v833
      %v1126 = vsel %vm1094, %v1093, %v835
      %vm1127 = vcmask 48128
      %v1129 = vsel %vm1127, %v1096, %v853
      %v1131 = vsel %vm1127, %v1098, %v855
      %v1133 = vsel %vm1127, %v1100, %v857
      %v1135 = vsel %vm1127, %v1102, %v859
      %v1137 = vsel %vm1127, %v1104, %v861
      %v1139 = vsel %vm1127, %v1106, %v863
      %v1141 = vsel %vm1127, %v1108, %v865
      %v1143 = vsel %vm1127, %v1110, %v867
      %v1145 = vsel %vm1127, %v1112, %v869
      %v1147 = vsel %vm1127, %v1114, %v871
      %v1149 = vsel %vm1127, %v1116, %v873
      %v1151 = vsel %vm1127, %v1118, %v875
      %v1153 = vsel %vm1127, %v1120, %v877
      %v1155 = vsel %vm1127, %v1122, %v879
      %v1157 = vsel %vm1127, %v1124, %v881
      %v1159 = vsel %vm1127, %v1126, %v883
      %vm1160 = vcmask 64512
      %v1162 = vsel %vm1160, %v1129, %v886
      %v1164 = vsel %vm1160, %v1131, %v888
      %v1166 = vsel %vm1160, %v1133, %v890
      %v1168 = vsel %vm1160, %v1135, %v892
      %v1170 = vsel %vm1160, %v1137, %v894
      %v1172 = vsel %vm1160, %v1139, %v896
      %v1174 = vsel %vm1160, %v1141, %v898
      %v1176 = vsel %vm1160, %v1143, %v900
      %v1178 = vsel %vm1160, %v1145, %v902
      %v1180 = vsel %vm1160, %v1147, %v904
      %v1182 = vsel %vm1160, %v1149, %v906
      %v1184 = vsel %vm1160, %v1151, %v908
      %v1186 = vsel %vm1160, %v1153, %v910
      %v1188 = vsel %vm1160, %v1155, %v912
      %v1190 = vsel %vm1160, %v1157, %v914
      %v1192 = vsel %vm1160, %v1159, %v916
      %vm1193 = vcmask 80896
      %v1195 = vsel %vm1193, %v1162, %v918
      %v1197 = vsel %vm1193, %v1164, %v920
      %v1199 = vsel %vm1193, %v1166, %v922
      %v1201 = vsel %vm1193, %v1168, %v924
      %v1203 = vsel %vm1193, %v1170, %v926
      %v1205 = vsel %vm1193, %v1172, %v928
      %v1207 = vsel %vm1193, %v1174, %v930
      %v1209 = vsel %vm1193, %v1176, %v932
      %v1211 = vsel %vm1193, %v1178, %v934
      %v1213 = vsel %vm1193, %v1180, %v936
      %v1215 = vsel %vm1193, %v1182, %v938
      %v1217 = vsel %vm1193, %v1184, %v940
      %v1219 = vsel %vm1193, %v1186, %v942
      %v1221 = vsel %vm1193, %v1188, %v944
      %v1223 = vsel %vm1193, %v1190, %v946
      %v1225 = vsel %vm1193, %v1192, %v948
      %vm1226 = vcmask 97280
      %v1228 = vsel %vm1226, %v1195, %v950
      %v1230 = vsel %vm1226, %v1197, %v952
      %v1232 = vsel %vm1226, %v1199, %v954
      %v1234 = vsel %vm1226, %v1201, %v956
      %v1236 = vsel %vm1226, %v1203, %v958
      %v1238 = vsel %vm1226, %v1205, %v960
      %v1240 = vsel %vm1226, %v1207, %v962
      %v1242 = vsel %vm1226, %v1209, %v964
      %v1244 = vsel %vm1226, %v1211, %v966
      %v1246 = vsel %vm1226, %v1213, %v968
      %v1248 = vsel %vm1226, %v1215, %v970
      %v1250 = vsel %vm1226, %v1217, %v972
      %v1252 = vsel %vm1226, %v1219, %v974
      %v1254 = vsel %vm1226, %v1221, %v976
      %v1256 = vsel %vm1226, %v1223, %v978
      %v1258 = vsel %vm1226, %v1225, %v980
      %vm1259 = vcmask 113664
      %v1261 = vsel %vm1259, %v1228, %v982
      %v1263 = vsel %vm1259, %v1230, %v984
      %v1265 = vsel %vm1259, %v1232, %v986
      %v1267 = vsel %vm1259, %v1234, %v988
      %v1269 = vsel %vm1259, %v1236, %v990
      %v1271 = vsel %vm1259, %v1238, %v992
      %v1273 = vsel %vm1259, %v1240, %v994
      %v1275 = vsel %vm1259, %v1242, %v996
      %v1277 = vsel %vm1259, %v1244, %v998
      %v1279 = vsel %vm1259, %v1246, %v1000
      %v1281 = vsel %vm1259, %v1248, %v1002
      %v1283 = vsel %vm1259, %v1250, %v1004
      %v1285 = vsel %vm1259, %v1252, %v1006
      %v1287 = vsel %vm1259, %v1254, %v1008
      %v1289 = vsel %vm1259, %v1256, %v1010
      %v1291 = vsel %vm1259, %v1258, %v1012
      %vm1292 = vcmask 130048
      %v1294 = vsel %vm1292, %v1261, %v1014
      %v1296 = vsel %vm1292, %v1263, %v1016
      %v1298 = vsel %vm1292, %v1265, %v1018
      %v1300 = vsel %vm1292, %v1267, %v1020
      %v1302 = vsel %vm1292, %v1269, %v1022
      %v1304 = vsel %vm1292, %v1271, %v1024
      %v1306 = vsel %vm1292, %v1273, %v1026
      %v1308 = vsel %vm1292, %v1275, %v1028
      %v1310 = vsel %vm1292, %v1277, %v1030
      %v1312 = vsel %vm1292, %v1279, %v1032
      %v1314 = vsel %vm1292, %v1281, %v1034
      %v1316 = vsel %vm1292, %v1283, %v1036
      %v1318 = vsel %vm1292, %v1285, %v1038
      %v1320 = vsel %vm1292, %v1287, %v1040
      %v1322 = vsel %vm1292, %v1289, %v1042
      %v1324 = vsel %vm1292, %v1291, %v1044
      %v1341 = vunpack.c.l.b16 %v539
      %v1342 = vunpack.c.l.b16 %v540
      %v1343 = vunpack.c.l.b16 %v541
      %v1344 = vunpack.c.l.b16 %v542
      %v1345 = vunpack.c.l.b16 %v543
      %v1346 = vunpack.c.l.b16 %v544
      %v1347 = vunpack.c.l.b16 %v545
      %v1348 = vunpack.c.l.b16 %v546
      %v1349 = vunpack.c.l.b16 %v547
      %v1350 = vunpack.c.l.b16 %v548
      %v1351 = vunpack.c.l.b16 %v549
      %v1352 = vunpack.c.l.b16 %v550
      %v1353 = vunpack.c.l.b16 %v551
      %v1354 = vunpack.c.l.b16 %v552
      %v1355 = vunpack.c.l.b16 %v553
      %v1356 = vunpack.c.l.b16 %v554
      %v1357 = vpack.c.b16 %v1341, %v1341
      %v1358 = vpack.c.b16 %v1342, %v1342
      %v1359 = vpack.c.b16 %v1343, %v1343
      %v1360 = vpack.c.b16 %v1344, %v1344
      %v1361 = vpack.c.b16 %v1345, %v1345
      %v1362 = vpack.c.b16 %v1346, %v1346
      %v1363 = vpack.c.b16 %v1347, %v1347
      %v1364 = vpack.c.b16 %v1348, %v1348
      %v1365 = vpack.c.b16 %v1349, %v1349
      %v1366 = vpack.c.b16 %v1350, %v1350
      %v1367 = vpack.c.b16 %v1351, %v1351
      %v1368 = vpack.c.b16 %v1352, %v1352
      %v1369 = vpack.c.b16 %v1353, %v1353
      %v1370 = vpack.c.b16 %v1354, %v1354
      %v1371 = vpack.c.b16 %v1355, %v1355
      %v1372 = vpack.c.b16 %v1356, %v1356
      %v1374 = vshrl.u32 %v1357, 16
      %v1376 = vrot.slane %v1374, 7
      %v1377 = vshll.u32 %v1357, 16
      %v1379 = vor.u32 %v1376, %v1377
      %v1381 = vshrl.u32 %v1358, 16
      %v1383 = vrot.slane %v1381, 7
      %v1384 = vshll.u32 %v1358, 16
      %v1386 = vor.u32 %v1383, %v1384
      %v1388 = vshrl.u32 %v1359, 16
      %v1390 = vrot.slane %v1388, 7
      %v1391 = vshll.u32 %v1359, 16
      %v1393 = vor.u32 %v1390, %v1391
      %v1395 = vshrl.u32 %v1360, 16
      %v1397 = vrot.slane %v1395, 7
      %v1398 = vshll.u32 %v1360, 16
      %v1400 = vor.u32 %v1397, %v1398
      %v1402 = vshrl.u32 %v1361, 16
      %v1404 = vrot.slane %v1402, 7
      %v1405 = vshll.u32 %v1361, 16
      %v1407 = vor.u32 %v1404, %v1405
      %v1409 = vshrl.u32 %v1362, 16
      %v1411 = vrot.slane %v1409, 7
      %v1412 = vshll.u32 %v1362, 16
      %v1414 = vor.u32 %v1411, %v1412
      %v1416 = vshrl.u32 %v1363, 16
      %v1418 = vrot.slane %v1416, 7
      %v1419 = vshll.u32 %v1363, 16
      %v1421 = vor.u32 %v1418, %v1419
      %v1423 = vshrl.u32 %v1364, 16
      %v1425 = vrot.slane %v1423, 7
      %v1426 = vshll.u32 %v1364, 16
      %v1428 = vor.u32 %v1425, %v1426
      %v1430 = vshrl.u32 %v1365, 16
      %v1432 = vrot.slane %v1430, 7
      %v1433 = vshll.u32 %v1365, 16
      %v1435 = vor.u32 %v1432, %v1433
      %v1437 = vshrl.u32 %v1366, 16
      %v1439 = vrot.slane %v1437, 7
      %v1440 = vshll.u32 %v1366, 16
      %v1442 = vor.u32 %v1439, %v1440
      %v1444 = vshrl.u32 %v1367, 16
      %v1446 = vrot.slane %v1444, 7
      %v1447 = vshll.u32 %v1367, 16
      %v1449 = vor.u32 %v1446, %v1447
      %v1451 = vshrl.u32 %v1368, 16
      %v1453 = vrot.slane %v1451, 7
      %v1454 = vshll.u32 %v1368, 16
      %v1456 = vor.u32 %v1453, %v1454
      %v1458 = vshrl.u32 %v1369, 16
      %v1460 = vrot.slane %v1458, 7
      %v1461 = vshll.u32 %v1369, 16
      %v1463 = vor.u32 %v1460, %v1461
      %v1465 = vshrl.u32 %v1370, 16
      %v1467 = vrot.slane %v1465, 7
      %v1468 = vshll.u32 %v1370, 16
      %v1470 = vor.u32 %v1467, %v1468
      %v1472 = vshrl.u32 %v1371, 16
      %v1474 = vrot.slane %v1472, 7
      %v1475 = vshll.u32 %v1371, 16
      %v1477 = vor.u32 %v1474, %v1475
      %v1479 = vshrl.u32 %v1372, 16
      %v1481 = vrot.slane %v1479, 7
      %v1482 = vshll.u32 %v1372, 16
      %v1484 = vor.u32 %v1481, %v1482
      %1485 = vrot.lane.b32.xlu0 %v1379, 126
      %v1486 = vpop.permute.xlu0 %1485
      %1487 = vrot.lane.b32.xlu0 %v1386, 126
      %v1488 = vpop.permute.xlu0 %1487
      %1489 = vrot.lane.b32.xlu0 %v1393, 126
      %v1490 = vpop.permute.xlu0 %1489
      %1491 = vrot.lane.b32.xlu0 %v1400, 126
      %v1492 = vpop.permute.xlu0 %1491
      %1493 = vrot.lane.b32.xlu0 %v1407, 126
      %v1494 = vpop.permute.xlu0 %1493
      %1495 = vrot.lane.b32.xlu0 %v1414, 126
      %v1496 = vpop.permute.xlu0 %1495
      %1497 = vrot.lane.b32.xlu0 %v1421, 126
      %v1498 = vpop.permute.xlu0 %1497
      %1499 = vrot.lane.b32.xlu0 %v1428, 126
      %v1500 = vpop.permute.xlu0 %1499
      %1501 = vrot.lane.b32.xlu0 %v1435, 126
      %v1502 = vpop.permute.xlu0 %1501
      %1503 = vrot.lane.b32.xlu0 %v1442, 126
      %v1504 = vpop.permute.xlu0 %1503
      %1505 = vrot.lane.b32.xlu0 %v1449, 126
      %v1506 = vpop.permute.xlu0 %1505
      %1507 = vrot.lane.b32.xlu0 %v1456, 126
      %v1508 = vpop.permute.xlu0 %1507
      %1509 = vrot.lane.b32.xlu0 %v1463, 126
      %v1510 = vpop.permute.xlu0 %1509
      %1511 = vrot.lane.b32.xlu0 %v1470, 126
      %v1512 = vpop.permute.xlu0 %1511
      %1513 = vrot.lane.b32.xlu0 %v1477, 126
      %v1514 = vpop.permute.xlu0 %1513
      %1515 = vrot.lane.b32.xlu0 %v1484, 126
      %v1516 = vpop.permute.xlu0 %1515
      %v1533 = vsel %vm739, 0, %v1486
      %v1534 = vsel %vm739, 0, %v1488
      %v1535 = vsel %vm739, 0, %v1490
      %v1536 = vsel %vm739, 0, %v1492
      %v1537 = vsel %vm739, 0, %v1494
      %v1538 = vsel %vm739, 0, %v1496
      %v1539 = vsel %vm739, 0, %v1498
      %v1540 = vsel %vm739, 0, %v1500
      %v1541 = vsel %vm739, 0, %v1502
      %v1542 = vsel %vm739, 0, %v1504
      %v1543 = vsel %vm739, 0, %v1506
      %v1544 = vsel %vm739, 0, %v1508
      %v1545 = vsel %vm739, 0, %v1510
      %v1546 = vsel %vm739, 0, %v1512
      %v1547 = vsel %vm739, 0, %v1514
      %v1548 = vsel %vm739, 0, %v1516
      %1549 = vrot.lane.b32.xlu0 %v1357, 126
      %v1550 = vpop.permute.xlu0 %1549
      %1551 = vrot.lane.b32.xlu0 %v1358, 126
      %v1552 = vpop.permute.xlu0 %1551
      %1553 = vrot.lane.b32.xlu0 %v1359, 126
      %v1554 = vpop.permute.xlu0 %1553
      %1555 = vrot.lane.b32.xlu0 %v1360, 126
      %v1556 = vpop.permute.xlu0 %1555
      %1557 = vrot.lane.b32.xlu0 %v1361, 126
      %v1558 = vpop.permute.xlu0 %1557
      %1559 = vrot.lane.b32.xlu0 %v1362, 126
      %v1560 = vpop.permute.xlu0 %1559
      %1561 = vrot.lane.b32.xlu0 %v1363, 126
      %v1562 = vpop.permute.xlu0 %1561
      %1563 = vrot.lane.b32.xlu0 %v1364, 126
      %v1564 = vpop.permute.xlu0 %1563
      %1565 = vrot.lane.b32.xlu0 %v1365, 126
      %v1566 = vpop.permute.xlu0 %1565
      %1567 = vrot.lane.b32.xlu0 %v1366, 126
      %v1568 = vpop.permute.xlu0 %1567
      %1569 = vrot.lane.b32.xlu0 %v1367, 126
      %v1570 = vpop.permute.xlu0 %1569
      %1571 = vrot.lane.b32.xlu0 %v1368, 126
      %v1572 = vpop.permute.xlu0 %1571
      %1573 = vrot.lane.b32.xlu0 %v1369, 126
      %v1574 = vpop.permute.xlu0 %1573
      %1575 = vrot.lane.b32.xlu0 %v1370, 126
      %v1576 = vpop.permute.xlu0 %1575
      %1577 = vrot.lane.b32.xlu0 %v1371, 126
      %v1578 = vpop.permute.xlu0 %1577
      %1579 = vrot.lane.b32.xlu0 %v1372, 126
      %v1580 = vpop.permute.xlu0 %1579
      %1581 = vrot.lane.b32.xlu0 %v539, 2
      %v1582 = vpop.permute.xlu0 %1581
      %1583 = vrot.lane.b32.xlu0 %v540, 2
      %v1584 = vpop.permute.xlu0 %1583
      %1585 = vrot.lane.b32.xlu0 %v541, 2
      %v1586 = vpop.permute.xlu0 %1585
      %1587 = vrot.lane.b32.xlu0 %v542, 2
      %v1588 = vpop.permute.xlu0 %1587
      %1589 = vrot.lane.b32.xlu0 %v543, 2
      %v1590 = vpop.permute.xlu0 %1589
      %1591 = vrot.lane.b32.xlu0 %v544, 2
      %v1592 = vpop.permute.xlu0 %1591
      %1593 = vrot.lane.b32.xlu0 %v545, 2
      %v1594 = vpop.permute.xlu0 %1593
      %1595 = vrot.lane.b32.xlu0 %v546, 2
      %v1596 = vpop.permute.xlu0 %1595
      %1597 = vrot.lane.b32.xlu0 %v547, 2
      %v1598 = vpop.permute.xlu0 %1597
      %1599 = vrot.lane.b32.xlu0 %v548, 2
      %v1600 = vpop.permute.xlu0 %1599
      %1601 = vrot.lane.b32.xlu0 %v549, 2
      %v1602 = vpop.permute.xlu0 %1601
      %1603 = vrot.lane.b32.xlu0 %v550, 2
      %v1604 = vpop.permute.xlu0 %1603
      %1605 = vrot.lane.b32.xlu0 %v551, 2
      %v1606 = vpop.permute.xlu0 %1605
      %1607 = vrot.lane.b32.xlu0 %v552, 2
      %v1608 = vpop.permute.xlu0 %1607
      %1609 = vrot.lane.b32.xlu0 %v553, 2
      %v1610 = vpop.permute.xlu0 %1609
      %1611 = vrot.lane.b32.xlu0 %v1550, 4
      %v1612 = vpop.permute.xlu0 %1611
      %1613 = vrot.lane.b32.xlu0 %v1552, 4
      %v1614 = vpop.permute.xlu0 %1613
      %1615 = vrot.lane.b32.xlu0 %v1554, 4
      %v1616 = vpop.permute.xlu0 %1615
      %1617 = vrot.lane.b32.xlu0 %v1556, 4
      %v1618 = vpop.permute.xlu0 %1617
      %1619 = vrot.lane.b32.xlu0 %v1558, 4
      %v1620 = vpop.permute.xlu0 %1619
      %1621 = vrot.lane.b32.xlu0 %v1560, 4
      %v1622 = vpop.permute.xlu0 %1621
      %1623 = vrot.lane.b32.xlu0 %v1562, 4
      %v1624 = vpop.permute.xlu0 %1623
      %1625 = vrot.lane.b32.xlu0 %v1564, 4
      %v1626 = vpop.permute.xlu0 %1625
      %1627 = vrot.lane.b32.xlu0 %v1566, 4
      %v1628 = vpop.permute.xlu0 %1627
      %1629 = vrot.lane.b32.xlu0 %v1568, 4
      %v1630 = vpop.permute.xlu0 %1629
      %1631 = vrot.lane.b32.xlu0 %v1570, 4
      %v1632 = vpop.permute.xlu0 %1631
      %1633 = vrot.lane.b32.xlu0 %v1572, 4
      %v1634 = vpop.permute.xlu0 %1633
      %1635 = vrot.lane.b32.xlu0 %v1574, 4
      %v1636 = vpop.permute.xlu0 %1635
      %1637 = vrot.lane.b32.xlu0 %v1576, 4
      %v1638 = vpop.permute.xlu0 %1637
      %1639 = vrot.lane.b32.xlu0 %v1578, 4
      %v1640 = vpop.permute.xlu0 %1639
      %1657 = vrot.lane.b32.xlu0 %v1533, 6
      %v1658 = vpop.permute.xlu0 %1657
      %1659 = vrot.lane.b32.xlu0 %v1534, 6
      %v1660 = vpop.permute.xlu0 %1659
      %1661 = vrot.lane.b32.xlu0 %v1535, 6
      %v1662 = vpop.permute.xlu0 %1661
      %1663 = vrot.lane.b32.xlu0 %v1536, 6
      %v1664 = vpop.permute.xlu0 %1663
      %1665 = vrot.lane.b32.xlu0 %v1537, 6
      %v1666 = vpop.permute.xlu0 %1665
      %1667 = vrot.lane.b32.xlu0 %v1538, 6
      %v1668 = vpop.permute.xlu0 %1667
      %1669 = vrot.lane.b32.xlu0 %v1539, 6
      %v1670 = vpop.permute.xlu0 %1669
      %1671 = vrot.lane.b32.xlu0 %v1540, 6
      %v1672 = vpop.permute.xlu0 %1671
      %1673 = vrot.lane.b32.xlu0 %v1541, 6
      %v1674 = vpop.permute.xlu0 %1673
      %1675 = vrot.lane.b32.xlu0 %v1542, 6
      %v1676 = vpop.permute.xlu0 %1675
      %1677 = vrot.lane.b32.xlu0 %v1543, 6
      %v1678 = vpop.permute.xlu0 %1677
      %1679 = vrot.lane.b32.xlu0 %v1544, 6
      %v1680 = vpop.permute.xlu0 %1679
      %1681 = vrot.lane.b32.xlu0 %v1545, 6
      %v1682 = vpop.permute.xlu0 %1681
      %1683 = vrot.lane.b32.xlu0 %v1546, 6
      %v1684 = vpop.permute.xlu0 %1683
      %1685 = vrot.lane.b32.xlu0 %v1547, 6
      %v1686 = vpop.permute.xlu0 %1685
      %1687 = vrot.lane.b32.xlu0 %v1548, 6
      %v1688 = vpop.permute.xlu0 %1687
      %1689 = vrot.lane.b32.xlu0 %v539, 8
      %v1690 = vpop.permute.xlu0 %1689
      %1691 = vrot.lane.b32.xlu0 %v540, 8
      %v1692 = vpop.permute.xlu0 %1691
      %1693 = vrot.lane.b32.xlu0 %v541, 8
      %v1694 = vpop.permute.xlu0 %1693
      %1695 = vrot.lane.b32.xlu0 %v542, 8
      %v1696 = vpop.permute.xlu0 %1695
      %1697 = vrot.lane.b32.xlu0 %v543, 8
      %v1698 = vpop.permute.xlu0 %1697
      %1699 = vrot.lane.b32.xlu0 %v544, 8
      %v1700 = vpop.permute.xlu0 %1699
      %1701 = vrot.lane.b32.xlu0 %v545, 8
      %v1702 = vpop.permute.xlu0 %1701
      %1703 = vrot.lane.b32.xlu0 %v546, 8
      %v1704 = vpop.permute.xlu0 %1703
      %1705 = vrot.lane.b32.xlu0 %v547, 8
      %v1706 = vpop.permute.xlu0 %1705
      %1707 = vrot.lane.b32.xlu0 %v548, 8
      %v1708 = vpop.permute.xlu0 %1707
      %1709 = vrot.lane.b32.xlu0 %v549, 8
      %v1710 = vpop.permute.xlu0 %1709
      %1711 = vrot.lane.b32.xlu0 %v550, 8
      %v1712 = vpop.permute.xlu0 %1711
      %1713 = vrot.lane.b32.xlu0 %v551, 8
      %v1714 = vpop.permute.xlu0 %1713
      %1715 = vrot.lane.b32.xlu0 %v552, 8
      %v1716 = vpop.permute.xlu0 %1715
      %1717 = vrot.lane.b32.xlu0 %v553, 8
      %v1718 = vpop.permute.xlu0 %1717
      %1719 = vrot.lane.b32.xlu0 %v554, 8
      %v1720 = vpop.permute.xlu0 %1719
      %1721 = vrot.lane.b32.xlu0 %v1550, 10
      %v1722 = vpop.permute.xlu0 %1721
      %1723 = vrot.lane.b32.xlu0 %v1552, 10
      %v1724 = vpop.permute.xlu0 %1723
      %1725 = vrot.lane.b32.xlu0 %v1554, 10
      %v1726 = vpop.permute.xlu0 %1725
      %1727 = vrot.lane.b32.xlu0 %v1556, 10
      %v1728 = vpop.permute.xlu0 %1727
      %1729 = vrot.lane.b32.xlu0 %v1558, 10
      %v1730 = vpop.permute.xlu0 %1729
      %1731 = vrot.lane.b32.xlu0 %v1560, 10
      %v1732 = vpop.permute.xlu0 %1731
      %1733 = vrot.lane.b32.xlu0 %v1562, 10
      %v1734 = vpop.permute.xlu0 %1733
      %1735 = vrot.lane.b32.xlu0 %v1564, 10
      %v1736 = vpop.permute.xlu0 %1735
      %1737 = vrot.lane.b32.xlu0 %v1566, 10
      %v1738 = vpop.permute.xlu0 %1737
      %1739 = vrot.lane.b32.xlu0 %v1568, 10
      %v1740 = vpop.permute.xlu0 %1739
      %1741 = vrot.lane.b32.xlu0 %v1570, 10
      %v1742 = vpop.permute.xlu0 %1741
      %1743 = vrot.lane.b32.xlu0 %v1572, 10
      %v1744 = vpop.permute.xlu0 %1743
      %1745 = vrot.lane.b32.xlu0 %v1574, 10
      %v1746 = vpop.permute.xlu0 %1745
      %1747 = vrot.lane.b32.xlu0 %v1576, 10
      %v1748 = vpop.permute.xlu0 %1747
      %1749 = vrot.lane.b32.xlu0 %v1578, 10
      %v1750 = vpop.permute.xlu0 %1749
      %1751 = vrot.lane.b32.xlu0 %v1580, 10
      %v1752 = vpop.permute.xlu0 %1751
      %1753 = vrot.lane.b32.xlu0 %v1534, 12
      %v1754 = vpop.permute.xlu0 %1753
      %1755 = vrot.lane.b32.xlu0 %v1535, 12
      %v1756 = vpop.permute.xlu0 %1755
      %1757 = vrot.lane.b32.xlu0 %v1536, 12
      %v1758 = vpop.permute.xlu0 %1757
      %1759 = vrot.lane.b32.xlu0 %v1537, 12
      %v1760 = vpop.permute.xlu0 %1759
      %1761 = vrot.lane.b32.xlu0 %v1538, 12
      %v1762 = vpop.permute.xlu0 %1761
      %1763 = vrot.lane.b32.xlu0 %v1539, 12
      %v1764 = vpop.permute.xlu0 %1763
      %1765 = vrot.lane.b32.xlu0 %v1540, 12
      %v1766 = vpop.permute.xlu0 %1765
      %1767 = vrot.lane.b32.xlu0 %v1541, 12
      %v1768 = vpop.permute.xlu0 %1767
      %1769 = vrot.lane.b32.xlu0 %v1542, 12
      %v1770 = vpop.permute.xlu0 %1769
      %1771 = vrot.lane.b32.xlu0 %v1543, 12
      %v1772 = vpop.permute.xlu0 %1771
      %1773 = vrot.lane.b32.xlu0 %v1544, 12
      %v1774 = vpop.permute.xlu0 %1773
      %1775 = vrot.lane.b32.xlu0 %v1545, 12
      %v1776 = vpop.permute.xlu0 %1775
      %1777 = vrot.lane.b32.xlu0 %v1546, 12
      %v1778 = vpop.permute.xlu0 %1777
      %1779 = vrot.lane.b32.xlu0 %v1547, 12
      %v1780 = vpop.permute.xlu0 %1779
      %1781 = vrot.lane.b32.xlu0 %v1548, 12
      %v1782 = vpop.permute.xlu0 %1781
      %1783 = vrot.lane.b32.xlu0 %v540, 14
      %v1784 = vpop.permute.xlu0 %1783
      %1785 = vrot.lane.b32.xlu0 %v541, 14
      %v1786 = vpop.permute.xlu0 %1785
      %1787 = vrot.lane.b32.xlu0 %v542, 14
      %v1788 = vpop.permute.xlu0 %1787
      %1789 = vrot.lane.b32.xlu0 %v543, 14
      %v1790 = vpop.permute.xlu0 %1789
      %1791 = vrot.lane.b32.xlu0 %v544, 14
      %v1792 = vpop.permute.xlu0 %1791
      %1793 = vrot.lane.b32.xlu0 %v545, 14
      %v1794 = vpop.permute.xlu0 %1793
      %1795 = vrot.lane.b32.xlu0 %v546, 14
      %v1796 = vpop.permute.xlu0 %1795
      %1797 = vrot.lane.b32.xlu0 %v547, 14
      %v1798 = vpop.permute.xlu0 %1797
      %1799 = vrot.lane.b32.xlu0 %v548, 14
      %v1800 = vpop.permute.xlu0 %1799
      %1801 = vrot.lane.b32.xlu0 %v549, 14
      %v1802 = vpop.permute.xlu0 %1801
      %1803 = vrot.lane.b32.xlu0 %v550, 14
      %v1804 = vpop.permute.xlu0 %1803
      %1805 = vrot.lane.b32.xlu0 %v551, 14
      %v1806 = vpop.permute.xlu0 %1805
      %1807 = vrot.lane.b32.xlu0 %v552, 14
      %v1808 = vpop.permute.xlu0 %1807
      %1809 = vrot.lane.b32.xlu0 %v553, 14
      %v1810 = vpop.permute.xlu0 %1809
      %1811 = vrot.lane.b32.xlu0 %v554, 14
      %v1812 = vpop.permute.xlu0 %1811
      %1813 = vrot.lane.b32.xlu0 %v1552, 16
      %v1814 = vpop.permute.xlu0 %1813
      %1815 = vrot.lane.b32.xlu0 %v1554, 16
      %v1816 = vpop.permute.xlu0 %1815
      %1817 = vrot.lane.b32.xlu0 %v1556, 16
      %v1818 = vpop.permute.xlu0 %1817
      %1819 = vrot.lane.b32.xlu0 %v1558, 16
      %v1820 = vpop.permute.xlu0 %1819
      %1821 = vrot.lane.b32.xlu0 %v1560, 16
      %v1822 = vpop.permute.xlu0 %1821
      %1823 = vrot.lane.b32.xlu0 %v1562, 16
      %v1824 = vpop.permute.xlu0 %1823
      %1825 = vrot.lane.b32.xlu0 %v1564, 16
      %v1826 = vpop.permute.xlu0 %1825
      %1827 = vrot.lane.b32.xlu0 %v1566, 16
      %v1828 = vpop.permute.xlu0 %1827
      %1829 = vrot.lane.b32.xlu0 %v1568, 16
      %v1830 = vpop.permute.xlu0 %1829
      %1831 = vrot.lane.b32.xlu0 %v1570, 16
      %v1832 = vpop.permute.xlu0 %1831
      %1833 = vrot.lane.b32.xlu0 %v1572, 16
      %v1834 = vpop.permute.xlu0 %1833
      %1835 = vrot.lane.b32.xlu0 %v1574, 16
      %v1836 = vpop.permute.xlu0 %1835
      %1837 = vrot.lane.b32.xlu0 %v1576, 16
      %v1838 = vpop.permute.xlu0 %1837
      %1839 = vrot.lane.b32.xlu0 %v1578, 16
      %v1840 = vpop.permute.xlu0 %1839
      %1841 = vrot.lane.b32.xlu0 %v1580, 16
      %v1842 = vpop.permute.xlu0 %1841
      %v1845 = vsel %vm1045, %v1533, %v1582
      %v1848 = vsel %vm1045, %v1534, %v1584
      %v1851 = vsel %vm1045, %v1535, %v1586
      %v1854 = vsel %vm1045, %v1536, %v1588
      %v1857 = vsel %vm1045, %v1537, %v1590
      %v1860 = vsel %vm1045, %v1538, %v1592
      %v1863 = vsel %vm1045, %v1539, %v1594
      %v1866 = vsel %vm1045, %v1540, %v1596
      %v1869 = vsel %vm1045, %v1541, %v1598
      %v1872 = vsel %vm1045, %v1542, %v1600
      %v1875 = vsel %vm1045, %v1543, %v1602
      %v1878 = vsel %vm1045, %v1544, %v1604
      %v1881 = vsel %vm1045, %v1545, %v1606
      %v1884 = vsel %vm1045, %v1546, %v1608
      %v1887 = vsel %vm1045, %v1547, %v1610
      %v1889 = vsel %vm1094, %v1845, %v1612
      %v1891 = vsel %vm1094, %v1848, %v1614
      %v1893 = vsel %vm1094, %v1851, %v1616
      %v1895 = vsel %vm1094, %v1854, %v1618
      %v1897 = vsel %vm1094, %v1857, %v1620
      %v1899 = vsel %vm1094, %v1860, %v1622
      %v1901 = vsel %vm1094, %v1863, %v1624
      %v1903 = vsel %vm1094, %v1866, %v1626
      %v1905 = vsel %vm1094, %v1869, %v1628
      %v1907 = vsel %vm1094, %v1872, %v1630
      %v1909 = vsel %vm1094, %v1875, %v1632
      %v1911 = vsel %vm1094, %v1878, %v1634
      %v1913 = vsel %vm1094, %v1881, %v1636
      %v1915 = vsel %vm1094, %v1884, %v1638
      %v1917 = vsel %vm1094, %v1887, %v1640
      %v1919 = vsel %vm1127, %v1096, %v1658
      %v1921 = vsel %vm1127, %v1889, %v1660
      %v1923 = vsel %vm1127, %v1891, %v1662
      %v1925 = vsel %vm1127, %v1893, %v1664
      %v1927 = vsel %vm1127, %v1895, %v1666
      %v1929 = vsel %vm1127, %v1897, %v1668
      %v1931 = vsel %vm1127, %v1899, %v1670
      %v1933 = vsel %vm1127, %v1901, %v1672
      %v1935 = vsel %vm1127, %v1903, %v1674
      %v1937 = vsel %vm1127, %v1905, %v1676
      %v1939 = vsel %vm1127, %v1907, %v1678
      %v1941 = vsel %vm1127, %v1909, %v1680
      %v1943 = vsel %vm1127, %v1911, %v1682
      %v1945 = vsel %vm1127, %v1913, %v1684
      %v1947 = vsel %vm1127, %v1915, %v1686
      %v1949 = vsel %vm1127, %v1917, %v1688
      %v1951 = vsel %vm1160, %v1919, %v1690
      %v1953 = vsel %vm1160, %v1921, %v1692
      %v1955 = vsel %vm1160, %v1923, %v1694
      %v1957 = vsel %vm1160, %v1925, %v1696
      %v1959 = vsel %vm1160, %v1927, %v1698
      %v1961 = vsel %vm1160, %v1929, %v1700
      %v1963 = vsel %vm1160, %v1931, %v1702
      %v1965 = vsel %vm1160, %v1933, %v1704
      %v1967 = vsel %vm1160, %v1935, %v1706
      %v1969 = vsel %vm1160, %v1937, %v1708
      %v1971 = vsel %vm1160, %v1939, %v1710
      %v1973 = vsel %vm1160, %v1941, %v1712
      %v1975 = vsel %vm1160, %v1943, %v1714
      %v1977 = vsel %vm1160, %v1945, %v1716
      %v1979 = vsel %vm1160, %v1947, %v1718
      %v1981 = vsel %vm1160, %v1949, %v1720
      %v1983 = vsel %vm1193, %v1951, %v1722
      %v1985 = vsel %vm1193, %v1953, %v1724
      %v1987 = vsel %vm1193, %v1955, %v1726
      %v1989 = vsel %vm1193, %v1957, %v1728
      %v1991 = vsel %vm1193, %v1959, %v1730
      %v1993 = vsel %vm1193, %v1961, %v1732
      %v1995 = vsel %vm1193, %v1963, %v1734
      %v1997 = vsel %vm1193, %v1965, %v1736
      %v1999 = vsel %vm1193, %v1967, %v1738
      %v2001 = vsel %vm1193, %v1969, %v1740
      %v2003 = vsel %vm1193, %v1971, %v1742
      %v2005 = vsel %vm1193, %v1973, %v1744
      %v2007 = vsel %vm1193, %v1975, %v1746
      %v2009 = vsel %vm1193, %v1977, %v1748
      %v2011 = vsel %vm1193, %v1979, %v1750
      %v2013 = vsel %vm1193, %v1981, %v1752
      %v2015 = vsel %vm1226, %v1983, %v1754
      %v2017 = vsel %vm1226, %v1985, %v1756
      %v2019 = vsel %vm1226, %v1987, %v1758
      %v2021 = vsel %vm1226, %v1989, %v1760
      %v2023 = vsel %vm1226, %v1991, %v1762
      %v2025 = vsel %vm1226, %v1993, %v1764
      %v2027 = vsel %vm1226, %v1995, %v1766
      %v2029 = vsel %vm1226, %v1997, %v1768
      %v2031 = vsel %vm1226, %v1999, %v1770
      %v2033 = vsel %vm1226, %v2001, %v1772
      %v2035 = vsel %vm1226, %v2003, %v1774
      %v2037 = vsel %vm1226, %v2005, %v1776
      %v2039 = vsel %vm1226, %v2007, %v1778
      %v2041 = vsel %vm1226, %v2009, %v1780
      %v2043 = vsel %vm1226, %v2011, %v1782
      %v2044 = vsel %vm1226, %v2013, %v980
      %v2046 = vsel %vm1259, %v2015, %v1784
      %v2048 = vsel %vm1259, %v2017, %v1786
      %v2050 = vsel %vm1259, %v2019, %v1788
      %v2052 = vsel %vm1259, %v2021, %v1790
      %v2054 = vsel %vm1259, %v2023, %v1792
      %v2056 = vsel %vm1259, %v2025, %v1794
      %v2058 = vsel %vm1259, %v2027, %v1796
      %v2060 = vsel %vm1259, %v2029, %v1798
      %v2062 = vsel %vm1259, %v2031, %v1800
      %v2064 = vsel %vm1259, %v2033, %v1802
      %v2066 = vsel %vm1259, %v2035, %v1804
      %v2068 = vsel %vm1259, %v2037, %v1806
      %v2070 = vsel %vm1259, %v2039, %v1808
      %v2072 = vsel %vm1259, %v2041, %v1810
      %v2074 = vsel %vm1259, %v2043, %v1812
      %v2075 = vsel %vm1259, %v2044, %v1012
      %v2077 = vsel %vm1292, %v2046, %v1814
      %v2079 = vsel %vm1292, %v2048, %v1816
      %v2081 = vsel %vm1292, %v2050, %v1818
      %v2083 = vsel %vm1292, %v2052, %v1820
      %v2085 = vsel %vm1292, %v2054, %v1822
      %v2087 = vsel %vm1292, %v2056, %v1824
      %v2089 = vsel %vm1292, %v2058, %v1826
      %v2091 = vsel %vm1292, %v2060, %v1828
      %v2093 = vsel %vm1292, %v2062, %v1830
      %v2095 = vsel %vm1292, %v2064, %v1832
      %v2097 = vsel %vm1292, %v2066, %v1834
      %v2099 = vsel %vm1292, %v2068, %v1836
      %v2101 = vsel %vm1292, %v2070, %v1838
      %v2103 = vsel %vm1292, %v2072, %v1840
      %v2105 = vsel %vm1292, %v2074, %v1842
      %v2106 = vsel %vm1292, %v2075, %v1044
      %v2123 = vunpack.c.l.b16 %v2077
      %v2124 = vunpack.c.l.b16 %v2079
      %v2125 = vunpack.c.l.b16 %v2081
      %v2126 = vunpack.c.l.b16 %v2083
      %v2127 = vunpack.c.l.b16 %v2085
      %v2128 = vunpack.c.l.b16 %v2087
      %v2129 = vunpack.c.l.b16 %v2089
      %v2130 = vunpack.c.l.b16 %v2091
      %v2131 = vunpack.c.l.b16 %v2093
      %v2132 = vunpack.c.l.b16 %v2095
      %v2133 = vunpack.c.l.b16 %v2097
      %v2134 = vunpack.c.l.b16 %v2099
      %v2135 = vunpack.c.l.b16 %v2101
      %v2136 = vunpack.c.l.b16 %v2103
      %v2137 = vunpack.c.l.b16 %v2105
      %v2138 = vunpack.c.l.b16 %v2106
      %v2139 = vpack.c.b16 %v2124, %v2123
      %v2140 = vpack.c.b16 %v2126, %v2125
      %v2141 = vpack.c.b16 %v2128, %v2127
      %v2142 = vpack.c.b16 %v2130, %v2129
      %v2143 = vpack.c.b16 %v2132, %v2131
      %v2144 = vpack.c.b16 %v2134, %v2133
      %v2145 = vpack.c.b16 %v2136, %v2135
      %v2146 = vpack.c.b16 %v2138, %v2137
      %v2150 = vunpack.c.l.b16 %v558
      %v2151 = vunpack.c.l.b16 %v559
      %v2152 = vunpack.c.l.b16 %v560
      %v2153 = vpack.c.b16 %v2151, %v2150
      %v2154 = vpack.c.b16 %v2152, %v2152
      %vm2156 = vcmask 146432
      %v2158 = vsel %vm2156, %v2139, 0
      %v2161 = vsel %vm2156, %v2140, 0
      %v2164 = vsel %vm2156, %v2141, 0
      %v2167 = vsel %vm2156, %v2142, 0
      %v2170 = vsel %vm2156, %v2143, 0
      %v2173 = vsel %vm2156, %v2144, 0
      %v2176 = vsel %vm2156, %v2145, 0
      %v2179 = vsel %vm2156, %v2146, 0
      %v2182 = vsel %vm345, %v2154, 0
      %2184 = vmatpush.bf16.msra.mxu0 0
      %2185 = vmatpush.bf16.msra.mxu0 0
      %2186 = vmatpush.bf16.msra.mxu0 0
      %2187 = vmatpush.bf16.msra.mxu0 0
      %2188 = vmatpush.bf16.msra.mxu0 0
      %2189 = vmatpush.bf16.msra.mxu0 0
      %2190 = vmatpush.bf16.msra.mxu0 %v2182
      %2191 = vmatpush.bf16.msra.mxu0 %v2153
      %2192 = vmatmul.bf16.gmra.mxu0 %v2158
      %v2193 = vpop.f32.mrf.mxu0
      %v2194 = vadd.f32 0.0, %v2193
      %v2195 = vpop.f32.mrf.mxu0
      %v2196 = vadd.f32 0.0, %v2195
      %2197 = vmatmul.bf16.gmra.mxu0 %v2161
      %v2198 = vpop.f32.mrf.mxu0
      %v2199 = vadd.f32 0.0, %v2198
      %v2200 = vpop.f32.mrf.mxu0
      %v2201 = vadd.f32 0.0, %v2200
      %2202 = vmatmul.bf16.gmra.mxu0 %v2164
      %v2203 = vpop.f32.mrf.mxu0
      %v2204 = vadd.f32 0.0, %v2203
      %v2205 = vpop.f32.mrf.mxu0
      %v2206 = vadd.f32 0.0, %v2205
      %2207 = vmatmul.bf16.gmra.mxu0 %v2167
      %v2208 = vpop.f32.mrf.mxu0
      %v2209 = vadd.f32 0.0, %v2208
      %v2210 = vpop.f32.mrf.mxu0
      %v2211 = vadd.f32 0.0, %v2210
      %2212 = vmatmul.bf16.gmra.mxu0 %v2170
      %v2213 = vpop.f32.mrf.mxu0
      %v2214 = vadd.f32 0.0, %v2213
      %v2215 = vpop.f32.mrf.mxu0
      %v2216 = vadd.f32 0.0, %v2215
      %2217 = vmatmul.bf16.gmra.mxu0 %v2173
      %v2218 = vpop.f32.mrf.mxu0
      %v2219 = vadd.f32 0.0, %v2218
      %v2220 = vpop.f32.mrf.mxu0
      %v2221 = vadd.f32 0.0, %v2220
      %2222 = vmatmul.bf16.gmra.mxu0 %v2176
      %v2223 = vpop.f32.mrf.mxu0
      %v2224 = vadd.f32 0.0, %v2223
      %v2225 = vpop.f32.mrf.mxu0
      %v2226 = vadd.f32 0.0, %v2225
      %2227 = vmatmul.bf16.gmra.mxu0 %v2179
      %v2228 = vpop.f32.mrf.mxu0
      %v2229 = vadd.f32 0.0, %v2228
      %v2230 = vpop.f32.mrf.mxu0
      %v2231 = vadd.f32 0.0, %v2230
      %2232 = vdwg.mxu0
      %v2249 = vunpack.c.l.b16 %v1294
      %v2250 = vunpack.c.l.b16 %v1296
      %v2251 = vunpack.c.l.b16 %v1298
      %v2252 = vunpack.c.l.b16 %v1300
      %v2253 = vunpack.c.l.b16 %v1302
      %v2254 = vunpack.c.l.b16 %v1304
      %v2255 = vunpack.c.l.b16 %v1306
      %v2256 = vunpack.c.l.b16 %v1308
      %v2257 = vunpack.c.l.b16 %v1310
      %v2258 = vunpack.c.l.b16 %v1312
      %v2259 = vunpack.c.l.b16 %v1314
      %v2260 = vunpack.c.l.b16 %v1316
      %v2261 = vunpack.c.l.b16 %v1318
      %v2262 = vunpack.c.l.b16 %v1320
      %v2263 = vunpack.c.l.b16 %v1322
      %v2264 = vunpack.c.l.b16 %v1324
      %v2265 = vpack.c.b16 %v2250, %v2249
      %v2266 = vpack.c.b16 %v2252, %v2251
      %v2267 = vpack.c.b16 %v2254, %v2253
      %v2268 = vpack.c.b16 %v2256, %v2255
      %v2269 = vpack.c.b16 %v2258, %v2257
      %v2270 = vpack.c.b16 %v2260, %v2259
      %v2271 = vpack.c.b16 %v2262, %v2261
      %v2272 = vpack.c.b16 %v2264, %v2263
      %v2276 = vunpack.c.l.b16 %v555
      %v2277 = vunpack.c.l.b16 %v556
      %v2278 = vunpack.c.l.b16 %v557
      %v2279 = vpack.c.b16 %v2277, %v2276
      %v2280 = vpack.c.b16 %v2278, %v2278
      %v2283 = vsel %vm2156, %v2265, 0
      %v2286 = vsel %vm2156, %v2266, 0
      %v2289 = vsel %vm2156, %v2267, 0
      %v2292 = vsel %vm2156, %v2268, 0
      %v2295 = vsel %vm2156, %v2269, 0
      %v2298 = vsel %vm2156, %v2270, 0
      %v2301 = vsel %vm2156, %v2271, 0
      %v2304 = vsel %vm2156, %v2272, 0
      %v2307 = vsel %vm345, %v2280, 0
      %2309 = vmatpush.bf16.msra.mxu0 0
      %2310 = vmatpush.bf16.msra.mxu0 0
      %2311 = vmatpush.bf16.msra.mxu0 0
      %2312 = vmatpush.bf16.msra.mxu0 0
      %2313 = vmatpush.bf16.msra.mxu0 0
      %2314 = vmatpush.bf16.msra.mxu0 0
      %2315 = vmatpush.bf16.msra.mxu0 %v2307
      %2316 = vmatpush.bf16.msra.mxu0 %v2279
      %2317 = vmatmul.bf16.gmra.mxu0 %v2283
      %v2318 = vpop.f32.mrf.mxu0
      %v2319 = vadd.f32 %v2194, %v2318
      %v2320 = vpop.f32.mrf.mxu0
      %v2321 = vadd.f32 %v2196, %v2320
      %2322 = vmatmul.bf16.gmra.mxu0 %v2286
      %v2323 = vpop.f32.mrf.mxu0
      %v2324 = vadd.f32 %v2199, %v2323
      %v2325 = vpop.f32.mrf.mxu0
      %v2326 = vadd.f32 %v2201, %v2325
      %2327 = vmatmul.bf16.gmra.mxu0 %v2289
      %v2328 = vpop.f32.mrf.mxu0
      %v2329 = vadd.f32 %v2204, %v2328
      %v2330 = vpop.f32.mrf.mxu0
      %v2331 = vadd.f32 %v2206, %v2330
      %2332 = vmatmul.bf16.gmra.mxu0 %v2292
      %v2333 = vpop.f32.mrf.mxu0
      %v2334 = vadd.f32 %v2209, %v2333
      %v2335 = vpop.f32.mrf.mxu0
      %v2336 = vadd.f32 %v2211, %v2335
      %2337 = vmatmul.bf16.gmra.mxu0 %v2295
      %v2338 = vpop.f32.mrf.mxu0
      %v2339 = vadd.f32 %v2214, %v2338
      %v2340 = vpop.f32.mrf.mxu0
      %v2341 = vadd.f32 %v2216, %v2340
      %2342 = vmatmul.bf16.gmra.mxu0 %v2298
      %v2343 = vpop.f32.mrf.mxu0
      %v2344 = vadd.f32 %v2219, %v2343
      %v2345 = vpop.f32.mrf.mxu0
      %v2346 = vadd.f32 %v2221, %v2345
      %2347 = vmatmul.bf16.gmra.mxu0 %v2301
      %v2348 = vpop.f32.mrf.mxu0
      %v2349 = vadd.f32 %v2224, %v2348
      %v2350 = vpop.f32.mrf.mxu0
      %v2351 = vadd.f32 %v2226, %v2350
      %2352 = vmatmul.bf16.gmra.mxu0 %v2304
      %v2353 = vpop.f32.mrf.mxu0
      %v2354 = vadd.f32 %v2229, %v2353
      %v2355 = vpop.f32.mrf.mxu0
      %v2356 = vadd.f32 %v2231, %v2355
      %2357 = vdwg.mxu0
      %v2358 = vunpack.c.l.b16 %v491
      %v2359 = vunpack.c.l.b16 %v492
      %v2360 = vunpack.c.l.b16 %v493
      %v2361 = vunpack.c.l.b16 %v494
      %v2362 = vunpack.c.l.b16 %v495
      %v2363 = vunpack.c.l.b16 %v496
      %v2364 = vunpack.c.l.b16 %v497
      %v2365 = vunpack.c.l.b16 %v498
      %v2366 = vunpack.c.l.b16 %v499
      %v2367 = vunpack.c.l.b16 %v500
      %v2368 = vunpack.c.l.b16 %v501
      %v2369 = vunpack.c.l.b16 %v502
      %v2370 = vunpack.c.l.b16 %v503
      %v2371 = vunpack.c.l.b16 %v504
      %v2372 = vunpack.c.l.b16 %v505
      %v2373 = vunpack.c.l.b16 %v506
      %v2374 = vpack.c.b16 %v2358, %v2358
      %v2375 = vpack.c.b16 %v2359, %v2359
      %v2376 = vpack.c.b16 %v2360, %v2360
      %v2377 = vpack.c.b16 %v2361, %v2361
      %v2378 = vpack.c.b16 %v2362, %v2362
      %v2379 = vpack.c.b16 %v2363, %v2363
      %v2380 = vpack.c.b16 %v2364, %v2364
      %v2381 = vpack.c.b16 %v2365, %v2365
      %v2382 = vpack.c.b16 %v2366, %v2366
      %v2383 = vpack.c.b16 %v2367, %v2367
      %v2384 = vpack.c.b16 %v2368, %v2368
      %v2385 = vpack.c.b16 %v2369, %v2369
      %v2386 = vpack.c.b16 %v2370, %v2370
      %v2387 = vpack.c.b16 %v2371, %v2371
      %v2388 = vpack.c.b16 %v2372, %v2372
      %v2389 = vpack.c.b16 %v2373, %v2373
      %v2391 = vshrl.u32 %v2374, 16
      %v2393 = vshll.u32 %v2374, 16
      %v2395 = vrot.slane %v2393, 1
      %v2396 = vor.u32 %v2391, %v2395
      %v2398 = vshrl.u32 %v2375, 16
      %v2400 = vshll.u32 %v2375, 16
      %v2402 = vrot.slane %v2400, 1
      %v2403 = vor.u32 %v2398, %v2402
      %v2405 = vshrl.u32 %v2376, 16
      %v2407 = vshll.u32 %v2376, 16
      %v2409 = vrot.slane %v2407, 1
      %v2410 = vor.u32 %v2405, %v2409
      %v2412 = vshrl.u32 %v2377, 16
      %v2414 = vshll.u32 %v2377, 16
      %v2416 = vrot.slane %v2414, 1
      %v2417 = vor.u32 %v2412, %v2416
      %v2419 = vshrl.u32 %v2378, 16
      %v2421 = vshll.u32 %v2378, 16
      %v2423 = vrot.slane %v2421, 1
      %v2424 = vor.u32 %v2419, %v2423
      %v2426 = vshrl.u32 %v2379, 16
      %v2428 = vshll.u32 %v2379, 16
      %v2430 = vrot.slane %v2428, 1
      %v2431 = vor.u32 %v2426, %v2430
      %v2433 = vshrl.u32 %v2380, 16
      %v2435 = vshll.u32 %v2380, 16
      %v2437 = vrot.slane %v2435, 1
      %v2438 = vor.u32 %v2433, %v2437
      %v2440 = vshrl.u32 %v2381, 16
      %v2442 = vshll.u32 %v2381, 16
      %v2444 = vrot.slane %v2442, 1
      %v2445 = vor.u32 %v2440, %v2444
      %v2447 = vshrl.u32 %v2382, 16
      %v2449 = vshll.u32 %v2382, 16
      %v2451 = vrot.slane %v2449, 1
      %v2452 = vor.u32 %v2447, %v2451
      %v2454 = vshrl.u32 %v2383, 16
      %v2456 = vshll.u32 %v2383, 16
      %v2458 = vrot.slane %v2456, 1
      %v2459 = vor.u32 %v2454, %v2458
      %v2461 = vshrl.u32 %v2384, 16
      %v2463 = vshll.u32 %v2384, 16
      %v2465 = vrot.slane %v2463, 1
      %v2466 = vor.u32 %v2461, %v2465
      %v2468 = vshrl.u32 %v2385, 16
      %v2470 = vshll.u32 %v2385, 16
      %v2472 = vrot.slane %v2470, 1
      %v2473 = vor.u32 %v2468, %v2472
      %v2475 = vshrl.u32 %v2386, 16
      %v2477 = vshll.u32 %v2386, 16
      %v2479 = vrot.slane %v2477, 1
      %v2480 = vor.u32 %v2475, %v2479
      %v2482 = vshrl.u32 %v2387, 16
      %v2484 = vshll.u32 %v2387, 16
      %v2486 = vrot.slane %v2484, 1
      %v2487 = vor.u32 %v2482, %v2486
      %v2489 = vshrl.u32 %v2388, 16
      %v2491 = vshll.u32 %v2388, 16
      %v2493 = vrot.slane %v2491, 1
      %v2494 = vor.u32 %v2489, %v2493
      %v2496 = vshrl.u32 %v2389, 16
      %v2498 = vshll.u32 %v2389, 16
      %v2500 = vrot.slane %v2498, 1
      %v2501 = vor.u32 %v2496, %v2500
      %vm2518 = vcmask 1043456
      %vm2519 = vsmask.f32 3328
      %vm2520 = vmand %vm2518, %vm2519
      %v2521 = vsel %vm2520, %v2396, 0
      %v2522 = vsel %vm2520, %v2403, 0
      %v2523 = vsel %vm2520, %v2410, 0
      %v2524 = vsel %vm2520, %v2417, 0
      %v2525 = vsel %vm2520, %v2424, 0
      %v2526 = vsel %vm2520, %v2431, 0
      %v2527 = vsel %vm2520, %v2438, 0
      %v2528 = vsel %vm2520, %v2445, 0
      %v2529 = vsel %vm2520, %v2452, 0
      %v2530 = vsel %vm2520, %v2459, 0
      %v2531 = vsel %vm2520, %v2466, 0
      %v2532 = vsel %vm2520, %v2473, 0
      %v2533 = vsel %vm2520, %v2480, 0
      %v2534 = vsel %vm2520, %v2487, 0
      %v2535 = vsel %vm2520, %v2494, 0
      %v2536 = vsel %vm2520, %v2501, 0
      %2537 = vrot.lane.b32.xlu0 %v507, 2
      %v2538 = vpop.permute.xlu0 %2537
      %2539 = vrot.lane.b32.xlu0 %v508, 2
      %v2540 = vpop.permute.xlu0 %2539
      %2541 = vrot.lane.b32.xlu0 %v509, 2
      %v2542 = vpop.permute.xlu0 %2541
      %2543 = vrot.lane.b32.xlu0 %v510, 2
      %v2544 = vpop.permute.xlu0 %2543
      %2545 = vrot.lane.b32.xlu0 %v511, 2
      %v2546 = vpop.permute.xlu0 %2545
      %2547 = vrot.lane.b32.xlu0 %v512, 2
      %v2548 = vpop.permute.xlu0 %2547
      %2549 = vrot.lane.b32.xlu0 %v513, 2
      %v2550 = vpop.permute.xlu0 %2549
      %2551 = vrot.lane.b32.xlu0 %v514, 2
      %v2552 = vpop.permute.xlu0 %2551
      %2553 = vrot.lane.b32.xlu0 %v515, 2
      %v2554 = vpop.permute.xlu0 %2553
      %2555 = vrot.lane.b32.xlu0 %v516, 2
      %v2556 = vpop.permute.xlu0 %2555
      %2557 = vrot.lane.b32.xlu0 %v517, 2
      %v2558 = vpop.permute.xlu0 %2557
      %2559 = vrot.lane.b32.xlu0 %v518, 2
      %v2560 = vpop.permute.xlu0 %2559
      %2561 = vrot.lane.b32.xlu0 %v519, 2
      %v2562 = vpop.permute.xlu0 %2561
      %2563 = vrot.lane.b32.xlu0 %v520, 2
      %v2564 = vpop.permute.xlu0 %2563
      %2565 = vrot.lane.b32.xlu0 %v521, 2
      %v2566 = vpop.permute.xlu0 %2565
      %2582 = vrot.lane.b32.xlu0 %v2521, 4
      %v2583 = vpop.permute.xlu0 %2582
      %2584 = vrot.lane.b32.xlu0 %v2522, 4
      %v2585 = vpop.permute.xlu0 %2584
      %2586 = vrot.lane.b32.xlu0 %v2523, 4
      %v2587 = vpop.permute.xlu0 %2586
      %2588 = vrot.lane.b32.xlu0 %v2524, 4
      %v2589 = vpop.permute.xlu0 %2588
      %2590 = vrot.lane.b32.xlu0 %v2525, 4
      %v2591 = vpop.permute.xlu0 %2590
      %2592 = vrot.lane.b32.xlu0 %v2526, 4
      %v2593 = vpop.permute.xlu0 %2592
      %2594 = vrot.lane.b32.xlu0 %v2527, 4
      %v2595 = vpop.permute.xlu0 %2594
      %2596 = vrot.lane.b32.xlu0 %v2528, 4
      %v2597 = vpop.permute.xlu0 %2596
      %2598 = vrot.lane.b32.xlu0 %v2529, 4
      %v2599 = vpop.permute.xlu0 %2598
      %2600 = vrot.lane.b32.xlu0 %v2530, 4
      %v2601 = vpop.permute.xlu0 %2600
      %2602 = vrot.lane.b32.xlu0 %v2531, 4
      %v2603 = vpop.permute.xlu0 %2602
      %2604 = vrot.lane.b32.xlu0 %v2532, 4
      %v2605 = vpop.permute.xlu0 %2604
      %2606 = vrot.lane.b32.xlu0 %v2533, 4
      %v2607 = vpop.permute.xlu0 %2606
      %2608 = vrot.lane.b32.xlu0 %v2534, 4
      %v2609 = vpop.permute.xlu0 %2608
      %2610 = vrot.lane.b32.xlu0 %v2535, 4
      %v2611 = vpop.permute.xlu0 %2610
      %2612 = vrot.lane.b32.xlu0 %v491, 6
      %v2613 = vpop.permute.xlu0 %2612
      %2614 = vrot.lane.b32.xlu0 %v492, 6
      %v2615 = vpop.permute.xlu0 %2614
      %2616 = vrot.lane.b32.xlu0 %v493, 6
      %v2617 = vpop.permute.xlu0 %2616
      %2618 = vrot.lane.b32.xlu0 %v494, 6
      %v2619 = vpop.permute.xlu0 %2618
      %2620 = vrot.lane.b32.xlu0 %v495, 6
      %v2621 = vpop.permute.xlu0 %2620
      %2622 = vrot.lane.b32.xlu0 %v496, 6
      %v2623 = vpop.permute.xlu0 %2622
      %2624 = vrot.lane.b32.xlu0 %v497, 6
      %v2625 = vpop.permute.xlu0 %2624
      %2626 = vrot.lane.b32.xlu0 %v498, 6
      %v2627 = vpop.permute.xlu0 %2626
      %2628 = vrot.lane.b32.xlu0 %v499, 6
      %v2629 = vpop.permute.xlu0 %2628
      %2630 = vrot.lane.b32.xlu0 %v500, 6
      %v2631 = vpop.permute.xlu0 %2630
      %2632 = vrot.lane.b32.xlu0 %v501, 6
      %v2633 = vpop.permute.xlu0 %2632
      %2634 = vrot.lane.b32.xlu0 %v502, 6
      %v2635 = vpop.permute.xlu0 %2634
      %2636 = vrot.lane.b32.xlu0 %v503, 6
      %v2637 = vpop.permute.xlu0 %2636
      %2638 = vrot.lane.b32.xlu0 %v504, 6
      %v2639 = vpop.permute.xlu0 %2638
      %2640 = vrot.lane.b32.xlu0 %v505, 6
      %v2641 = vpop.permute.xlu0 %2640
      %2642 = vrot.lane.b32.xlu0 %v506, 6
      %v2643 = vpop.permute.xlu0 %2642
      %2644 = vrot.lane.b32.xlu0 %v507, 8
      %v2645 = vpop.permute.xlu0 %2644
      %2646 = vrot.lane.b32.xlu0 %v508, 8
      %v2647 = vpop.permute.xlu0 %2646
      %2648 = vrot.lane.b32.xlu0 %v509, 8
      %v2649 = vpop.permute.xlu0 %2648
      %2650 = vrot.lane.b32.xlu0 %v510, 8
      %v2651 = vpop.permute.xlu0 %2650
      %2652 = vrot.lane.b32.xlu0 %v511, 8
      %v2653 = vpop.permute.xlu0 %2652
      %2654 = vrot.lane.b32.xlu0 %v512, 8
      %v2655 = vpop.permute.xlu0 %2654
      %2656 = vrot.lane.b32.xlu0 %v513, 8
      %v2657 = vpop.permute.xlu0 %2656
      %2658 = vrot.lane.b32.xlu0 %v514, 8
      %v2659 = vpop.permute.xlu0 %2658
      %2660 = vrot.lane.b32.xlu0 %v515, 8
      %v2661 = vpop.permute.xlu0 %2660
      %2662 = vrot.lane.b32.xlu0 %v516, 8
      %v2663 = vpop.permute.xlu0 %2662
      %2664 = vrot.lane.b32.xlu0 %v517, 8
      %v2665 = vpop.permute.xlu0 %2664
      %2666 = vrot.lane.b32.xlu0 %v518, 8
      %v2667 = vpop.permute.xlu0 %2666
      %2668 = vrot.lane.b32.xlu0 %v519, 8
      %v2669 = vpop.permute.xlu0 %2668
      %2670 = vrot.lane.b32.xlu0 %v520, 8
      %v2671 = vpop.permute.xlu0 %2670
      %2672 = vrot.lane.b32.xlu0 %v521, 8
      %v2673 = vpop.permute.xlu0 %2672
      %2674 = vrot.lane.b32.xlu0 %v522, 8
      %v2675 = vpop.permute.xlu0 %2674
      %2677 = vrot.lane.b32.xlu0 %v2521, 10
      %v2678 = vpop.permute.xlu0 %2677
      %2679 = vrot.lane.b32.xlu0 %v2522, 10
      %v2680 = vpop.permute.xlu0 %2679
      %2681 = vrot.lane.b32.xlu0 %v2523, 10
      %v2682 = vpop.permute.xlu0 %2681
      %2683 = vrot.lane.b32.xlu0 %v2524, 10
      %v2684 = vpop.permute.xlu0 %2683
      %2685 = vrot.lane.b32.xlu0 %v2525, 10
      %v2686 = vpop.permute.xlu0 %2685
      %2687 = vrot.lane.b32.xlu0 %v2526, 10
      %v2688 = vpop.permute.xlu0 %2687
      %2689 = vrot.lane.b32.xlu0 %v2527, 10
      %v2690 = vpop.permute.xlu0 %2689
      %2691 = vrot.lane.b32.xlu0 %v2528, 10
      %v2692 = vpop.permute.xlu0 %2691
      %2693 = vrot.lane.b32.xlu0 %v2529, 10
      %v2694 = vpop.permute.xlu0 %2693
      %2695 = vrot.lane.b32.xlu0 %v2530, 10
      %v2696 = vpop.permute.xlu0 %2695
      %2697 = vrot.lane.b32.xlu0 %v2531, 10
      %v2698 = vpop.permute.xlu0 %2697
      %2699 = vrot.lane.b32.xlu0 %v2532, 10
      %v2700 = vpop.permute.xlu0 %2699
      %2701 = vrot.lane.b32.xlu0 %v2533, 10
      %v2702 = vpop.permute.xlu0 %2701
      %2703 = vrot.lane.b32.xlu0 %v2534, 10
      %v2704 = vpop.permute.xlu0 %2703
      %2705 = vrot.lane.b32.xlu0 %v2535, 10
      %v2706 = vpop.permute.xlu0 %2705
      %2707 = vrot.lane.b32.xlu0 %v2536, 10
      %v2708 = vpop.permute.xlu0 %2707
      %2709 = vrot.lane.b32.xlu0 %v492, 12
      %v2710 = vpop.permute.xlu0 %2709
      %2711 = vrot.lane.b32.xlu0 %v493, 12
      %v2712 = vpop.permute.xlu0 %2711
      %2713 = vrot.lane.b32.xlu0 %v494, 12
      %v2714 = vpop.permute.xlu0 %2713
      %2715 = vrot.lane.b32.xlu0 %v495, 12
      %v2716 = vpop.permute.xlu0 %2715
      %2717 = vrot.lane.b32.xlu0 %v496, 12
      %v2718 = vpop.permute.xlu0 %2717
      %2719 = vrot.lane.b32.xlu0 %v497, 12
      %v2720 = vpop.permute.xlu0 %2719
      %2721 = vrot.lane.b32.xlu0 %v498, 12
      %v2722 = vpop.permute.xlu0 %2721
      %2723 = vrot.lane.b32.xlu0 %v499, 12
      %v2724 = vpop.permute.xlu0 %2723
      %2725 = vrot.lane.b32.xlu0 %v500, 12
      %v2726 = vpop.permute.xlu0 %2725
      %2727 = vrot.lane.b32.xlu0 %v501, 12
      %v2728 = vpop.permute.xlu0 %2727
      %2729 = vrot.lane.b32.xlu0 %v502, 12
      %v2730 = vpop.permute.xlu0 %2729
      %2731 = vrot.lane.b32.xlu0 %v503, 12
      %v2732 = vpop.permute.xlu0 %2731
      %2733 = vrot.lane.b32.xlu0 %v504, 12
      %v2734 = vpop.permute.xlu0 %2733
      %2735 = vrot.lane.b32.xlu0 %v505, 12
      %v2736 = vpop.permute.xlu0 %2735
      %2737 = vrot.lane.b32.xlu0 %v506, 12
      %v2738 = vpop.permute.xlu0 %2737
      %2739 = vrot.lane.b32.xlu0 %v508, 14
      %v2740 = vpop.permute.xlu0 %2739
      %2741 = vrot.lane.b32.xlu0 %v509, 14
      %v2742 = vpop.permute.xlu0 %2741
      %2743 = vrot.lane.b32.xlu0 %v510, 14
      %v2744 = vpop.permute.xlu0 %2743
      %2745 = vrot.lane.b32.xlu0 %v511, 14
      %v2746 = vpop.permute.xlu0 %2745
      %2747 = vrot.lane.b32.xlu0 %v512, 14
      %v2748 = vpop.permute.xlu0 %2747
      %2749 = vrot.lane.b32.xlu0 %v513, 14
      %v2750 = vpop.permute.xlu0 %2749
      %2751 = vrot.lane.b32.xlu0 %v514, 14
      %v2752 = vpop.permute.xlu0 %2751
      %2753 = vrot.lane.b32.xlu0 %v515, 14
      %v2754 = vpop.permute.xlu0 %2753
      %2755 = vrot.lane.b32.xlu0 %v516, 14
      %v2756 = vpop.permute.xlu0 %2755
      %2757 = vrot.lane.b32.xlu0 %v517, 14
      %v2758 = vpop.permute.xlu0 %2757
      %2759 = vrot.lane.b32.xlu0 %v518, 14
      %v2760 = vpop.permute.xlu0 %2759
      %2761 = vrot.lane.b32.xlu0 %v519, 14
      %v2762 = vpop.permute.xlu0 %2761
      %2763 = vrot.lane.b32.xlu0 %v520, 14
      %v2764 = vpop.permute.xlu0 %2763
      %2765 = vrot.lane.b32.xlu0 %v521, 14
      %v2766 = vpop.permute.xlu0 %2765
      %2767 = vrot.lane.b32.xlu0 %v522, 14
      %v2768 = vpop.permute.xlu0 %2767
      %2769 = vrot.lane.b32.xlu0 %v2522, 16
      %v2770 = vpop.permute.xlu0 %2769
      %2771 = vrot.lane.b32.xlu0 %v2523, 16
      %v2772 = vpop.permute.xlu0 %2771
      %2773 = vrot.lane.b32.xlu0 %v2524, 16
      %v2774 = vpop.permute.xlu0 %2773
      %2775 = vrot.lane.b32.xlu0 %v2525, 16
      %v2776 = vpop.permute.xlu0 %2775
      %2777 = vrot.lane.b32.xlu0 %v2526, 16
      %v2778 = vpop.permute.xlu0 %2777
      %2779 = vrot.lane.b32.xlu0 %v2527, 16
      %v2780 = vpop.permute.xlu0 %2779
      %2781 = vrot.lane.b32.xlu0 %v2528, 16
      %v2782 = vpop.permute.xlu0 %2781
      %2783 = vrot.lane.b32.xlu0 %v2529, 16
      %v2784 = vpop.permute.xlu0 %2783
      %2785 = vrot.lane.b32.xlu0 %v2530, 16
      %v2786 = vpop.permute.xlu0 %2785
      %2787 = vrot.lane.b32.xlu0 %v2531, 16
      %v2788 = vpop.permute.xlu0 %2787
      %2789 = vrot.lane.b32.xlu0 %v2532, 16
      %v2790 = vpop.permute.xlu0 %2789
      %2791 = vrot.lane.b32.xlu0 %v2533, 16
      %v2792 = vpop.permute.xlu0 %2791
      %2793 = vrot.lane.b32.xlu0 %v2534, 16
      %v2794 = vpop.permute.xlu0 %2793
      %2795 = vrot.lane.b32.xlu0 %v2535, 16
      %v2796 = vpop.permute.xlu0 %2795
      %2797 = vrot.lane.b32.xlu0 %v2536, 16
      %v2798 = vpop.permute.xlu0 %2797
      %v2801 = vsel %vm1045, %v491, %v2538
      %v2804 = vsel %vm1045, %v492, %v2540
      %v2807 = vsel %vm1045, %v493, %v2542
      %v2810 = vsel %vm1045, %v494, %v2544
      %v2813 = vsel %vm1045, %v495, %v2546
      %v2816 = vsel %vm1045, %v496, %v2548
      %v2819 = vsel %vm1045, %v497, %v2550
      %v2822 = vsel %vm1045, %v498, %v2552
      %v2825 = vsel %vm1045, %v499, %v2554
      %v2828 = vsel %vm1045, %v500, %v2556
      %v2831 = vsel %vm1045, %v501, %v2558
      %v2834 = vsel %vm1045, %v502, %v2560
      %v2837 = vsel %vm1045, %v503, %v2562
      %v2840 = vsel %vm1045, %v504, %v2564
      %v2843 = vsel %vm1045, %v505, %v2566
      %v2845 = vsel %vm1094, %v2801, %v2583
      %v2847 = vsel %vm1094, %v2804, %v2585
      %v2849 = vsel %vm1094, %v2807, %v2587
      %v2851 = vsel %vm1094, %v2810, %v2589
      %v2853 = vsel %vm1094, %v2813, %v2591
      %v2855 = vsel %vm1094, %v2816, %v2593
      %v2857 = vsel %vm1094, %v2819, %v2595
      %v2859 = vsel %vm1094, %v2822, %v2597
      %v2861 = vsel %vm1094, %v2825, %v2599
      %v2863 = vsel %vm1094, %v2828, %v2601
      %v2865 = vsel %vm1094, %v2831, %v2603
      %v2867 = vsel %vm1094, %v2834, %v2605
      %v2869 = vsel %vm1094, %v2837, %v2607
      %v2871 = vsel %vm1094, %v2840, %v2609
      %v2873 = vsel %vm1094, %v2843, %v2611
      %v2875 = vsel %vm1127, %v1096, %v2613
      %v2877 = vsel %vm1127, %v2845, %v2615
      %v2879 = vsel %vm1127, %v2847, %v2617
      %v2881 = vsel %vm1127, %v2849, %v2619
      %v2883 = vsel %vm1127, %v2851, %v2621
      %v2885 = vsel %vm1127, %v2853, %v2623
      %v2887 = vsel %vm1127, %v2855, %v2625
      %v2889 = vsel %vm1127, %v2857, %v2627
      %v2891 = vsel %vm1127, %v2859, %v2629
      %v2893 = vsel %vm1127, %v2861, %v2631
      %v2895 = vsel %vm1127, %v2863, %v2633
      %v2897 = vsel %vm1127, %v2865, %v2635
      %v2899 = vsel %vm1127, %v2867, %v2637
      %v2901 = vsel %vm1127, %v2869, %v2639
      %v2903 = vsel %vm1127, %v2871, %v2641
      %v2905 = vsel %vm1127, %v2873, %v2643
      %v2907 = vsel %vm1160, %v2875, %v2645
      %v2909 = vsel %vm1160, %v2877, %v2647
      %v2911 = vsel %vm1160, %v2879, %v2649
      %v2913 = vsel %vm1160, %v2881, %v2651
      %v2915 = vsel %vm1160, %v2883, %v2653
      %v2917 = vsel %vm1160, %v2885, %v2655
      %v2919 = vsel %vm1160, %v2887, %v2657
      %v2921 = vsel %vm1160, %v2889, %v2659
      %v2923 = vsel %vm1160, %v2891, %v2661
      %v2925 = vsel %vm1160, %v2893, %v2663
      %v2927 = vsel %vm1160, %v2895, %v2665
      %v2929 = vsel %vm1160, %v2897, %v2667
      %v2931 = vsel %vm1160, %v2899, %v2669
      %v2933 = vsel %vm1160, %v2901, %v2671
      %v2935 = vsel %vm1160, %v2903, %v2673
      %v2937 = vsel %vm1160, %v2905, %v2675
      %v2939 = vsel %vm1193, %v2907, %v2678
      %v2941 = vsel %vm1193, %v2909, %v2680
      %v2943 = vsel %vm1193, %v2911, %v2682
      %v2945 = vsel %vm1193, %v2913, %v2684
      %v2947 = vsel %vm1193, %v2915, %v2686
      %v2949 = vsel %vm1193, %v2917, %v2688
      %v2951 = vsel %vm1193, %v2919, %v2690
      %v2953 = vsel %vm1193, %v2921, %v2692
      %v2955 = vsel %vm1193, %v2923, %v2694
      %v2957 = vsel %vm1193, %v2925, %v2696
      %v2959 = vsel %vm1193, %v2927, %v2698
      %v2961 = vsel %vm1193, %v2929, %v2700
      %v2963 = vsel %vm1193, %v2931, %v2702
      %v2965 = vsel %vm1193, %v2933, %v2704
      %v2967 = vsel %vm1193, %v2935, %v2706
      %v2969 = vsel %vm1193, %v2937, %v2708
      %v2971 = vsel %vm1226, %v2939, %v2710
      %v2973 = vsel %vm1226, %v2941, %v2712
      %v2975 = vsel %vm1226, %v2943, %v2714
      %v2977 = vsel %vm1226, %v2945, %v2716
      %v2979 = vsel %vm1226, %v2947, %v2718
      %v2981 = vsel %vm1226, %v2949, %v2720
      %v2983 = vsel %vm1226, %v2951, %v2722
      %v2985 = vsel %vm1226, %v2953, %v2724
      %v2987 = vsel %vm1226, %v2955, %v2726
      %v2989 = vsel %vm1226, %v2957, %v2728
      %v2991 = vsel %vm1226, %v2959, %v2730
      %v2993 = vsel %vm1226, %v2961, %v2732
      %v2995 = vsel %vm1226, %v2963, %v2734
      %v2997 = vsel %vm1226, %v2965, %v2736
      %v2999 = vsel %vm1226, %v2967, %v2738
      %v3000 = vsel %vm1226, %v2969, %v980
      %v3002 = vsel %vm1259, %v2971, %v2740
      %v3004 = vsel %vm1259, %v2973, %v2742
      %v3006 = vsel %vm1259, %v2975, %v2744
      %v3008 = vsel %vm1259, %v2977, %v2746
      %v3010 = vsel %vm1259, %v2979, %v2748
      %v3012 = vsel %vm1259, %v2981, %v2750
      %v3014 = vsel %vm1259, %v2983, %v2752
      %v3016 = vsel %vm1259, %v2985, %v2754
      %v3018 = vsel %vm1259, %v2987, %v2756
      %v3020 = vsel %vm1259, %v2989, %v2758
      %v3022 = vsel %vm1259, %v2991, %v2760
      %v3024 = vsel %vm1259, %v2993, %v2762
      %v3026 = vsel %vm1259, %v2995, %v2764
      %v3028 = vsel %vm1259, %v2997, %v2766
      %v3030 = vsel %vm1259, %v2999, %v2768
      %v3031 = vsel %vm1259, %v3000, %v1012
      %v3033 = vsel %vm1292, %v3002, %v2770
      %v3035 = vsel %vm1292, %v3004, %v2772
      %v3037 = vsel %vm1292, %v3006, %v2774
      %v3039 = vsel %vm1292, %v3008, %v2776
      %v3041 = vsel %vm1292, %v3010, %v2778
      %v3043 = vsel %vm1292, %v3012, %v2780
      %v3045 = vsel %vm1292, %v3014, %v2782
      %v3047 = vsel %vm1292, %v3016, %v2784
      %v3049 = vsel %vm1292, %v3018, %v2786
      %v3051 = vsel %vm1292, %v3020, %v2788
      %v3053 = vsel %vm1292, %v3022, %v2790
      %v3055 = vsel %vm1292, %v3024, %v2792
      %v3057 = vsel %vm1292, %v3026, %v2794
      %v3059 = vsel %vm1292, %v3028, %v2796
      %v3061 = vsel %vm1292, %v3030, %v2798
      %v3062 = vsel %vm1292, %v3031, %v1044
      %v3063 = vrot.slane %v1377, 1
      %v3064 = vor.u32 %v1374, %v3063
      %v3065 = vrot.slane %v1384, 1
      %v3066 = vor.u32 %v1381, %v3065
      %v3067 = vrot.slane %v1391, 1
      %v3068 = vor.u32 %v1388, %v3067
      %v3069 = vrot.slane %v1398, 1
      %v3070 = vor.u32 %v1395, %v3069
      %v3071 = vrot.slane %v1405, 1
      %v3072 = vor.u32 %v1402, %v3071
      %v3073 = vrot.slane %v1412, 1
      %v3074 = vor.u32 %v1409, %v3073
      %v3075 = vrot.slane %v1419, 1
      %v3076 = vor.u32 %v1416, %v3075
      %v3077 = vrot.slane %v1426, 1
      %v3078 = vor.u32 %v1423, %v3077
      %v3079 = vrot.slane %v1433, 1
      %v3080 = vor.u32 %v1430, %v3079
      %v3081 = vrot.slane %v1440, 1
      %v3082 = vor.u32 %v1437, %v3081
      %v3083 = vrot.slane %v1447, 1
      %v3084 = vor.u32 %v1444, %v3083
      %v3085 = vrot.slane %v1454, 1
      %v3086 = vor.u32 %v1451, %v3085
      %v3087 = vrot.slane %v1461, 1
      %v3088 = vor.u32 %v1458, %v3087
      %v3089 = vrot.slane %v1468, 1
      %v3090 = vor.u32 %v1465, %v3089
      %v3091 = vrot.slane %v1475, 1
      %v3092 = vor.u32 %v1472, %v3091
      %v3093 = vrot.slane %v1482, 1
      %v3094 = vor.u32 %v1479, %v3093
      %v3111 = vsel %vm2520, %v3064, 0
      %v3112 = vsel %vm2520, %v3066, 0
      %v3113 = vsel %vm2520, %v3068, 0
      %v3114 = vsel %vm2520, %v3070, 0
      %v3115 = vsel %vm2520, %v3072, 0
      %v3116 = vsel %vm2520, %v3074, 0
      %v3117 = vsel %vm2520, %v3076, 0
      %v3118 = vsel %vm2520, %v3078, 0
      %v3119 = vsel %vm2520, %v3080, 0
      %v3120 = vsel %vm2520, %v3082, 0
      %v3121 = vsel %vm2520, %v3084, 0
      %v3122 = vsel %vm2520, %v3086, 0
      %v3123 = vsel %vm2520, %v3088, 0
      %v3124 = vsel %vm2520, %v3090, 0
      %v3125 = vsel %vm2520, %v3092, 0
      %v3126 = vsel %vm2520, %v3094, 0
      %3127 = vrot.lane.b32.xlu0 %v1550, 2
      %v3128 = vpop.permute.xlu0 %3127
      %3129 = vrot.lane.b32.xlu0 %v1552, 2
      %v3130 = vpop.permute.xlu0 %3129
      %3131 = vrot.lane.b32.xlu0 %v1554, 2
      %v3132 = vpop.permute.xlu0 %3131
      %3133 = vrot.lane.b32.xlu0 %v1556, 2
      %v3134 = vpop.permute.xlu0 %3133
      %3135 = vrot.lane.b32.xlu0 %v1558, 2
      %v3136 = vpop.permute.xlu0 %3135
      %3137 = vrot.lane.b32.xlu0 %v1560, 2
      %v3138 = vpop.permute.xlu0 %3137
      %3139 = vrot.lane.b32.xlu0 %v1562, 2
      %v3140 = vpop.permute.xlu0 %3139
      %3141 = vrot.lane.b32.xlu0 %v1564, 2
      %v3142 = vpop.permute.xlu0 %3141
      %3143 = vrot.lane.b32.xlu0 %v1566, 2
      %v3144 = vpop.permute.xlu0 %3143
      %3145 = vrot.lane.b32.xlu0 %v1568, 2
      %v3146 = vpop.permute.xlu0 %3145
      %3147 = vrot.lane.b32.xlu0 %v1570, 2
      %v3148 = vpop.permute.xlu0 %3147
      %3149 = vrot.lane.b32.xlu0 %v1572, 2
      %v3150 = vpop.permute.xlu0 %3149
      %3151 = vrot.lane.b32.xlu0 %v1574, 2
      %v3152 = vpop.permute.xlu0 %3151
      %3153 = vrot.lane.b32.xlu0 %v1576, 2
      %v3154 = vpop.permute.xlu0 %3153
      %3155 = vrot.lane.b32.xlu0 %v1578, 2
      %v3156 = vpop.permute.xlu0 %3155
      %3172 = vrot.lane.b32.xlu0 %v3111, 4
      %v3173 = vpop.permute.xlu0 %3172
      %3174 = vrot.lane.b32.xlu0 %v3112, 4
      %v3175 = vpop.permute.xlu0 %3174
      %3176 = vrot.lane.b32.xlu0 %v3113, 4
      %v3177 = vpop.permute.xlu0 %3176
      %3178 = vrot.lane.b32.xlu0 %v3114, 4
      %v3179 = vpop.permute.xlu0 %3178
      %3180 = vrot.lane.b32.xlu0 %v3115, 4
      %v3181 = vpop.permute.xlu0 %3180
      %3182 = vrot.lane.b32.xlu0 %v3116, 4
      %v3183 = vpop.permute.xlu0 %3182
      %3184 = vrot.lane.b32.xlu0 %v3117, 4
      %v3185 = vpop.permute.xlu0 %3184
      %3186 = vrot.lane.b32.xlu0 %v3118, 4
      %v3187 = vpop.permute.xlu0 %3186
      %3188 = vrot.lane.b32.xlu0 %v3119, 4
      %v3189 = vpop.permute.xlu0 %3188
      %3190 = vrot.lane.b32.xlu0 %v3120, 4
      %v3191 = vpop.permute.xlu0 %3190
      %3192 = vrot.lane.b32.xlu0 %v3121, 4
      %v3193 = vpop.permute.xlu0 %3192
      %3194 = vrot.lane.b32.xlu0 %v3122, 4
      %v3195 = vpop.permute.xlu0 %3194
      %3196 = vrot.lane.b32.xlu0 %v3123, 4
      %v3197 = vpop.permute.xlu0 %3196
      %3198 = vrot.lane.b32.xlu0 %v3124, 4
      %v3199 = vpop.permute.xlu0 %3198
      %3200 = vrot.lane.b32.xlu0 %v3125, 4
      %v3201 = vpop.permute.xlu0 %3200
      %3202 = vrot.lane.b32.xlu0 %v539, 6
      %v3203 = vpop.permute.xlu0 %3202
      %3204 = vrot.lane.b32.xlu0 %v540, 6
      %v3205 = vpop.permute.xlu0 %3204
      %3206 = vrot.lane.b32.xlu0 %v541, 6
      %v3207 = vpop.permute.xlu0 %3206
      %3208 = vrot.lane.b32.xlu0 %v542, 6
      %v3209 = vpop.permute.xlu0 %3208
      %3210 = vrot.lane.b32.xlu0 %v543, 6
      %v3211 = vpop.permute.xlu0 %3210
      %3212 = vrot.lane.b32.xlu0 %v544, 6
      %v3213 = vpop.permute.xlu0 %3212
      %3214 = vrot.lane.b32.xlu0 %v545, 6
      %v3215 = vpop.permute.xlu0 %3214
      %3216 = vrot.lane.b32.xlu0 %v546, 6
      %v3217 = vpop.permute.xlu0 %3216
      %3218 = vrot.lane.b32.xlu0 %v547, 6
      %v3219 = vpop.permute.xlu0 %3218
      %3220 = vrot.lane.b32.xlu0 %v548, 6
      %v3221 = vpop.permute.xlu0 %3220
      %3222 = vrot.lane.b32.xlu0 %v549, 6
      %v3223 = vpop.permute.xlu0 %3222
      %3224 = vrot.lane.b32.xlu0 %v550, 6
      %v3225 = vpop.permute.xlu0 %3224
      %3226 = vrot.lane.b32.xlu0 %v551, 6
      %v3227 = vpop.permute.xlu0 %3226
      %3228 = vrot.lane.b32.xlu0 %v552, 6
      %v3229 = vpop.permute.xlu0 %3228
      %3230 = vrot.lane.b32.xlu0 %v553, 6
      %v3231 = vpop.permute.xlu0 %3230
      %3232 = vrot.lane.b32.xlu0 %v554, 6
      %v3233 = vpop.permute.xlu0 %3232
      %3234 = vrot.lane.b32.xlu0 %v1550, 8
      %v3235 = vpop.permute.xlu0 %3234
      %3236 = vrot.lane.b32.xlu0 %v1552, 8
      %v3237 = vpop.permute.xlu0 %3236
      %3238 = vrot.lane.b32.xlu0 %v1554, 8
      %v3239 = vpop.permute.xlu0 %3238
      %3240 = vrot.lane.b32.xlu0 %v1556, 8
      %v3241 = vpop.permute.xlu0 %3240
      %3242 = vrot.lane.b32.xlu0 %v1558, 8
      %v3243 = vpop.permute.xlu0 %3242
      %3244 = vrot.lane.b32.xlu0 %v1560, 8
      %v3245 = vpop.permute.xlu0 %3244
      %3246 = vrot.lane.b32.xlu0 %v1562, 8
      %v3247 = vpop.permute.xlu0 %3246
      %3248 = vrot.lane.b32.xlu0 %v1564, 8
      %v3249 = vpop.permute.xlu0 %3248
      %3250 = vrot.lane.b32.xlu0 %v1566, 8
      %v3251 = vpop.permute.xlu0 %3250
      %3252 = vrot.lane.b32.xlu0 %v1568, 8
      %v3253 = vpop.permute.xlu0 %3252
      %3254 = vrot.lane.b32.xlu0 %v1570, 8
      %v3255 = vpop.permute.xlu0 %3254
      %3256 = vrot.lane.b32.xlu0 %v1572, 8
      %v3257 = vpop.permute.xlu0 %3256
      %3258 = vrot.lane.b32.xlu0 %v1574, 8
      %v3259 = vpop.permute.xlu0 %3258
      %3260 = vrot.lane.b32.xlu0 %v1576, 8
      %v3261 = vpop.permute.xlu0 %3260
      %3262 = vrot.lane.b32.xlu0 %v1578, 8
      %v3263 = vpop.permute.xlu0 %3262
      %3264 = vrot.lane.b32.xlu0 %v1580, 8
      %v3265 = vpop.permute.xlu0 %3264
      %3267 = vrot.lane.b32.xlu0 %v3111, 10
      %v3268 = vpop.permute.xlu0 %3267
      %3269 = vrot.lane.b32.xlu0 %v3112, 10
      %v3270 = vpop.permute.xlu0 %3269
      %3271 = vrot.lane.b32.xlu0 %v3113, 10
      %v3272 = vpop.permute.xlu0 %3271
      %3273 = vrot.lane.b32.xlu0 %v3114, 10
      %v3274 = vpop.permute.xlu0 %3273
      %3275 = vrot.lane.b32.xlu0 %v3115, 10
      %v3276 = vpop.permute.xlu0 %3275
      %3277 = vrot.lane.b32.xlu0 %v3116, 10
      %v3278 = vpop.permute.xlu0 %3277
      %3279 = vrot.lane.b32.xlu0 %v3117, 10
      %v3280 = vpop.permute.xlu0 %3279
      %3281 = vrot.lane.b32.xlu0 %v3118, 10
      %v3282 = vpop.permute.xlu0 %3281
      %3283 = vrot.lane.b32.xlu0 %v3119, 10
      %v3284 = vpop.permute.xlu0 %3283
      %3285 = vrot.lane.b32.xlu0 %v3120, 10
      %v3286 = vpop.permute.xlu0 %3285
      %3287 = vrot.lane.b32.xlu0 %v3121, 10
      %v3288 = vpop.permute.xlu0 %3287
      %3289 = vrot.lane.b32.xlu0 %v3122, 10
      %v3290 = vpop.permute.xlu0 %3289
      %3291 = vrot.lane.b32.xlu0 %v3123, 10
      %v3292 = vpop.permute.xlu0 %3291
      %3293 = vrot.lane.b32.xlu0 %v3124, 10
      %v3294 = vpop.permute.xlu0 %3293
      %3295 = vrot.lane.b32.xlu0 %v3125, 10
      %v3296 = vpop.permute.xlu0 %3295
      %3297 = vrot.lane.b32.xlu0 %v3126, 10
      %v3298 = vpop.permute.xlu0 %3297
      %3299 = vrot.lane.b32.xlu0 %v540, 12
      %v3300 = vpop.permute.xlu0 %3299
      %3301 = vrot.lane.b32.xlu0 %v541, 12
      %v3302 = vpop.permute.xlu0 %3301
      %3303 = vrot.lane.b32.xlu0 %v542, 12
      %v3304 = vpop.permute.xlu0 %3303
      %3305 = vrot.lane.b32.xlu0 %v543, 12
      %v3306 = vpop.permute.xlu0 %3305
      %3307 = vrot.lane.b32.xlu0 %v544, 12
      %v3308 = vpop.permute.xlu0 %3307
      %3309 = vrot.lane.b32.xlu0 %v545, 12
      %v3310 = vpop.permute.xlu0 %3309
      %3311 = vrot.lane.b32.xlu0 %v546, 12
      %v3312 = vpop.permute.xlu0 %3311
      %3313 = vrot.lane.b32.xlu0 %v547, 12
      %v3314 = vpop.permute.xlu0 %3313
      %3315 = vrot.lane.b32.xlu0 %v548, 12
      %v3316 = vpop.permute.xlu0 %3315
      %3317 = vrot.lane.b32.xlu0 %v549, 12
      %v3318 = vpop.permute.xlu0 %3317
      %3319 = vrot.lane.b32.xlu0 %v550, 12
      %v3320 = vpop.permute.xlu0 %3319
      %3321 = vrot.lane.b32.xlu0 %v551, 12
      %v3322 = vpop.permute.xlu0 %3321
      %3323 = vrot.lane.b32.xlu0 %v552, 12
      %v3324 = vpop.permute.xlu0 %3323
      %3325 = vrot.lane.b32.xlu0 %v553, 12
      %v3326 = vpop.permute.xlu0 %3325
      %3327 = vrot.lane.b32.xlu0 %v554, 12
      %v3328 = vpop.permute.xlu0 %3327
      %3329 = vrot.lane.b32.xlu0 %v1552, 14
      %v3330 = vpop.permute.xlu0 %3329
      %3331 = vrot.lane.b32.xlu0 %v1554, 14
      %v3332 = vpop.permute.xlu0 %3331
      %3333 = vrot.lane.b32.xlu0 %v1556, 14
      %v3334 = vpop.permute.xlu0 %3333
      %3335 = vrot.lane.b32.xlu0 %v1558, 14
      %v3336 = vpop.permute.xlu0 %3335
      %3337 = vrot.lane.b32.xlu0 %v1560, 14
      %v3338 = vpop.permute.xlu0 %3337
      %3339 = vrot.lane.b32.xlu0 %v1562, 14
      %v3340 = vpop.permute.xlu0 %3339
      %3341 = vrot.lane.b32.xlu0 %v1564, 14
      %v3342 = vpop.permute.xlu0 %3341
      %3343 = vrot.lane.b32.xlu0 %v1566, 14
      %v3344 = vpop.permute.xlu0 %3343
      %3345 = vrot.lane.b32.xlu0 %v1568, 14
      %v3346 = vpop.permute.xlu0 %3345
      %3347 = vrot.lane.b32.xlu0 %v1570, 14
      %v3348 = vpop.permute.xlu0 %3347
      %3349 = vrot.lane.b32.xlu0 %v1572, 14
      %v3350 = vpop.permute.xlu0 %3349
      %3351 = vrot.lane.b32.xlu0 %v1574, 14
      %v3352 = vpop.permute.xlu0 %3351
      %3353 = vrot.lane.b32.xlu0 %v1576, 14
      %v3354 = vpop.permute.xlu0 %3353
      %3355 = vrot.lane.b32.xlu0 %v1578, 14
      %v3356 = vpop.permute.xlu0 %3355
      %3357 = vrot.lane.b32.xlu0 %v1580, 14
      %v3358 = vpop.permute.xlu0 %3357
      %3359 = vrot.lane.b32.xlu0 %v3112, 16
      %v3360 = vpop.permute.xlu0 %3359
      %3361 = vrot.lane.b32.xlu0 %v3113, 16
      %v3362 = vpop.permute.xlu0 %3361
      %3363 = vrot.lane.b32.xlu0 %v3114, 16
      %v3364 = vpop.permute.xlu0 %3363
      %3365 = vrot.lane.b32.xlu0 %v3115, 16
      %v3366 = vpop.permute.xlu0 %3365
      %3367 = vrot.lane.b32.xlu0 %v3116, 16
      %v3368 = vpop.permute.xlu0 %3367
      %3369 = vrot.lane.b32.xlu0 %v3117, 16
      %v3370 = vpop.permute.xlu0 %3369
      %3371 = vrot.lane.b32.xlu0 %v3118, 16
      %v3372 = vpop.permute.xlu0 %3371
      %3373 = vrot.lane.b32.xlu0 %v3119, 16
      %v3374 = vpop.permute.xlu0 %3373
      %3375 = vrot.lane.b32.xlu0 %v3120, 16
      %v3376 = vpop.permute.xlu0 %3375
      %3377 = vrot.lane.b32.xlu0 %v3121, 16
      %v3378 = vpop.permute.xlu0 %3377
      %3379 = vrot.lane.b32.xlu0 %v3122, 16
      %v3380 = vpop.permute.xlu0 %3379
      %3381 = vrot.lane.b32.xlu0 %v3123, 16
      %v3382 = vpop.permute.xlu0 %3381
      %3383 = vrot.lane.b32.xlu0 %v3124, 16
      %v3384 = vpop.permute.xlu0 %3383
      %3385 = vrot.lane.b32.xlu0 %v3125, 16
      %v3386 = vpop.permute.xlu0 %3385
      %3387 = vrot.lane.b32.xlu0 %v3126, 16
      %v3388 = vpop.permute.xlu0 %3387
      %v3391 = vsel %vm1045, %v539, %v3128
      %v3394 = vsel %vm1045, %v540, %v3130
      %v3397 = vsel %vm1045, %v541, %v3132
      %v3400 = vsel %vm1045, %v542, %v3134
      %v3403 = vsel %vm1045, %v543, %v3136
      %v3406 = vsel %vm1045, %v544, %v3138
      %v3409 = vsel %vm1045, %v545, %v3140
      %v3412 = vsel %vm1045, %v546, %v3142
      %v3415 = vsel %vm1045, %v547, %v3144
      %v3418 = vsel %vm1045, %v548, %v3146
      %v3421 = vsel %vm1045, %v549, %v3148
      %v3424 = vsel %vm1045, %v550, %v3150
      %v3427 = vsel %vm1045, %v551, %v3152
      %v3430 = vsel %vm1045, %v552, %v3154
      %v3433 = vsel %vm1045, %v553, %v3156
      %v3435 = vsel %vm1094, %v3391, %v3173
      %v3437 = vsel %vm1094, %v3394, %v3175
      %v3439 = vsel %vm1094, %v3397, %v3177
      %v3441 = vsel %vm1094, %v3400, %v3179
      %v3443 = vsel %vm1094, %v3403, %v3181
      %v3445 = vsel %vm1094, %v3406, %v3183
      %v3447 = vsel %vm1094, %v3409, %v3185
      %v3449 = vsel %vm1094, %v3412, %v3187
      %v3451 = vsel %vm1094, %v3415, %v3189
      %v3453 = vsel %vm1094, %v3418, %v3191
      %v3455 = vsel %vm1094, %v3421, %v3193
      %v3457 = vsel %vm1094, %v3424, %v3195
      %v3459 = vsel %vm1094, %v3427, %v3197
      %v3461 = vsel %vm1094, %v3430, %v3199
      %v3463 = vsel %vm1094, %v3433, %v3201
      %v3465 = vsel %vm1127, %v1096, %v3203
      %v3467 = vsel %vm1127, %v3435, %v3205
      %v3469 = vsel %vm1127, %v3437, %v3207
      %v3471 = vsel %vm1127, %v3439, %v3209
      %v3473 = vsel %vm1127, %v3441, %v3211
      %v3475 = vsel %vm1127, %v3443, %v3213
      %v3477 = vsel %vm1127, %v3445, %v3215
      %v3479 = vsel %vm1127, %v3447, %v3217
      %v3481 = vsel %vm1127, %v3449, %v3219
      %v3483 = vsel %vm1127, %v3451, %v3221
      %v3485 = vsel %vm1127, %v3453, %v3223
      %v3487 = vsel %vm1127, %v3455, %v3225
      %v3489 = vsel %vm1127, %v3457, %v3227
      %v3491 = vsel %vm1127, %v3459, %v3229
      %v3493 = vsel %vm1127, %v3461, %v3231
      %v3495 = vsel %vm1127, %v3463, %v3233
      %v3497 = vsel %vm1160, %v3465, %v3235
      %v3499 = vsel %vm1160, %v3467, %v3237
      %v3501 = vsel %vm1160, %v3469, %v3239
      %v3503 = vsel %vm1160, %v3471, %v3241
      %v3505 = vsel %vm1160, %v3473, %v3243
      %v3507 = vsel %vm1160, %v3475, %v3245
      %v3509 = vsel %vm1160, %v3477, %v3247
      %v3511 = vsel %vm1160, %v3479, %v3249
      %v3513 = vsel %vm1160, %v3481, %v3251
      %v3515 = vsel %vm1160, %v3483, %v3253
      %v3517 = vsel %vm1160, %v3485, %v3255
      %v3519 = vsel %vm1160, %v3487, %v3257
      %v3521 = vsel %vm1160, %v3489, %v3259
      %v3523 = vsel %vm1160, %v3491, %v3261
      %v3525 = vsel %vm1160, %v3493, %v3263
      %v3527 = vsel %vm1160, %v3495, %v3265
      %v3529 = vsel %vm1193, %v3497, %v3268
      %v3531 = vsel %vm1193, %v3499, %v3270
      %v3533 = vsel %vm1193, %v3501, %v3272
      %v3535 = vsel %vm1193, %v3503, %v3274
      %v3537 = vsel %vm1193, %v3505, %v3276
      %v3539 = vsel %vm1193, %v3507, %v3278
      %v3541 = vsel %vm1193, %v3509, %v3280
      %v3543 = vsel %vm1193, %v3511, %v3282
      %v3545 = vsel %vm1193, %v3513, %v3284
      %v3547 = vsel %vm1193, %v3515, %v3286
      %v3549 = vsel %vm1193, %v3517, %v3288
      %v3551 = vsel %vm1193, %v3519, %v3290
      %v3553 = vsel %vm1193, %v3521, %v3292
      %v3555 = vsel %vm1193, %v3523, %v3294
      %v3557 = vsel %vm1193, %v3525, %v3296
      %v3559 = vsel %vm1193, %v3527, %v3298
      %v3561 = vsel %vm1226, %v3529, %v3300
      %v3563 = vsel %vm1226, %v3531, %v3302
      %v3565 = vsel %vm1226, %v3533, %v3304
      %v3567 = vsel %vm1226, %v3535, %v3306
      %v3569 = vsel %vm1226, %v3537, %v3308
      %v3571 = vsel %vm1226, %v3539, %v3310
      %v3573 = vsel %vm1226, %v3541, %v3312
      %v3575 = vsel %vm1226, %v3543, %v3314
      %v3577 = vsel %vm1226, %v3545, %v3316
      %v3579 = vsel %vm1226, %v3547, %v3318
      %v3581 = vsel %vm1226, %v3549, %v3320
      %v3583 = vsel %vm1226, %v3551, %v3322
      %v3585 = vsel %vm1226, %v3553, %v3324
      %v3587 = vsel %vm1226, %v3555, %v3326
      %v3589 = vsel %vm1226, %v3557, %v3328
      %v3590 = vsel %vm1226, %v3559, %v980
      %v3592 = vsel %vm1259, %v3561, %v3330
      %v3594 = vsel %vm1259, %v3563, %v3332
      %v3596 = vsel %vm1259, %v3565, %v3334
      %v3598 = vsel %vm1259, %v3567, %v3336
      %v3600 = vsel %vm1259, %v3569, %v3338
      %v3602 = vsel %vm1259, %v3571, %v3340
      %v3604 = vsel %vm1259, %v3573, %v3342
      %v3606 = vsel %vm1259, %v3575, %v3344
      %v3608 = vsel %vm1259, %v3577, %v3346
      %v3610 = vsel %vm1259, %v3579, %v3348
      %v3612 = vsel %vm1259, %v3581, %v3350
      %v3614 = vsel %vm1259, %v3583, %v3352
      %v3616 = vsel %vm1259, %v3585, %v3354
      %v3618 = vsel %vm1259, %v3587, %v3356
      %v3620 = vsel %vm1259, %v3589, %v3358
      %v3621 = vsel %vm1259, %v3590, %v1012
      %v3623 = vsel %vm1292, %v3592, %v3360
      %v3625 = vsel %vm1292, %v3594, %v3362
      %v3627 = vsel %vm1292, %v3596, %v3364
      %v3629 = vsel %vm1292, %v3598, %v3366
      %v3631 = vsel %vm1292, %v3600, %v3368
      %v3633 = vsel %vm1292, %v3602, %v3370
      %v3635 = vsel %vm1292, %v3604, %v3372
      %v3637 = vsel %vm1292, %v3606, %v3374
      %v3639 = vsel %vm1292, %v3608, %v3376
      %v3641 = vsel %vm1292, %v3610, %v3378
      %v3643 = vsel %vm1292, %v3612, %v3380
      %v3645 = vsel %vm1292, %v3614, %v3382
      %v3647 = vsel %vm1292, %v3616, %v3384
      %v3649 = vsel %vm1292, %v3618, %v3386
      %v3651 = vsel %vm1292, %v3620, %v3388
      %v3652 = vsel %vm1292, %v3621, %v1044
      %v3669 = vunpack.c.l.b16 %v3623
      %v3670 = vunpack.c.l.b16 %v3625
      %v3671 = vunpack.c.l.b16 %v3627
      %v3672 = vunpack.c.l.b16 %v3629
      %v3673 = vunpack.c.l.b16 %v3631
      %v3674 = vunpack.c.l.b16 %v3633
      %v3675 = vunpack.c.l.b16 %v3635
      %v3676 = vunpack.c.l.b16 %v3637
      %v3677 = vunpack.c.l.b16 %v3639
      %v3678 = vunpack.c.l.b16 %v3641
      %v3679 = vunpack.c.l.b16 %v3643
      %v3680 = vunpack.c.l.b16 %v3645
      %v3681 = vunpack.c.l.b16 %v3647
      %v3682 = vunpack.c.l.b16 %v3649
      %v3683 = vunpack.c.l.b16 %v3651
      %v3684 = vunpack.c.l.b16 %v3652
      %v3685 = vpack.c.b16 %v3670, %v3669
      %v3686 = vpack.c.b16 %v3672, %v3671
      %v3687 = vpack.c.b16 %v3674, %v3673
      %v3688 = vpack.c.b16 %v3676, %v3675
      %v3689 = vpack.c.b16 %v3678, %v3677
      %v3690 = vpack.c.b16 %v3680, %v3679
      %v3691 = vpack.c.b16 %v3682, %v3681
      %v3692 = vpack.c.b16 %v3684, %v3683
      %v3694 = vsel %vm2156, %v3685, 0
      %v3697 = vsel %vm2156, %v3686, 0
      %v3700 = vsel %vm2156, %v3687, 0
      %v3703 = vsel %vm2156, %v3688, 0
      %v3706 = vsel %vm2156, %v3689, 0
      %v3709 = vsel %vm2156, %v3690, 0
      %v3712 = vsel %vm2156, %v3691, 0
      %v3715 = vsel %vm2156, %v3692, 0
      %3717 = vmatpush.bf16.msra.mxu0 0
      %3718 = vmatpush.bf16.msra.mxu0 0
      %3719 = vmatpush.bf16.msra.mxu0 0
      %3720 = vmatpush.bf16.msra.mxu0 0
      %3721 = vmatpush.bf16.msra.mxu0 0
      %3722 = vmatpush.bf16.msra.mxu0 0
      %3723 = vmatpush.bf16.msra.mxu0 %v2182
      %3724 = vmatpush.bf16.msra.mxu0 %v2153
      %3725 = vmatmul.bf16.gmra.mxu0 %v3694
      %v3726 = vpop.f32.mrf.mxu0
      %v3727 = vadd.f32 0.0, %v3726
      %v3728 = vpop.f32.mrf.mxu0
      %v3729 = vadd.f32 0.0, %v3728
      %3730 = vmatmul.bf16.gmra.mxu0 %v3697
      %v3731 = vpop.f32.mrf.mxu0
      %v3732 = vadd.f32 0.0, %v3731
      %v3733 = vpop.f32.mrf.mxu0
      %v3734 = vadd.f32 0.0, %v3733
      %3735 = vmatmul.bf16.gmra.mxu0 %v3700
      %v3736 = vpop.f32.mrf.mxu0
      %v3737 = vadd.f32 0.0, %v3736
      %v3738 = vpop.f32.mrf.mxu0
      %v3739 = vadd.f32 0.0, %v3738
      %3740 = vmatmul.bf16.gmra.mxu0 %v3703
      %v3741 = vpop.f32.mrf.mxu0
      %v3742 = vadd.f32 0.0, %v3741
      %v3743 = vpop.f32.mrf.mxu0
      %v3744 = vadd.f32 0.0, %v3743
      %3745 = vmatmul.bf16.gmra.mxu0 %v3706
      %v3746 = vpop.f32.mrf.mxu0
      %v3747 = vadd.f32 0.0, %v3746
      %v3748 = vpop.f32.mrf.mxu0
      %v3749 = vadd.f32 0.0, %v3748
      %3750 = vmatmul.bf16.gmra.mxu0 %v3709
      %v3751 = vpop.f32.mrf.mxu0
      %v3752 = vadd.f32 0.0, %v3751
      %v3753 = vpop.f32.mrf.mxu0
      %v3754 = vadd.f32 0.0, %v3753
      %3755 = vmatmul.bf16.gmra.mxu0 %v3712
      %v3756 = vpop.f32.mrf.mxu0
      %v3757 = vadd.f32 0.0, %v3756
      %v3758 = vpop.f32.mrf.mxu0
      %v3759 = vadd.f32 0.0, %v3758
      %3760 = vmatmul.bf16.gmra.mxu0 %v3715
      %v3761 = vpop.f32.mrf.mxu0
      %v3762 = vadd.f32 0.0, %v3761
      %v3763 = vpop.f32.mrf.mxu0
      %v3764 = vadd.f32 0.0, %v3763
      %3765 = vdwg.mxu0
      %v3782 = vunpack.c.l.b16 %v3033
      %v3783 = vunpack.c.l.b16 %v3035
      %v3784 = vunpack.c.l.b16 %v3037
      %v3785 = vunpack.c.l.b16 %v3039
      %v3786 = vunpack.c.l.b16 %v3041
      %v3787 = vunpack.c.l.b16 %v3043
      %v3788 = vunpack.c.l.b16 %v3045
      %v3789 = vunpack.c.l.b16 %v3047
      %v3790 = vunpack.c.l.b16 %v3049
      %v3791 = vunpack.c.l.b16 %v3051
      %v3792 = vunpack.c.l.b16 %v3053
      %v3793 = vunpack.c.l.b16 %v3055
      %v3794 = vunpack.c.l.b16 %v3057
      %v3795 = vunpack.c.l.b16 %v3059
      %v3796 = vunpack.c.l.b16 %v3061
      %v3797 = vunpack.c.l.b16 %v3062
      %v3798 = vpack.c.b16 %v3783, %v3782
      %v3799 = vpack.c.b16 %v3785, %v3784
      %v3800 = vpack.c.b16 %v3787, %v3786
      %v3801 = vpack.c.b16 %v3789, %v3788
      %v3802 = vpack.c.b16 %v3791, %v3790
      %v3803 = vpack.c.b16 %v3793, %v3792
      %v3804 = vpack.c.b16 %v3795, %v3794
      %v3805 = vpack.c.b16 %v3797, %v3796
      %v3807 = vsel %vm2156, %v3798, 0
      %v3810 = vsel %vm2156, %v3799, 0
      %v3813 = vsel %vm2156, %v3800, 0
      %v3816 = vsel %vm2156, %v3801, 0
      %v3819 = vsel %vm2156, %v3802, 0
      %v3822 = vsel %vm2156, %v3803, 0
      %v3825 = vsel %vm2156, %v3804, 0
      %v3828 = vsel %vm2156, %v3805, 0
      %3830 = vmatpush.bf16.msra.mxu0 0
      %3831 = vmatpush.bf16.msra.mxu0 0
      %3832 = vmatpush.bf16.msra.mxu0 0
      %3833 = vmatpush.bf16.msra.mxu0 0
      %3834 = vmatpush.bf16.msra.mxu0 0
      %3835 = vmatpush.bf16.msra.mxu0 0
      %3836 = vmatpush.bf16.msra.mxu0 %v2307
      %3837 = vmatpush.bf16.msra.mxu0 %v2279
      %3838 = vmatmul.bf16.gmra.mxu0 %v3807
      %v3839 = vpop.f32.mrf.mxu0
      %v3840 = vadd.f32 %v3727, %v3839
      %v3841 = vpop.f32.mrf.mxu0
      %v3842 = vadd.f32 %v3729, %v3841
      %3843 = vmatmul.bf16.gmra.mxu0 %v3810
      %v3844 = vpop.f32.mrf.mxu0
      %v3845 = vadd.f32 %v3732, %v3844
      %v3846 = vpop.f32.mrf.mxu0
      %v3847 = vadd.f32 %v3734, %v3846
      %3848 = vmatmul.bf16.gmra.mxu0 %v3813
      %v3849 = vpop.f32.mrf.mxu0
      %v3850 = vadd.f32 %v3737, %v3849
      %v3851 = vpop.f32.mrf.mxu0
      %v3852 = vadd.f32 %v3739, %v3851
      %3853 = vmatmul.bf16.gmra.mxu0 %v3816
      %v3854 = vpop.f32.mrf.mxu0
      %v3855 = vadd.f32 %v3742, %v3854
      %v3856 = vpop.f32.mrf.mxu0
      %v3857 = vadd.f32 %v3744, %v3856
      %3858 = vmatmul.bf16.gmra.mxu0 %v3819
      %v3859 = vpop.f32.mrf.mxu0
      %v3860 = vadd.f32 %v3747, %v3859
      %v3861 = vpop.f32.mrf.mxu0
      %v3862 = vadd.f32 %v3749, %v3861
      %3863 = vmatmul.bf16.gmra.mxu0 %v3822
      %v3864 = vpop.f32.mrf.mxu0
      %v3865 = vadd.f32 %v3752, %v3864
      %v3866 = vpop.f32.mrf.mxu0
      %v3867 = vadd.f32 %v3754, %v3866
      %3868 = vmatmul.bf16.gmra.mxu0 %v3825
      %v3869 = vpop.f32.mrf.mxu0
      %v3870 = vadd.f32 %v3757, %v3869
      %v3871 = vpop.f32.mrf.mxu0
      %v3872 = vadd.f32 %v3759, %v3871
      %3873 = vmatmul.bf16.gmra.mxu0 %v3828
      %v3874 = vpop.f32.mrf.mxu0
      %v3875 = vadd.f32 %v3762, %v3874
      %v3876 = vpop.f32.mrf.mxu0
      %v3877 = vadd.f32 %v3764, %v3876
      %3878 = vdwg.mxu0
      %3895 = vrot.lane.b32.xlu0 %v3840, 4
      %v3896 = vpop.permute.xlu0 %3895
      %3897 = vrot.lane.b32.xlu0 %v3842, 4
      %v3898 = vpop.permute.xlu0 %3897
      %3899 = vrot.lane.b32.xlu0 %v3845, 4
      %v3900 = vpop.permute.xlu0 %3899
      %3901 = vrot.lane.b32.xlu0 %v3847, 4
      %v3902 = vpop.permute.xlu0 %3901
      %3903 = vrot.lane.b32.xlu0 %v3850, 4
      %v3904 = vpop.permute.xlu0 %3903
      %3905 = vrot.lane.b32.xlu0 %v3852, 4
      %v3906 = vpop.permute.xlu0 %3905
      %3907 = vrot.lane.b32.xlu0 %v3855, 4
      %v3908 = vpop.permute.xlu0 %3907
      %3909 = vrot.lane.b32.xlu0 %v3857, 4
      %v3910 = vpop.permute.xlu0 %3909
      %3911 = vrot.lane.b32.xlu0 %v3860, 4
      %v3912 = vpop.permute.xlu0 %3911
      %3913 = vrot.lane.b32.xlu0 %v3862, 4
      %v3914 = vpop.permute.xlu0 %3913
      %3915 = vrot.lane.b32.xlu0 %v3865, 4
      %v3916 = vpop.permute.xlu0 %3915
      %3917 = vrot.lane.b32.xlu0 %v3867, 4
      %v3918 = vpop.permute.xlu0 %3917
      %3919 = vrot.lane.b32.xlu0 %v3870, 4
      %v3920 = vpop.permute.xlu0 %3919
      %3921 = vrot.lane.b32.xlu0 %v3872, 4
      %v3922 = vpop.permute.xlu0 %3921
      %3923 = vrot.lane.b32.xlu0 %v3875, 4
      %v3924 = vpop.permute.xlu0 %3923
      %3925 = vrot.lane.b32.xlu0 %v3877, 4
      %v3926 = vpop.permute.xlu0 %3925
      %v3943 = vsel %vm1094, %v2319, %v3896
      %v3944 = vsel %vm1094, %v2321, %v3898
      %v3945 = vsel %vm1094, %v2324, %v3900
      %v3946 = vsel %vm1094, %v2326, %v3902
      %v3947 = vsel %vm1094, %v2329, %v3904
      %v3948 = vsel %vm1094, %v2331, %v3906
      %v3949 = vsel %vm1094, %v2334, %v3908
      %v3950 = vsel %vm1094, %v2336, %v3910
      %v3951 = vsel %vm1094, %v2339, %v3912
      %v3952 = vsel %vm1094, %v2341, %v3914
      %v3953 = vsel %vm1094, %v2344, %v3916
      %v3954 = vsel %vm1094, %v2346, %v3918
      %v3955 = vsel %vm1094, %v2349, %v3920
      %v3956 = vsel %vm1094, %v2351, %v3922
      %v3957 = vsel %vm1094, %v2354, %v3924
      %v3958 = vsel %vm1094, %v2356, %v3926
      %v3959 = vpack.c.bf16 %v3943, %v3943
      %v3960 = vpack.c.bf16 %v3944, %v3944
      %v3961 = vpack.c.bf16 %v3945, %v3945
      %v3962 = vpack.c.bf16 %v3946, %v3946
      %v3963 = vpack.c.bf16 %v3947, %v3947
      %v3964 = vpack.c.bf16 %v3948, %v3948
      %v3965 = vpack.c.bf16 %v3949, %v3949
      %v3966 = vpack.c.bf16 %v3950, %v3950
      %v3967 = vpack.c.bf16 %v3951, %v3951
      %v3968 = vpack.c.bf16 %v3952, %v3952
      %v3969 = vpack.c.bf16 %v3953, %v3953
      %v3970 = vpack.c.bf16 %v3954, %v3954
      %v3971 = vpack.c.bf16 %v3955, %v3955
      %v3972 = vpack.c.bf16 %v3956, %v3956
      %v3973 = vpack.c.bf16 %v3957, %v3957
      %v3974 = vpack.c.bf16 %v3958, %v3958
      %vm3975 = vcmask 60416
      %3976 = vst.msk [vmem:[%s251] sm:$0xf] %vm3975, %v3959
      %3977 = vst.msk [vmem:[%s251 + $0x4] sm:$0xf] %vm3975, %v3960
      %3978 = vst.msk [vmem:[%s251 + $0x8] sm:$0xf] %vm3975, %v3961
      %3979 = vst.msk [vmem:[%s251 + $0xc] sm:$0xf] %vm3975, %v3962
      %3980 = vst.msk [vmem:[%s251 + $0x10] sm:$0xf] %vm3975, %v3963
      %3981 = vst.msk [vmem:[%s251 + $0x14] sm:$0xf] %vm3975, %v3964
      %3982 = vst.msk [vmem:[%s251 + $0x18] sm:$0xf] %vm3975, %v3965
      %3983 = vst.msk [vmem:[%s251 + $0x1c] sm:$0xf] %vm3975, %v3966
      %3984 = vst.msk [vmem:[%s251 + $0x20] sm:$0xf] %vm3975, %v3967
      %3985 = vst.msk [vmem:[%s251 + $0x24] sm:$0xf] %vm3975, %v3968
      %3986 = vst.msk [vmem:[%s251 + $0x28] sm:$0xf] %vm3975, %v3969
      %3987 = vst.msk [vmem:[%s251 + $0x2c] sm:$0xf] %vm3975, %v3970
      %3988 = vst.msk [vmem:[%s251 + $0x30] sm:$0xf] %vm3975, %v3971
      %3989 = vst.msk [vmem:[%s251 + $0x34] sm:$0xf] %vm3975, %v3972
      %3990 = vst.msk [vmem:[%s251 + $0x38] sm:$0xf] %vm3975, %v3973
      %3991 = vst.msk [vmem:[%s251 + $0x3c] sm:$0xf] %vm3975, %v3974
      %v3992 = vsel %vm1094, %v2319, 0.0
      %v3993 = vsel %vm1094, %v2321, 0.0
      %v3994 = vadd.f32 %v3992, %v3993
      %v3995 = vsel %vm1094, %v2324, 0.0
      %v3996 = vadd.f32 %v3994, %v3995
      %v3997 = vsel %vm1094, %v2326, 0.0
      %v3998 = vadd.f32 %v3996, %v3997
      %v3999 = vsel %vm1094, %v2329, 0.0
      %v4000 = vadd.f32 %v3998, %v3999
      %v4001 = vsel %vm1094, %v2331, 0.0
      %v4002 = vadd.f32 %v4000, %v4001
      %v4003 = vsel %vm1094, %v2334, 0.0
      %v4004 = vadd.f32 %v4002, %v4003
      %v4005 = vsel %vm1094, %v2336, 0.0
      %v4006 = vadd.f32 %v4004, %v4005
      %v4007 = vsel %vm1094, %v2339, 0.0
      %v4008 = vadd.f32 %v4006, %v4007
      %v4009 = vsel %vm1094, %v2341, 0.0
      %v4010 = vadd.f32 %v4008, %v4009
      %v4011 = vsel %vm1094, %v2344, 0.0
      %v4012 = vadd.f32 %v4010, %v4011
      %v4013 = vsel %vm1094, %v2346, 0.0
      %v4014 = vadd.f32 %v4012, %v4013
      %v4015 = vsel %vm1094, %v2349, 0.0
      %v4016 = vadd.f32 %v4014, %v4015
      %v4017 = vsel %vm1094, %v2351, 0.0
      %v4018 = vadd.f32 %v4016, %v4017
      %v4019 = vsel %vm1094, %v2354, 0.0
      %v4020 = vadd.f32 %v4018, %v4019
      %v4021 = vsel %vm1094, %v2356, 0.0
      %v4022 = vadd.f32 %v4020, %v4021
      %v4023 = vrot.slane %v4022, 4
      %v4024 = vadd.f32 %v4022, %v4023
      %v4025 = vrot.slane %v4024, 2
      %v4026 = vadd.f32 %v4024, %v4025
      %v4027 = vrot.slane %v4026, 1
      %v4028 = vadd.f32 %v4026, %v4027
      %v4029 = vsel %vm1094, %v3840, 0.0
      %v4030 = vsel %vm1094, %v3842, 0.0
      %v4031 = vadd.f32 %v4029, %v4030
      %v4032 = vsel %vm1094, %v3845, 0.0
      %v4033 = vadd.f32 %v4031, %v4032
      %v4034 = vsel %vm1094, %v3847, 0.0
      %v4035 = vadd.f32 %v4033, %v4034
      %v4036 = vsel %vm1094, %v3850, 0.0
      %v4037 = vadd.f32 %v4035, %v4036
      %v4038 = vsel %vm1094, %v3852, 0.0
      %v4039 = vadd.f32 %v4037, %v4038
      %v4040 = vsel %vm1094, %v3855, 0.0
      %v4041 = vadd.f32 %v4039, %v4040
      %v4042 = vsel %vm1094, %v3857, 0.0
      %v4043 = vadd.f32 %v4041, %v4042
      %v4044 = vsel %vm1094, %v3860, 0.0
      %v4045 = vadd.f32 %v4043, %v4044
      %v4046 = vsel %vm1094, %v3862, 0.0
      %v4047 = vadd.f32 %v4045, %v4046
      %v4048 = vsel %vm1094, %v3865, 0.0
      %v4049 = vadd.f32 %v4047, %v4048
      %v4050 = vsel %vm1094, %v3867, 0.0
      %v4051 = vadd.f32 %v4049, %v4050
      %v4052 = vsel %vm1094, %v3870, 0.0
      %v4053 = vadd.f32 %v4051, %v4052
      %v4054 = vsel %vm1094, %v3872, 0.0
      %v4055 = vadd.f32 %v4053, %v4054
      %v4056 = vsel %vm1094, %v3875, 0.0
      %v4057 = vadd.f32 %v4055, %v4056
      %v4058 = vsel %vm1094, %v3877, 0.0
      %v4059 = vadd.f32 %v4057, %v4058
      %v4060 = vrot.slane %v4059, 4
      %v4061 = vadd.f32 %v4059, %v4060
      %v4062 = vrot.slane %v4061, 2
      %v4063 = vadd.f32 %v4061, %v4062
      %v4064 = vrot.slane %v4063, 1
      %v4065 = vadd.f32 %v4063, %v4064
      %v4066 = vadd.f32 %v4028, %v4065
      %v4067 = vmul.f32 %v2319, %v2319
      %v4068 = vmul.f32 %v2321, %v2321
      %v4069 = vmul.f32 %v2324, %v2324
      %v4070 = vmul.f32 %v2326, %v2326
      %v4071 = vmul.f32 %v2329, %v2329
      %v4072 = vmul.f32 %v2331, %v2331
      %v4073 = vmul.f32 %v2334, %v2334
      %v4074 = vmul.f32 %v2336, %v2336
      %v4075 = vmul.f32 %v2339, %v2339
      %v4076 = vmul.f32 %v2341, %v2341
      %v4077 = vmul.f32 %v2344, %v2344
      %v4078 = vmul.f32 %v2346, %v2346
      %v4079 = vmul.f32 %v2349, %v2349
      %v4080 = vmul.f32 %v2351, %v2351
      %v4081 = vmul.f32 %v2354, %v2354
      %v4082 = vmul.f32 %v2356, %v2356
      %v4083 = vsel %vm1094, %v4067, 0.0
      %v4084 = vsel %vm1094, %v4068, 0.0
      %v4085 = vadd.f32 %v4083, %v4084
      %v4086 = vsel %vm1094, %v4069, 0.0
      %v4087 = vadd.f32 %v4085, %v4086
      %v4088 = vsel %vm1094, %v4070, 0.0
      %v4089 = vadd.f32 %v4087, %v4088
      %v4090 = vsel %vm1094, %v4071, 0.0
      %v4091 = vadd.f32 %v4089, %v4090
      %v4092 = vsel %vm1094, %v4072, 0.0
      %v4093 = vadd.f32 %v4091, %v4092
      %v4094 = vsel %vm1094, %v4073, 0.0
      %v4095 = vadd.f32 %v4093, %v4094
      %v4096 = vsel %vm1094, %v4074, 0.0
      %v4097 = vadd.f32 %v4095, %v4096
      %v4098 = vsel %vm1094, %v4075, 0.0
      %v4099 = vadd.f32 %v4097, %v4098
      %v4100 = vsel %vm1094, %v4076, 0.0
      %v4101 = vadd.f32 %v4099, %v4100
      %v4102 = vsel %vm1094, %v4077, 0.0
      %v4103 = vadd.f32 %v4101, %v4102
      %v4104 = vsel %vm1094, %v4078, 0.0
      %v4105 = vadd.f32 %v4103, %v4104
      %v4106 = vsel %vm1094, %v4079, 0.0
      %v4107 = vadd.f32 %v4105, %v4106
      %v4108 = vsel %vm1094, %v4080, 0.0
      %v4109 = vadd.f32 %v4107, %v4108
      %v4110 = vsel %vm1094, %v4081, 0.0
      %v4111 = vadd.f32 %v4109, %v4110
      %v4112 = vsel %vm1094, %v4082, 0.0
      %v4113 = vadd.f32 %v4111, %v4112
      %v4114 = vrot.slane %v4113, 4
      %v4115 = vadd.f32 %v4113, %v4114
      %v4116 = vrot.slane %v4115, 2
      %v4117 = vadd.f32 %v4115, %v4116
      %v4118 = vrot.slane %v4117, 1
      %v4119 = vadd.f32 %v4117, %v4118
      %v4120 = vmul.f32 %v3840, %v3840
      %v4121 = vmul.f32 %v3842, %v3842
      %v4122 = vmul.f32 %v3845, %v3845
      %v4123 = vmul.f32 %v3847, %v3847
      %v4124 = vmul.f32 %v3850, %v3850
      %v4125 = vmul.f32 %v3852, %v3852
      %v4126 = vmul.f32 %v3855, %v3855
      %v4127 = vmul.f32 %v3857, %v3857
      %v4128 = vmul.f32 %v3860, %v3860
      %v4129 = vmul.f32 %v3862, %v3862
      %v4130 = vmul.f32 %v3865, %v3865
      %v4131 = vmul.f32 %v3867, %v3867
      %v4132 = vmul.f32 %v3870, %v3870
      %v4133 = vmul.f32 %v3872, %v3872
      %v4134 = vmul.f32 %v3875, %v3875
      %v4135 = vmul.f32 %v3877, %v3877
      %v4136 = vsel %vm1094, %v4120, 0.0
      %v4137 = vsel %vm1094, %v4121, 0.0
      %v4138 = vadd.f32 %v4136, %v4137
      %v4139 = vsel %vm1094, %v4122, 0.0
      %v4140 = vadd.f32 %v4138, %v4139
      %v4141 = vsel %vm1094, %v4123, 0.0
      %v4142 = vadd.f32 %v4140, %v4141
      %v4143 = vsel %vm1094, %v4124, 0.0
      %v4144 = vadd.f32 %v4142, %v4143
      %v4145 = vsel %vm1094, %v4125, 0.0
      %v4146 = vadd.f32 %v4144, %v4145
      %v4147 = vsel %vm1094, %v4126, 0.0
      %v4148 = vadd.f32 %v4146, %v4147
      %v4149 = vsel %vm1094, %v4127, 0.0
      %v4150 = vadd.f32 %v4148, %v4149
      %v4151 = vsel %vm1094, %v4128, 0.0
      %v4152 = vadd.f32 %v4150, %v4151
      %v4153 = vsel %vm1094, %v4129, 0.0
      %v4154 = vadd.f32 %v4152, %v4153
      %v4155 = vsel %vm1094, %v4130, 0.0
      %v4156 = vadd.f32 %v4154, %v4155
      %v4157 = vsel %vm1094, %v4131, 0.0
      %v4158 = vadd.f32 %v4156, %v4157
      %v4159 = vsel %vm1094, %v4132, 0.0
      %v4160 = vadd.f32 %v4158, %v4159
      %v4161 = vsel %vm1094, %v4133, 0.0
      %v4162 = vadd.f32 %v4160, %v4161
      %v4163 = vsel %vm1094, %v4134, 0.0
      %v4164 = vadd.f32 %v4162, %v4163
      %v4165 = vsel %vm1094, %v4135, 0.0
      %v4166 = vadd.f32 %v4164, %v4165
      %v4167 = vrot.slane %v4166, 4
      %v4168 = vadd.f32 %v4166, %v4167
      %v4169 = vrot.slane %v4168, 2
      %v4170 = vadd.f32 %v4168, %v4169
      %v4171 = vrot.slane %v4170, 1
      %v4172 = vadd.f32 %v4170, %v4171
      %v4173 = vadd.f32 %v4119, %v4172
      %v4174 = vsel %vm345, %v4066, %v4173
      %vm4175 = vcmask 25600
      %4176 = vst.msk [vmem:[%s255] sm:$0x3] %vm4175, %v4174
      %p4177 = scmp.lt.s32.totalorder %s17, 1
      %s4178 = scalar_select %p4177, %s17, 1
      %s4179 = smul.addr %s4178, 16
      %s4180 = smul.addr %s4179, 4
      %s4181 = scalar_lea.vmem %s4, %s4180
      %p4182 = scmp.lt.s32.totalorder %s17, 1
      %s4183 = scalar_select %p4182, %s17, 1
      %s4184 = smul.addr %s4183, 2
      %s4185 = scalar_lea.vmem %s5, %s4184
      // Predicated region
      $region37: #{upsample_block_forward.3} parent=35 // pred_check
        %p4186 = pneg %p129
      $region38: #{upsample_block_forward.3} parent=35 // pred_check_branch
        %4188 = sbr.rel (%p4186) target = $region40
      $region39: #{upsample_block_forward.3} parent=35 // pred_region
        _
      $region40: #{upsample_block_forward.3} parent=35 // pred_fallthru
        _
      // Predicated region
      $region41: #{upsample_block_forward.3} parent=35 // pred_check
        %p4189 = pneg %p155
      $region42: #{upsample_block_forward.3} parent=35 // pred_check_branch
        %4191 = sbr.rel (%p4189) target = $region44
      $region43: #{upsample_block_forward.3} parent=35 // pred_region
        _
      $region44: #{upsample_block_forward.3} parent=35 // pred_fallthru
        _
    $region36: #{upsample_block_forward.3} parent=5 // pred_fallthru
      _
    %p4192 = scmp.le.s32.totalorder 2, %s12
    // Predicated region
    $region45: #{upsample_block_forward.3} parent=5 // pred_check
      %p4193 = pneg %p4192
    $region46: #{upsample_block_forward.3} parent=5 // pred_check_branch
      %4195 = sbr.rel (%p4193) target = $region48
    $region47: #{upsample_block_forward.3} parent=5 // pred_region
      %s4196 = ssub.s32 %s12, 2
      // Predicated region
      $region49: #{upsample_block_forward.3} parent=47 // pred_check
        %p4197 = pneg %p135
      $region50: #{upsample_block_forward.3} parent=47 // pred_check_branch
        %4199 = sbr.rel (%p4197) target = $region52
      $region51: #{upsample_block_forward.3} parent=47 // pred_region
        %p4200 = scmp.lt.s32.totalorder %s18, 1
        %s4201 = scalar_select %p4200, %s18, 1
        %s4202 = smul.addr %s4201, 16
        %s4203 = smul.addr %s4202, 4
        %s4204 = scalar_lea.vmem %s4, %s4203
      $region52: #{upsample_block_forward.3} parent=47 // pred_fallthru
        _
      // Predicated region
      $region53: #{upsample_block_forward.3} parent=47 // pred_check
        %p4205 = pneg %p161
      $region54: #{upsample_block_forward.3} parent=47 // pred_check_branch
        %4207 = sbr.rel (%p4205) target = $region56
      $region55: #{upsample_block_forward.3} parent=47 // pred_region
        %p4208 = scmp.lt.s32.totalorder %s18, 1
        %s4209 = scalar_select %p4208, %s18, 1
        %s4210 = smul.addr %s4209, 2
        %s4211 = scalar_lea.vmem %s5, %s4210
      $region56: #{upsample_block_forward.3} parent=47 // pred_fallthru
        _
    $region48: #{upsample_block_forward.3} parent=5 // pred_fallthru
      _
  $region6: #{upsample_block_forward.3} parent=0 // loop_footer
    %s16 = sadd.s32 1, %s12
  $region7: #{upsample_block_forward.3} parent=0 // loop_footer_branch
    %11 = sbr.rel target = $region3
  $region8: #{upsample_block_forward.3} parent=0 // loop_exit
    _

</llo_original>
